<compile_context>
chip_gen: v6e
topology: v6e:2x2x1
jax: 0.10.0
libtpu: 0.0.40
codegen_flags: <defaults>
</compile_context>

<pallas_src>
import numpy as np

import jax
import jax.numpy as jnp
from jax.experimental import pallas as pl
from jax.experimental.pallas import tpu as pltpu


LANE = 128


# --------------------------------------------------------------------------
# Fused kernel: one batch TILE per grid step, everything resident in VMEM.
# --------------------------------------------------------------------------
def _network_kernel(x_ref, m1_ref, m2_ref, wfc_ref, bias_ref, o_ref):
    BT = o_ref.shape[0]                    # batch-tile size (multiple of 8)
    dot = lambda a, b: jnp.dot(a, b, preferred_element_type=jnp.float32)

    # ---- conv1 (5x5, 1->6) + relu + maxpool 2x2, phase decomposed ---------
    # conv1 output row oh = 4*hh + 2*a + d1, col ow = 2*w1 + e1.  Both column
    # phases e1 come out of one dot (weights stacked along N at lanes 0/128);
    # row phases d1 and the two e1 halves are folded with elementwise max.
    # Bias + relu commute with the max (constant per channel, monotone).
    t1 = []                                # t1[a][hh*BT + b, 6*w1 + ci]
    for a in range(2):
        acc = None
        for d1 in range(2):
            rr = 2 * a + d1
            c = None
            for i in range(5):             # conv kernel row
                r = rr + i                 # input row = 4*hh + r
                xs = x_ref[r % 4, r // 4:r // 4 + 6, :, :].reshape(6 * BT, 28)
                t = dot(xs, m1_ref[i])                          # [6*BT, 256]
                c = t if c is None else c + t
            p = jnp.maximum(c[:, :LANE], c[:, LANE:])
            acc = p if acc is None else jnp.maximum(acc, p)
        t1.append(jnp.maximum(acc + bias_ref[0:1, :], 0.0))     # [6*BT, 128]

    # ---- conv2 (5x5, 6->12) + relu + maxpool 2x2, phase decomposed --------
    acc2 = None
    for d2 in range(2):
        c = None
        for i in range(5):
            r = d2 + i                     # pooled-conv1 row = 2*h2 + r
            ts = t1[r % 2][(r // 2) * BT:(r // 2 + 4) * BT, :]  # [4*BT, 128]
            t = dot(ts, m2_ref[i])                              # [4*BT, 256]
            c = t if c is None else c + t
        p = jnp.maximum(c[:, :LANE], c[:, LANE:])
        acc2 = p if acc2 is None else jnp.maximum(acc2, p)
    t2 = jnp.maximum(acc2 + bias_ref[1:2, :], 0.0)   # [4*BT,128] = [h2*BT+b, 12*w2+co]

    # ---- flatten + fc1 + relu (flatten folded into permuted fc1 weights) ---
    h = bias_ref[2:3, :]
    for ph in range(4):
        h = h + dot(t2[ph * BT:(ph + 1) * BT, :], wfc_ref[ph])
    h = jnp.maximum(h, 0.0)                                     # [BT, 128]

    # ---- fc2 -> relu -> out -> softmax (padded logit lanes at -1e30) ------
    h = jnp.maximum(dot(h, wfc_ref[4]) + bias_ref[3:4, :], 0.0)  # [BT, 128]
    logits = dot(h, wfc_ref[5]) + bias_ref[4:5, :]               # [BT, 128]
    m = jnp.max(logits, axis=1, keepdims=True)
    e = jnp.exp(logits - m)
    s = jnp.sum(e, axis=1, keepdims=True)
    o_ref[...] = e * pl.reciprocal(s, approx=True)


# --------------------------------------------------------------------------
# One-time host-side weight preparation (banding / permutation / padding).
# --------------------------------------------------------------------------
def prepare_params(params):
    w1 = np.asarray(params["conv1_w"], np.float32)    # [6, 1, 5, 5]
    b1 = np.asarray(params["conv1_b"], np.float32)    # [6]
    w2 = np.asarray(params["conv2_w"], np.float32)    # [12, 6, 5, 5]
    b2 = np.asarray(params["conv2_b"], np.float32)    # [12]
    fc1_w = np.asarray(params["fc1_w"], np.float32)   # [120, 192]
    fc1_b = np.asarray(params["fc1_b"], np.float32)
    fc2_w = np.asarray(params["fc2_w"], np.float32)   # [60, 120]
    fc2_b = np.asarray(params["fc2_b"], np.float32)
    out_w = np.asarray(params["out_w"], np.float32)   # [10, 60]
    out_b = np.asarray(params["out_b"], np.float32)

    # Banded conv1 weights, both pool column-phases e stacked along N:
    #   m1[i][w, e*128 + 6*w1 + ci] = w1[ci, 0, i, w - (2*w1 + e)]
    m1 = np.zeros((5, 28, 2 * LANE), np.float32)
    for e in range(2):
        for i in range(5):
            for w1o in range(12):
                for j in range(5):
                    col = e * LANE + 6 * w1o
                    m1[i, 2 * w1o + e + j, col:col + 6] = w1[:, 0, i, j]

    # Banded conv2 weights, K padded 72->128, column-phases e stacked along N:
    #   m2[i][6*w + ci, e*128 + 12*w2 + co] = w2[co, ci, i, w - (2*w2 + e)]
    m2 = np.zeros((5, LANE, 2 * LANE), np.float32)
    for e in range(2):
        for i in range(5):
            for w2o in range(4):
                for j in range(5):
                    w = 2 * w2o + e + j
                    col = e * LANE + 12 * w2o
                    m2[i, 6 * w:6 * w + 6, col:col + 12] = w2[:, :, i, j].T

    # fc1 weights permuted to the kernel's pooled layout [h2, 12*w2 + co, n]
    # (PyTorch flatten order f = co*16 + h2*4 + w2), K padded 48->128,
    # N padded 120->128.  fc2 / out weights K- and N-padded to 128 likewise.
    wfc1 = np.zeros((4, LANE, LANE), np.float32)
    wfc1[:, :48, :120] = (fc1_w.reshape(120, 12, 4, 4)
                          .transpose(2, 3, 1, 0).reshape(4, 48, 120))
    wfc2 = np.zeros((LANE, LANE), np.float32)
    wfc2[:120, :60] = fc2_w.T
    wout = np.zeros((LANE, LANE), np.float32)
    wout[:60, :10] = out_w.T
    wfc = np.concatenate([wfc1, wfc2[None], wout[None]], axis=0)  # [6,128,128]

    # All biases stacked and lane-padded to 128.  The logit-bias row pads with
    # -1e30 so the padded softmax lanes contribute exp(-huge) = 0.
    biases = np.zeros((5, LANE), np.float32)
    biases[0, :72] = np.tile(b1, 12)
    biases[1, :48] = np.tile(b2, 4)
    biases[2, :120] = fc1_b
    biases[3, :60] = fc2_b
    biases[4, :] = -1e30
    biases[4, :10] = out_b

    host = dict(m1=m1, m2=m2, wfc=wfc, biases=biases)
    return {k: jnp.asarray(v) for k, v in host.items()}


# --------------------------------------------------------------------------
# Forward pass: single pallas_call, grid over batch TILES.
# --------------------------------------------------------------------------
def _batch_tile(B):
    # B_TILE=128 makes conv1/conv2/fc M = 768 / 512 / 128 (multiples of 128,
    # and 256-friendly for v6e/v7x) and keeps grid >= 2 for B >= 256 so
    # dimension_semantics=("parallel",) can shard steps across v7x TCs.
    if B >= 128:
        return 128
    return max(8, ((B + 7) // 8) * 8)


@jax.jit
def network_forward(prep, x):
    B = x.shape[0]
    bt = _batch_tile(B)
    Bp = ((B + bt - 1) // bt) * bt

    # Rows split by (row mod 4) and batch moved inboard so every in-kernel
    # access is a tile-aligned slice:  x4[row%4, row//4, b, col].
    xr = x.reshape(B, 28, 28)
    if Bp != B:
        xr = jnp.pad(xr, ((0, Bp - B), (0, 0), (0, 0)))
    x4 = xr.reshape(Bp, 7, 4, 28).transpose(2, 1, 0, 3)        # [4, 7, Bp, 28]

    args = (x4, prep["m1"], prep["m2"], prep["wfc"], prep["biases"])

    def const_spec(a):
        nd = a.ndim
        return pl.BlockSpec(a.shape, lambda t, nd=nd: (0,) * nd)

    in_specs = [pl.BlockSpec((4, 7, bt, 28), lambda t: (0, 0, t, 0))]
    in_specs += [const_spec(a) for a in args[1:]]

    out = pl.pallas_call(
        _network_kernel,
        out_shape=jax.ShapeDtypeStruct((Bp, LANE), jnp.float32),
        grid=(Bp // bt,),
        in_specs=in_specs,
        out_specs=pl.BlockSpec((bt, LANE), lambda t: (t, 0)),
        compiler_params=pltpu.CompilerParams(
            dimension_semantics=("parallel",)),
    )(*args)
    # Lane-dense (bt,128) stores in-kernel; slice to the 10 real classes here.
    return out[:B, :10]


# --------------------------------------------------------------------------
# Pure-JAX reference (mirrors the PyTorch module).
# --------------------------------------------------------------------------
def reference_forward(params, x):
    dn = ("NCHW", "OIHW", "NCHW")
    t = jax.lax.conv_general_dilated(x, params["conv1_w"], (1, 1), "VALID",
                                     dimension_numbers=dn)
    t = jax.nn.relu(t + params["conv1_b"].reshape(1, -1, 1, 1))
    t = jax.lax.reduce_window(t, -jnp.inf, jax.lax.max,
                              (1, 1, 2, 2), (1, 1, 2, 2), "VALID")
    t = jax.lax.conv_general_dilated(t, params["conv2_w"], (1, 1), "VALID",
                                     dimension_numbers=dn)
    t = jax.nn.relu(t + params["conv2_b"].reshape(1, -1, 1, 1))
    t = jax.lax.reduce_window(t, -jnp.inf, jax.lax.max,
                              (1, 1, 2, 2), (1, 1, 2, 2), "VALID")
    t = t.reshape(t.shape[0], -1)
    t = jax.nn.relu(t @ params["fc1_w"].T + params["fc1_b"])
    t = jax.nn.relu(t @ params["fc2_w"].T + params["fc2_b"])
    t = t @ params["out_w"].T + params["out_b"]
    return jax.nn.softmax(t, axis=1)


# --------------------------------------------------------------------------
# Parameter init (PyTorch-style uniform) and demo.
# --------------------------------------------------------------------------
def init_params(key):
    def uniform(k, shape, fan_in):
        bound = 1.0 / jnp.sqrt(jnp.float32(fan_in))
        return jax.random.uniform(k, shape, jnp.float32, -bound, bound)

    ks = jax.random.split(key, 10)
    return {
        "conv1_w": uniform(ks[0], (6, 1, 5, 5), 1 * 5 * 5),
        "conv1_b": uniform(ks[1], (6,), 1 * 5 * 5),
        "conv2_w": uniform(ks[2], (12, 6, 5, 5), 6 * 5 * 5),
        "conv2_b": uniform(ks[3], (12,), 6 * 5 * 5),
        "fc1_w": uniform(ks[4], (120, 192), 192),
        "fc1_b": uniform(ks[5], (120,), 192),
        "fc2_w": uniform(ks[6], (60, 120), 120),
        "fc2_b": uniform(ks[7], (60,), 120),
        "out_w": uniform(ks[8], (10, 60), 60),
        "out_b": uniform(ks[9], (10,), 60),
    }


if __name__ == "__main__":
    key = jax.random.PRNGKey(0)
    k_params, k_x = jax.random.split(key)
    params = init_params(k_params)
    prep = prepare_params(params)

    # Spatial size must be 28 so the conv/pool stack yields 12*4*4=192 features.
    x = jax.random.normal(k_x, (2, 1, 28, 28), dtype=jnp.float32)
    out = jax.block_until_ready(network_forward(prep, x))
    ref = jax.block_until_ready(reference_forward(params, x))
    assert out.shape == (2, 10), out.shape
    # Tolerances account for MXU operand rounding and the approx reciprocal
    # in the softmax; any layout/permutation bug would produce O(0.1) errors.
    assert jnp.allclose(jnp.sum(out, axis=1), 1.0, atol=5e-3)
    assert jnp.allclose(out, ref, atol=1e-2, rtol=1e-2), (out, ref)

    # Also exercise the batch-tiled multi-step grid + padding path.
    xb = jax.random.normal(jax.random.PRNGKey(1), (160, 1, 28, 28), jnp.float32)
    outb = jax.block_until_ready(network_forward(prep, xb))
    refb = jax.block_until_ready(reference_forward(params, xb))
    assert outb.shape == (160, 10), outb.shape
    assert jnp.allclose(outb, refb, atol=1e-2, rtol=1e-2)

    print("KERNEL_OK")
</pallas_src>

<mosaic_0001>
module attributes {stable_mosaic.version = 11 : i64} {
  func.func @_network_kernel(%arg0: i32, %arg1: memref<4x7x8x28xf32, #tpu.memory_space<vmem>>, %arg2: memref<5x28x256xf32, #tpu.memory_space<vmem>>, %arg3: memref<5x128x256xf32, #tpu.memory_space<vmem>>, %arg4: memref<6x128x128xf32, #tpu.memory_space<vmem>>, %arg5: memref<5x128xf32, #tpu.memory_space<vmem>>, %arg6: memref<8x128xf32, #tpu.memory_space<vmem>>) attributes {dimension_semantics = [#tpu.dimension_semantics<parallel>], iteration_bounds = array<i64: 1>, scalar_prefetch = 0 : i64, scratch_operands = 0 : i64, tpu.core_type = #tpu.core_type<tc>, window_params = [{transform_indices = @transform_0, window_bounds = array<i64: 4, 7, 8, 28>}, {pipeline_mode = #tpu.pipeline_mode<synchronous>, transform_indices = @transform_1, window_bounds = array<i64: 5, 28, 256>}, {pipeline_mode = #tpu.pipeline_mode<synchronous>, transform_indices = @transform_2, window_bounds = array<i64: 5, 128, 256>}, {pipeline_mode = #tpu.pipeline_mode<synchronous>, transform_indices = @transform_3, window_bounds = array<i64: 6, 128, 128>}, {pipeline_mode = #tpu.pipeline_mode<synchronous>, transform_indices = @transform_4, window_bounds = array<i64: 5, 128>}, {transform_indices = @transform_5, window_bounds = array<i64: 8, 128>}]} {
    %c0 = arith.constant 0 : index
    %c0_0 = arith.constant 0 : index
    %c0_1 = arith.constant 0 : index
    %c0_2 = arith.constant 0 : index
    %0 = vector.load %arg1[%c0, %c0_0, %c0_1, %c0_2] : memref<4x7x8x28xf32, #tpu.memory_space<vmem>>, vector<1x6x8x28xf32>
    %1 = vector.shape_cast %0 : vector<1x6x8x28xf32> to vector<6x8x28xf32>
    %2 = vector.shape_cast %1 : vector<6x8x28xf32> to vector<48x28xf32>
    %c0_3 = arith.constant 0 : index
    %c0_4 = arith.constant 0 : index
    %c0_5 = arith.constant 0 : index
    %3 = vector.load %arg2[%c0_3, %c0_4, %c0_5] : memref<5x28x256xf32, #tpu.memory_space<vmem>>, vector<1x28x256xf32>
    %4 = vector.shape_cast %3 : vector<1x28x256xf32> to vector<28x256xf32>
    %cst = arith.constant dense<0.000000e+00> : vector<48x256xf32>
    %5 = tpu.matmul %2, %4, %cst {dimension_numbers = #tpu.dot_dimension_numbers<[1], [0], [0], [1], [0, 0, 1, 1], [], []>} : vector<48x28xf32>, vector<28x256xf32>, vector<48x256xf32> -> vector<48x256xf32>
    %c1 = arith.constant 1 : index
    %c0_6 = arith.constant 0 : index
    %c0_7 = arith.constant 0 : index
    %c0_8 = arith.constant 0 : index
    %6 = vector.load %arg1[%c1, %c0_6, %c0_7, %c0_8] : memref<4x7x8x28xf32, #tpu.memory_space<vmem>>, vector<1x6x8x28xf32>
    %7 = vector.shape_cast %6 : vector<1x6x8x28xf32> to vector<6x8x28xf32>
    %8 = vector.shape_cast %7 : vector<6x8x28xf32> to vector<48x28xf32>
    %c1_9 = arith.constant 1 : index
    %c0_10 = arith.constant 0 : index
    %c0_11 = arith.constant 0 : index
    %9 = vector.load %arg2[%c1_9, %c0_10, %c0_11] : memref<5x28x256xf32, #tpu.memory_space<vmem>>, vector<1x28x256xf32>
    %10 = vector.shape_cast %9 : vector<1x28x256xf32> to vector<28x256xf32>
    %cst_12 = arith.constant dense<0.000000e+00> : vector<48x256xf32>
    %11 = tpu.matmul %8, %10, %cst_12 {dimension_numbers = #tpu.dot_dimension_numbers<[1], [0], [0], [1], [0, 0, 1, 1], [], []>} : vector<48x28xf32>, vector<28x256xf32>, vector<48x256xf32> -> vector<48x256xf32>
    %12 = arith.addf %5, %11 : vector<48x256xf32>
    %c2 = arith.constant 2 : index
    %c0_13 = arith.constant 0 : index
    %c0_14 = arith.constant 0 : index
    %c0_15 = arith.constant 0 : index
    %13 = vector.load %arg1[%c2, %c0_13, %c0_14, %c0_15] : memref<4x7x8x28xf32, #tpu.memory_space<vmem>>, vector<1x6x8x28xf32>
    %14 = vector.shape_cast %13 : vector<1x6x8x28xf32> to vector<6x8x28xf32>
    %15 = vector.shape_cast %14 : vector<6x8x28xf32> to vector<48x28xf32>
    %c2_16 = arith.constant 2 : index
    %c0_17 = arith.constant 0 : index
    %c0_18 = arith.constant 0 : index
    %16 = vector.load %arg2[%c2_16, %c0_17, %c0_18] : memref<5x28x256xf32, #tpu.memory_space<vmem>>, vector<1x28x256xf32>
    %17 = vector.shape_cast %16 : vector<1x28x256xf32> to vector<28x256xf32>
    %cst_19 = arith.constant dense<0.000000e+00> : vector<48x256xf32>
    %18 = tpu.matmul %15, %17, %cst_19 {dimension_numbers = #tpu.dot_dimension_numbers<[1], [0], [0], [1], [0, 0, 1, 1], [], []>} : vector<48x28xf32>, vector<28x256xf32>, vector<48x256xf32> -> vector<48x256xf32>
    %19 = arith.addf %12, %18 : vector<48x256xf32>
    %c3 = arith.constant 3 : index
    %c0_20 = arith.constant 0 : index
    %c0_21 = arith.constant 0 : index
    %c0_22 = arith.constant 0 : index
    %20 = vector.load %arg1[%c3, %c0_20, %c0_21, %c0_22] : memref<4x7x8x28xf32, #tpu.memory_space<vmem>>, vector<1x6x8x28xf32>
    %21 = vector.shape_cast %20 : vector<1x6x8x28xf32> to vector<6x8x28xf32>
    %22 = vector.shape_cast %21 : vector<6x8x28xf32> to vector<48x28xf32>
    %c3_23 = arith.constant 3 : index
    %c0_24 = arith.constant 0 : index
    %c0_25 = arith.constant 0 : index
    %23 = vector.load %arg2[%c3_23, %c0_24, %c0_25] : memref<5x28x256xf32, #tpu.memory_space<vmem>>, vector<1x28x256xf32>
    %24 = vector.shape_cast %23 : vector<1x28x256xf32> to vector<28x256xf32>
    %cst_26 = arith.constant dense<0.000000e+00> : vector<48x256xf32>
    %25 = tpu.matmul %22, %24, %cst_26 {dimension_numbers = #tpu.dot_dimension_numbers<[1], [0], [0], [1], [0, 0, 1, 1], [], []>} : vector<48x28xf32>, vector<28x256xf32>, vector<48x256xf32> -> vector<48x256xf32>
    %26 = arith.addf %19, %25 : vector<48x256xf32>
    %c0_27 = arith.constant 0 : index
    %c1_28 = arith.constant 1 : index
    %c0_29 = arith.constant 0 : index
    %c0_30 = arith.constant 0 : index
    %27 = vector.load %arg1[%c0_27, %c1_28, %c0_29, %c0_30] : memref<4x7x8x28xf32, #tpu.memory_space<vmem>>, vector<1x6x8x28xf32>
    %28 = vector.shape_cast %27 : vector<1x6x8x28xf32> to vector<6x8x28xf32>
    %29 = vector.shape_cast %28 : vector<6x8x28xf32> to vector<48x28xf32>
    %c4 = arith.constant 4 : index
    %c0_31 = arith.constant 0 : index
    %c0_32 = arith.constant 0 : index
    %30 = vector.load %arg2[%c4, %c0_31, %c0_32] : memref<5x28x256xf32, #tpu.memory_space<vmem>>, vector<1x28x256xf32>
    %31 = vector.shape_cast %30 : vector<1x28x256xf32> to vector<28x256xf32>
    %cst_33 = arith.constant dense<0.000000e+00> : vector<48x256xf32>
    %32 = tpu.matmul %29, %31, %cst_33 {dimension_numbers = #tpu.dot_dimension_numbers<[1], [0], [0], [1], [0, 0, 1, 1], [], []>} : vector<48x28xf32>, vector<28x256xf32>, vector<48x256xf32> -> vector<48x256xf32>
    %33 = arith.addf %26, %32 : vector<48x256xf32>
    %34 = vector.extract_strided_slice %33 {offsets = [0, 0], sizes = [48, 128], strides = [1, 1]} : vector<48x256xf32> to vector<48x128xf32>
    %35 = vector.extract_strided_slice %33 {offsets = [0, 128], sizes = [48, 128], strides = [1, 1]} : vector<48x256xf32> to vector<48x128xf32>
    %36 = arith.maximumf %34, %35 : vector<48x128xf32>
    %c1_34 = arith.constant 1 : index
    %c0_35 = arith.constant 0 : index
    %c0_36 = arith.constant 0 : index
    %c0_37 = arith.constant 0 : index
    %37 = vector.load %arg1[%c1_34, %c0_35, %c0_36, %c0_37] : memref<4x7x8x28xf32, #tpu.memory_space<vmem>>, vector<1x6x8x28xf32>
    %38 = vector.shape_cast %37 : vector<1x6x8x28xf32> to vector<6x8x28xf32>
    %39 = vector.shape_cast %38 : vector<6x8x28xf32> to vector<48x28xf32>
    %c0_38 = arith.constant 0 : index
    %c0_39 = arith.constant 0 : index
    %c0_40 = arith.constant 0 : index
    %40 = vector.load %arg2[%c0_38, %c0_39, %c0_40] : memref<5x28x256xf32, #tpu.memory_space<vmem>>, vector<1x28x256xf32>
    %41 = vector.shape_cast %40 : vector<1x28x256xf32> to vector<28x256xf32>
    %cst_41 = arith.constant dense<0.000000e+00> : vector<48x256xf32>
    %42 = tpu.matmul %39, %41, %cst_41 {dimension_numbers = #tpu.dot_dimension_numbers<[1], [0], [0], [1], [0, 0, 1, 1], [], []>} : vector<48x28xf32>, vector<28x256xf32>, vector<48x256xf32> -> vector<48x256xf32>
    %c2_42 = arith.constant 2 : index
    %c0_43 = arith.constant 0 : index
    %c0_44 = arith.constant 0 : index
    %c0_45 = arith.constant 0 : index
    %43 = vector.load %arg1[%c2_42, %c0_43, %c0_44, %c0_45] : memref<4x7x8x28xf32, #tpu.memory_space<vmem>>, vector<1x6x8x28xf32>
    %44 = vector.shape_cast %43 : vector<1x6x8x28xf32> to vector<6x8x28xf32>
    %45 = vector.shape_cast %44 : vector<6x8x28xf32> to vector<48x28xf32>
    %c1_46 = arith.constant 1 : index
    %c0_47 = arith.constant 0 : index
    %c0_48 = arith.constant 0 : index
    %46 = vector.load %arg2[%c1_46, %c0_47, %c0_48] : memref<5x28x256xf32, #tpu.memory_space<vmem>>, vector<1x28x256xf32>
    %47 = vector.shape_cast %46 : vector<1x28x256xf32> to vector<28x256xf32>
    %cst_49 = arith.constant dense<0.000000e+00> : vector<48x256xf32>
    %48 = tpu.matmul %45, %47, %cst_49 {dimension_numbers = #tpu.dot_dimension_numbers<[1], [0], [0], [1], [0, 0, 1, 1], [], []>} : vector<48x28xf32>, vector<28x256xf32>, vector<48x256xf32> -> vector<48x256xf32>
    %49 = arith.addf %42, %48 : vector<48x256xf32>
    %c3_50 = arith.constant 3 : index
    %c0_51 = arith.constant 0 : index
    %c0_52 = arith.constant 0 : index
    %c0_53 = arith.constant 0 : index
    %50 = vector.load %arg1[%c3_50, %c0_51, %c0_52, %c0_53] : memref<4x7x8x28xf32, #tpu.memory_space<vmem>>, vector<1x6x8x28xf32>
    %51 = vector.shape_cast %50 : vector<1x6x8x28xf32> to vector<6x8x28xf32>
    %52 = vector.shape_cast %51 : vector<6x8x28xf32> to vector<48x28xf32>
    %c2_54 = arith.constant 2 : index
    %c0_55 = arith.constant 0 : index
    %c0_56 = arith.constant 0 : index
    %53 = vector.load %arg2[%c2_54, %c0_55, %c0_56] : memref<5x28x256xf32, #tpu.memory_space<vmem>>, vector<1x28x256xf32>
    %54 = vector.shape_cast %53 : vector<1x28x256xf32> to vector<28x256xf32>
    %cst_57 = arith.constant dense<0.000000e+00> : vector<48x256xf32>
    %55 = tpu.matmul %52, %54, %cst_57 {dimension_numbers = #tpu.dot_dimension_numbers<[1], [0], [0], [1], [0, 0, 1, 1], [], []>} : vector<48x28xf32>, vector<28x256xf32>, vector<48x256xf32> -> vector<48x256xf32>
    %56 = arith.addf %49, %55 : vector<48x256xf32>
    %c0_58 = arith.constant 0 : index
    %c1_59 = arith.constant 1 : index
    %c0_60 = arith.constant 0 : index
    %c0_61 = arith.constant 0 : index
    %57 = vector.load %arg1[%c0_58, %c1_59, %c0_60, %c0_61] : memref<4x7x8x28xf32, #tpu.memory_space<vmem>>, vector<1x6x8x28xf32>
    %58 = vector.shape_cast %57 : vector<1x6x8x28xf32> to vector<6x8x28xf32>
    %59 = vector.shape_cast %58 : vector<6x8x28xf32> to vector<48x28xf32>
    %c3_62 = arith.constant 3 : index
    %c0_63 = arith.constant 0 : index
    %c0_64 = arith.constant 0 : index
    %60 = vector.load %arg2[%c3_62, %c0_63, %c0_64] : memref<5x28x256xf32, #tpu.memory_space<vmem>>, vector<1x28x256xf32>
    %61 = vector.shape_cast %60 : vector<1x28x256xf32> to vector<28x256xf32>
    %cst_65 = arith.constant dense<0.000000e+00> : vector<48x256xf32>
    %62 = tpu.matmul %59, %61, %cst_65 {dimension_numbers = #tpu.dot_dimension_numbers<[1], [0], [0], [1], [0, 0, 1, 1], [], []>} : vector<48x28xf32>, vector<28x256xf32>, vector<48x256xf32> -> vector<48x256xf32>
    %63 = arith.addf %56, %62 : vector<48x256xf32>
    %c1_66 = arith.constant 1 : index
    %c1_67 = arith.constant 1 : index
    %c0_68 = arith.constant 0 : index
    %c0_69 = arith.constant 0 : index
    %64 = vector.load %arg1[%c1_66, %c1_67, %c0_68, %c0_69] : memref<4x7x8x28xf32, #tpu.memory_space<vmem>>, vector<1x6x8x28xf32>
    %65 = vector.shape_cast %64 : vector<1x6x8x28xf32> to vector<6x8x28xf32>
    %66 = vector.shape_cast %65 : vector<6x8x28xf32> to vector<48x28xf32>
    %c4_70 = arith.constant 4 : index
    %c0_71 = arith.constant 0 : index
    %c0_72 = arith.constant 0 : index
    %67 = vector.load %arg2[%c4_70, %c0_71, %c0_72] : memref<5x28x256xf32, #tpu.memory_space<vmem>>, vector<1x28x256xf32>
    %68 = vector.shape_cast %67 : vector<1x28x256xf32> to vector<28x256xf32>
    %cst_73 = arith.constant dense<0.000000e+00> : vector<48x256xf32>
    %69 = tpu.matmul %66, %68, %cst_73 {dimension_numbers = #tpu.dot_dimension_numbers<[1], [0], [0], [1], [0, 0, 1, 1], [], []>} : vector<48x28xf32>, vector<28x256xf32>, vector<48x256xf32> -> vector<48x256xf32>
    %70 = arith.addf %63, %69 : vector<48x256xf32>
    %71 = vector.extract_strided_slice %70 {offsets = [0, 0], sizes = [48, 128], strides = [1, 1]} : vector<48x256xf32> to vector<48x128xf32>
    %72 = vector.extract_strided_slice %70 {offsets = [0, 128], sizes = [48, 128], strides = [1, 1]} : vector<48x256xf32> to vector<48x128xf32>
    %73 = arith.maximumf %71, %72 : vector<48x128xf32>
    %74 = arith.maximumf %36, %73 : vector<48x128xf32>
    %c0_74 = arith.constant 0 : index
    %c0_75 = arith.constant 0 : index
    %75 = vector.load %arg5[%c0_74, %c0_75] : memref<5x128xf32, #tpu.memory_space<vmem>>, vector<1x128xf32>
    %76 = vector.broadcast %75 : vector<1x128xf32> to vector<48x128xf32>
    %77 = arith.addf %74, %76 : vector<48x128xf32>
    %cst_76 = arith.constant 0.000000e+00 : f32
    %78 = vector.broadcast %cst_76 : f32 to vector<48x128xf32>
    %79 = arith.maximumf %77, %78 : vector<48x128xf32>
    %c2_77 = arith.constant 2 : index
    %c0_78 = arith.constant 0 : index
    %c0_79 = arith.constant 0 : index
    %c0_80 = arith.constant 0 : index
    %80 = vector.load %arg1[%c2_77, %c0_78, %c0_79, %c0_80] : memref<4x7x8x28xf32, #tpu.memory_space<vmem>>, vector<1x6x8x28xf32>
    %81 = vector.shape_cast %80 : vector<1x6x8x28xf32> to vector<6x8x28xf32>
    %82 = vector.shape_cast %81 : vector<6x8x28xf32> to vector<48x28xf32>
    %c0_81 = arith.constant 0 : index
    %c0_82 = arith.constant 0 : index
    %c0_83 = arith.constant 0 : index
    %83 = vector.load %arg2[%c0_81, %c0_82, %c0_83] : memref<5x28x256xf32, #tpu.memory_space<vmem>>, vector<1x28x256xf32>
    %84 = vector.shape_cast %83 : vector<1x28x256xf32> to vector<28x256xf32>
    %cst_84 = arith.constant dense<0.000000e+00> : vector<48x256xf32>
    %85 = tpu.matmul %82, %84, %cst_84 {dimension_numbers = #tpu.dot_dimension_numbers<[1], [0], [0], [1], [0, 0, 1, 1], [], []>} : vector<48x28xf32>, vector<28x256xf32>, vector<48x256xf32> -> vector<48x256xf32>
    %c3_85 = arith.constant 3 : index
    %c0_86 = arith.constant 0 : index
    %c0_87 = arith.constant 0 : index
    %c0_88 = arith.constant 0 : index
    %86 = vector.load %arg1[%c3_85, %c0_86, %c0_87, %c0_88] : memref<4x7x8x28xf32, #tpu.memory_space<vmem>>, vector<1x6x8x28xf32>
    %87 = vector.shape_cast %86 : vector<1x6x8x28xf32> to vector<6x8x28xf32>
    %88 = vector.shape_cast %87 : vector<6x8x28xf32> to vector<48x28xf32>
    %c1_89 = arith.constant 1 : index
    %c0_90 = arith.constant 0 : index
    %c0_91 = arith.constant 0 : index
    %89 = vector.load %arg2[%c1_89, %c0_90, %c0_91] : memref<5x28x256xf32, #tpu.memory_space<vmem>>, vector<1x28x256xf32>
    %90 = vector.shape_cast %89 : vector<1x28x256xf32> to vector<28x256xf32>
    %cst_92 = arith.constant dense<0.000000e+00> : vector<48x256xf32>
    %91 = tpu.matmul %88, %90, %cst_92 {dimension_numbers = #tpu.dot_dimension_numbers<[1], [0], [0], [1], [0, 0, 1, 1], [], []>} : vector<48x28xf32>, vector<28x256xf32>, vector<48x256xf32> -> vector<48x256xf32>
    %92 = arith.addf %85, %91 : vector<48x256xf32>
    %c0_93 = arith.constant 0 : index
    %c1_94 = arith.constant 1 : index
    %c0_95 = arith.constant 0 : index
    %c0_96 = arith.constant 0 : index
    %93 = vector.load %arg1[%c0_93, %c1_94, %c0_95, %c0_96] : memref<4x7x8x28xf32, #tpu.memory_space<vmem>>, vector<1x6x8x28xf32>
    %94 = vector.shape_cast %93 : vector<1x6x8x28xf32> to vector<6x8x28xf32>
    %95 = vector.shape_cast %94 : vector<6x8x28xf32> to vector<48x28xf32>
    %c2_97 = arith.constant 2 : index
    %c0_98 = arith.constant 0 : index
    %c0_99 = arith.constant 0 : index
    %96 = vector.load %arg2[%c2_97, %c0_98, %c0_99] : memref<5x28x256xf32, #tpu.memory_space<vmem>>, vector<1x28x256xf32>
    %97 = vector.shape_cast %96 : vector<1x28x256xf32> to vector<28x256xf32>
    %cst_100 = arith.constant dense<0.000000e+00> : vector<48x256xf32>
    %98 = tpu.matmul %95, %97, %cst_100 {dimension_numbers = #tpu.dot_dimension_numbers<[1], [0], [0], [1], [0, 0, 1, 1], [], []>} : vector<48x28xf32>, vector<28x256xf32>, vector<48x256xf32> -> vector<48x256xf32>
    %99 = arith.addf %92, %98 : vector<48x256xf32>
    %c1_101 = arith.constant 1 : index
    %c1_102 = arith.constant 1 : index
    %c0_103 = arith.constant 0 : index
    %c0_104 = arith.constant 0 : index
    %100 = vector.load %arg1[%c1_101, %c1_102, %c0_103, %c0_104] : memref<4x7x8x28xf32, #tpu.memory_space<vmem>>, vector<1x6x8x28xf32>
    %101 = vector.shape_cast %100 : vector<1x6x8x28xf32> to vector<6x8x28xf32>
    %102 = vector.shape_cast %101 : vector<6x8x28xf32> to vector<48x28xf32>
    %c3_105 = arith.constant 3 : index
    %c0_106 = arith.constant 0 : index
    %c0_107 = arith.constant 0 : index
    %103 = vector.load %arg2[%c3_105, %c0_106, %c0_107] : memref<5x28x256xf32, #tpu.memory_space<vmem>>, vector<1x28x256xf32>
    %104 = vector.shape_cast %103 : vector<1x28x256xf32> to vector<28x256xf32>
    %cst_108 = arith.constant dense<0.000000e+00> : vector<48x256xf32>
    %105 = tpu.matmul %102, %104, %cst_108 {dimension_numbers = #tpu.dot_dimension_numbers<[1], [0], [0], [1], [0, 0, 1, 1], [], []>} : vector<48x28xf32>, vector<28x256xf32>, vector<48x256xf32> -> vector<48x256xf32>
    %106 = arith.addf %99, %105 : vector<48x256xf32>
    %c2_109 = arith.constant 2 : index
    %c1_110 = arith.constant 1 : index
    %c0_111 = arith.constant 0 : index
    %c0_112 = arith.constant 0 : index
    %107 = vector.load %arg1[%c2_109, %c1_110, %c0_111, %c0_112] : memref<4x7x8x28xf32, #tpu.memory_space<vmem>>, vector<1x6x8x28xf32>
    %108 = vector.shape_cast %107 : vector<1x6x8x28xf32> to vector<6x8x28xf32>
    %109 = vector.shape_cast %108 : vector<6x8x28xf32> to vector<48x28xf32>
    %c4_113 = arith.constant 4 : index
    %c0_114 = arith.constant 0 : index
    %c0_115 = arith.constant 0 : index
    %110 = vector.load %arg2[%c4_113, %c0_114, %c0_115] : memref<5x28x256xf32, #tpu.memory_space<vmem>>, vector<1x28x256xf32>
    %111 = vector.shape_cast %110 : vector<1x28x256xf32> to vector<28x256xf32>
    %cst_116 = arith.constant dense<0.000000e+00> : vector<48x256xf32>
    %112 = tpu.matmul %109, %111, %cst_116 {dimension_numbers = #tpu.dot_dimension_numbers<[1], [0], [0], [1], [0, 0, 1, 1], [], []>} : vector<48x28xf32>, vector<28x256xf32>, vector<48x256xf32> -> vector<48x256xf32>
    %113 = arith.addf %106, %112 : vector<48x256xf32>
    %114 = vector.extract_strided_slice %113 {offsets = [0, 0], sizes = [48, 128], strides = [1, 1]} : vector<48x256xf32> to vector<48x128xf32>
    %115 = vector.extract_strided_slice %113 {offsets = [0, 128], sizes = [48, 128], strides = [1, 1]} : vector<48x256xf32> to vector<48x128xf32>
    %116 = arith.maximumf %114, %115 : vector<48x128xf32>
    %c3_117 = arith.constant 3 : index
    %c0_118 = arith.constant 0 : index
    %c0_119 = arith.constant 0 : index
    %c0_120 = arith.constant 0 : index
    %117 = vector.load %arg1[%c3_117, %c0_118, %c0_119, %c0_120] : memref<4x7x8x28xf32, #tpu.memory_space<vmem>>, vector<1x6x8x28xf32>
    %118 = vector.shape_cast %117 : vector<1x6x8x28xf32> to vector<6x8x28xf32>
    %119 = vector.shape_cast %118 : vector<6x8x28xf32> to vector<48x28xf32>
    %c0_121 = arith.constant 0 : index
    %c0_122 = arith.constant 0 : index
    %c0_123 = arith.constant 0 : index
    %120 = vector.load %arg2[%c0_121, %c0_122, %c0_123] : memref<5x28x256xf32, #tpu.memory_space<vmem>>, vector<1x28x256xf32>
    %121 = vector.shape_cast %120 : vector<1x28x256xf32> to vector<28x256xf32>
    %cst_124 = arith.constant dense<0.000000e+00> : vector<48x256xf32>
    %122 = tpu.matmul %119, %121, %cst_124 {dimension_numbers = #tpu.dot_dimension_numbers<[1], [0], [0], [1], [0, 0, 1, 1], [], []>} : vector<48x28xf32>, vector<28x256xf32>, vector<48x256xf32> -> vector<48x256xf32>
    %c0_125 = arith.constant 0 : index
    %c1_126 = arith.constant 1 : index
    %c0_127 = arith.constant 0 : index
    %c0_128 = arith.constant 0 : index
    %123 = vector.load %arg1[%c0_125, %c1_126, %c0_127, %c0_128] : memref<4x7x8x28xf32, #tpu.memory_space<vmem>>, vector<1x6x8x28xf32>
    %124 = vector.shape_cast %123 : vector<1x6x8x28xf32> to vector<6x8x28xf32>
    %125 = vector.shape_cast %124 : vector<6x8x28xf32> to vector<48x28xf32>
    %c1_129 = arith.constant 1 : index
    %c0_130 = arith.constant 0 : index
    %c0_131 = arith.constant 0 : index
    %126 = vector.load %arg2[%c1_129, %c0_130, %c0_131] : memref<5x28x256xf32, #tpu.memory_space<vmem>>, vector<1x28x256xf32>
    %127 = vector.shape_cast %126 : vector<1x28x256xf32> to vector<28x256xf32>
    %cst_132 = arith.constant dense<0.000000e+00> : vector<48x256xf32>
    %128 = tpu.matmul %125, %127, %cst_132 {dimension_numbers = #tpu.dot_dimension_numbers<[1], [0], [0], [1], [0, 0, 1, 1], [], []>} : vector<48x28xf32>, vector<28x256xf32>, vector<48x256xf32> -> vector<48x256xf32>
    %129 = arith.addf %122, %128 : vector<48x256xf32>
    %c1_133 = arith.constant 1 : index
    %c1_134 = arith.constant 1 : index
    %c0_135 = arith.constant 0 : index
    %c0_136 = arith.constant 0 : index
    %130 = vector.load %arg1[%c1_133, %c1_134, %c0_135, %c0_136] : memref<4x7x8x28xf32, #tpu.memory_space<vmem>>, vector<1x6x8x28xf32>
    %131 = vector.shape_cast %130 : vector<1x6x8x28xf32> to vector<6x8x28xf32>
    %132 = vector.shape_cast %131 : vector<6x8x28xf32> to vector<48x28xf32>
    %c2_137 = arith.constant 2 : index
    %c0_138 = arith.constant 0 : index
    %c0_139 = arith.constant 0 : index
    %133 = vector.load %arg2[%c2_137, %c0_138, %c0_139] : memref<5x28x256xf32, #tpu.memory_space<vmem>>, vector<1x28x256xf32>
    %134 = vector.shape_cast %133 : vector<1x28x256xf32> to vector<28x256xf32>
    %cst_140 = arith.constant dense<0.000000e+00> : vector<48x256xf32>
    %135 = tpu.matmul %132, %134, %cst_140 {dimension_numbers = #tpu.dot_dimension_numbers<[1], [0], [0], [1], [0, 0, 1, 1], [], []>} : vector<48x28xf32>, vector<28x256xf32>, vector<48x256xf32> -> vector<48x256xf32>
    %136 = arith.addf %129, %135 : vector<48x256xf32>
    %c2_141 = arith.constant 2 : index
    %c1_142 = arith.constant 1 : index
    %c0_143 = arith.constant 0 : index
    %c0_144 = arith.constant 0 : index
    %137 = vector.load %arg1[%c2_141, %c1_142, %c0_143, %c0_144] : memref<4x7x8x28xf32, #tpu.memory_space<vmem>>, vector<1x6x8x28xf32>
    %138 = vector.shape_cast %137 : vector<1x6x8x28xf32> to vector<6x8x28xf32>
    %139 = vector.shape_cast %138 : vector<6x8x28xf32> to vector<48x28xf32>
    %c3_145 = arith.constant 3 : index
    %c0_146 = arith.constant 0 : index
    %c0_147 = arith.constant 0 : index
    %140 = vector.load %arg2[%c3_145, %c0_146, %c0_147] : memref<5x28x256xf32, #tpu.memory_space<vmem>>, vector<1x28x256xf32>
    %141 = vector.shape_cast %140 : vector<1x28x256xf32> to vector<28x256xf32>
    %cst_148 = arith.constant dense<0.000000e+00> : vector<48x256xf32>
    %142 = tpu.matmul %139, %141, %cst_148 {dimension_numbers = #tpu.dot_dimension_numbers<[1], [0], [0], [1], [0, 0, 1, 1], [], []>} : vector<48x28xf32>, vector<28x256xf32>, vector<48x256xf32> -> vector<48x256xf32>
    %143 = arith.addf %136, %142 : vector<48x256xf32>
    %c3_149 = arith.constant 3 : index
    %c1_150 = arith.constant 1 : index
    %c0_151 = arith.constant 0 : index
    %c0_152 = arith.constant 0 : index
    %144 = vector.load %arg1[%c3_149, %c1_150, %c0_151, %c0_152] : memref<4x7x8x28xf32, #tpu.memory_space<vmem>>, vector<1x6x8x28xf32>
    %145 = vector.shape_cast %144 : vector<1x6x8x28xf32> to vector<6x8x28xf32>
    %146 = vector.shape_cast %145 : vector<6x8x28xf32> to vector<48x28xf32>
    %c4_153 = arith.constant 4 : index
    %c0_154 = arith.constant 0 : index
    %c0_155 = arith.constant 0 : index
    %147 = vector.load %arg2[%c4_153, %c0_154, %c0_155] : memref<5x28x256xf32, #tpu.memory_space<vmem>>, vector<1x28x256xf32>
    %148 = vector.shape_cast %147 : vector<1x28x256xf32> to vector<28x256xf32>
    %cst_156 = arith.constant dense<0.000000e+00> : vector<48x256xf32>
    %149 = tpu.matmul %146, %148, %cst_156 {dimension_numbers = #tpu.dot_dimension_numbers<[1], [0], [0], [1], [0, 0, 1, 1], [], []>} : vector<48x28xf32>, vector<28x256xf32>, vector<48x256xf32> -> vector<48x256xf32>
    %150 = arith.addf %143, %149 : vector<48x256xf32>
    %151 = vector.extract_strided_slice %150 {offsets = [0, 0], sizes = [48, 128], strides = [1, 1]} : vector<48x256xf32> to vector<48x128xf32>
    %152 = vector.extract_strided_slice %150 {offsets = [0, 128], sizes = [48, 128], strides = [1, 1]} : vector<48x256xf32> to vector<48x128xf32>
    %153 = arith.maximumf %151, %152 : vector<48x128xf32>
    %154 = arith.maximumf %116, %153 : vector<48x128xf32>
    %c0_157 = arith.constant 0 : index
    %c0_158 = arith.constant 0 : index
    %155 = vector.load %arg5[%c0_157, %c0_158] : memref<5x128xf32, #tpu.memory_space<vmem>>, vector<1x128xf32>
    %156 = vector.broadcast %155 : vector<1x128xf32> to vector<48x128xf32>
    %157 = arith.addf %154, %156 : vector<48x128xf32>
    %cst_159 = arith.constant 0.000000e+00 : f32
    %158 = vector.broadcast %cst_159 : f32 to vector<48x128xf32>
    %159 = arith.maximumf %157, %158 : vector<48x128xf32>
    %160 = vector.extract_strided_slice %79 {offsets = [0, 0], sizes = [32, 128], strides = [1, 1]} : vector<48x128xf32> to vector<32x128xf32>
    %c0_160 = arith.constant 0 : index
    %c0_161 = arith.constant 0 : index
    %c0_162 = arith.constant 0 : index
    %161 = vector.load %arg3[%c0_160, %c0_161, %c0_162] : memref<5x128x256xf32, #tpu.memory_space<vmem>>, vector<1x128x256xf32>
    %162 = vector.shape_cast %161 : vector<1x128x256xf32> to vector<128x256xf32>
    %cst_163 = arith.constant dense<0.000000e+00> : vector<32x256xf32>
    %163 = tpu.matmul %160, %162, %cst_163 {dimension_numbers = #tpu.dot_dimension_numbers<[1], [0], [0], [1], [0, 0, 1, 1], [], []>} : vector<32x128xf32>, vector<128x256xf32>, vector<32x256xf32> -> vector<32x256xf32>
    %164 = vector.extract_strided_slice %159 {offsets = [0, 0], sizes = [32, 128], strides = [1, 1]} : vector<48x128xf32> to vector<32x128xf32>
    %c1_164 = arith.constant 1 : index
    %c0_165 = arith.constant 0 : index
    %c0_166 = arith.constant 0 : index
    %165 = vector.load %arg3[%c1_164, %c0_165, %c0_166] : memref<5x128x256xf32, #tpu.memory_space<vmem>>, vector<1x128x256xf32>
    %166 = vector.shape_cast %165 : vector<1x128x256xf32> to vector<128x256xf32>
    %cst_167 = arith.constant dense<0.000000e+00> : vector<32x256xf32>
    %167 = tpu.matmul %164, %166, %cst_167 {dimension_numbers = #tpu.dot_dimension_numbers<[1], [0], [0], [1], [0, 0, 1, 1], [], []>} : vector<32x128xf32>, vector<128x256xf32>, vector<32x256xf32> -> vector<32x256xf32>
    %168 = arith.addf %163, %167 : vector<32x256xf32>
    %169 = vector.extract_strided_slice %79 {offsets = [8, 0], sizes = [32, 128], strides = [1, 1]} : vector<48x128xf32> to vector<32x128xf32>
    %c2_168 = arith.constant 2 : index
    %c0_169 = arith.constant 0 : index
    %c0_170 = arith.constant 0 : index
    %170 = vector.load %arg3[%c2_168, %c0_169, %c0_170] : memref<5x128x256xf32, #tpu.memory_space<vmem>>, vector<1x128x256xf32>
    %171 = vector.shape_cast %170 : vector<1x128x256xf32> to vector<128x256xf32>
    %cst_171 = arith.constant dense<0.000000e+00> : vector<32x256xf32>
    %172 = tpu.matmul %169, %171, %cst_171 {dimension_numbers = #tpu.dot_dimension_numbers<[1], [0], [0], [1], [0, 0, 1, 1], [], []>} : vector<32x128xf32>, vector<128x256xf32>, vector<32x256xf32> -> vector<32x256xf32>
    %173 = arith.addf %168, %172 : vector<32x256xf32>
    %174 = vector.extract_strided_slice %159 {offsets = [8, 0], sizes = [32, 128], strides = [1, 1]} : vector<48x128xf32> to vector<32x128xf32>
    %c3_172 = arith.constant 3 : index
    %c0_173 = arith.constant 0 : index
    %c0_174 = arith.constant 0 : index
    %175 = vector.load %arg3[%c3_172, %c0_173, %c0_174] : memref<5x128x256xf32, #tpu.memory_space<vmem>>, vector<1x128x256xf32>
    %176 = vector.shape_cast %175 : vector<1x128x256xf32> to vector<128x256xf32>
    %cst_175 = arith.constant dense<0.000000e+00> : vector<32x256xf32>
    %177 = tpu.matmul %174, %176, %cst_175 {dimension_numbers = #tpu.dot_dimension_numbers<[1], [0], [0], [1], [0, 0, 1, 1], [], []>} : vector<32x128xf32>, vector<128x256xf32>, vector<32x256xf32> -> vector<32x256xf32>
    %178 = arith.addf %173, %177 : vector<32x256xf32>
    %179 = vector.extract_strided_slice %79 {offsets = [16, 0], sizes = [32, 128], strides = [1, 1]} : vector<48x128xf32> to vector<32x128xf32>
    %c4_176 = arith.constant 4 : index
    %c0_177 = arith.constant 0 : index
    %c0_178 = arith.constant 0 : index
    %180 = vector.load %arg3[%c4_176, %c0_177, %c0_178] : memref<5x128x256xf32, #tpu.memory_space<vmem>>, vector<1x128x256xf32>
    %181 = vector.shape_cast %180 : vector<1x128x256xf32> to vector<128x256xf32>
    %cst_179 = arith.constant dense<0.000000e+00> : vector<32x256xf32>
    %182 = tpu.matmul %179, %181, %cst_179 {dimension_numbers = #tpu.dot_dimension_numbers<[1], [0], [0], [1], [0, 0, 1, 1], [], []>} : vector<32x128xf32>, vector<128x256xf32>, vector<32x256xf32> -> vector<32x256xf32>
    %183 = arith.addf %178, %182 : vector<32x256xf32>
    %184 = vector.extract_strided_slice %183 {offsets = [0, 0], sizes = [32, 128], strides = [1, 1]} : vector<32x256xf32> to vector<32x128xf32>
    %185 = vector.extract_strided_slice %183 {offsets = [0, 128], sizes = [32, 128], strides = [1, 1]} : vector<32x256xf32> to vector<32x128xf32>
    %186 = arith.maximumf %184, %185 : vector<32x128xf32>
    %187 = vector.extract_strided_slice %159 {offsets = [0, 0], sizes = [32, 128], strides = [1, 1]} : vector<48x128xf32> to vector<32x128xf32>
    %c0_180 = arith.constant 0 : index
    %c0_181 = arith.constant 0 : index
    %c0_182 = arith.constant 0 : index
    %188 = vector.load %arg3[%c0_180, %c0_181, %c0_182] : memref<5x128x256xf32, #tpu.memory_space<vmem>>, vector<1x128x256xf32>
    %189 = vector.shape_cast %188 : vector<1x128x256xf32> to vector<128x256xf32>
    %cst_183 = arith.constant dense<0.000000e+00> : vector<32x256xf32>
    %190 = tpu.matmul %187, %189, %cst_183 {dimension_numbers = #tpu.dot_dimension_numbers<[1], [0], [0], [1], [0, 0, 1, 1], [], []>} : vector<32x128xf32>, vector<128x256xf32>, vector<32x256xf32> -> vector<32x256xf32>
    %191 = vector.extract_strided_slice %79 {offsets = [8, 0], sizes = [32, 128], strides = [1, 1]} : vector<48x128xf32> to vector<32x128xf32>
    %c1_184 = arith.constant 1 : index
    %c0_185 = arith.constant 0 : index
    %c0_186 = arith.constant 0 : index
    %192 = vector.load %arg3[%c1_184, %c0_185, %c0_186] : memref<5x128x256xf32, #tpu.memory_space<vmem>>, vector<1x128x256xf32>
    %193 = vector.shape_cast %192 : vector<1x128x256xf32> to vector<128x256xf32>
    %cst_187 = arith.constant dense<0.000000e+00> : vector<32x256xf32>
    %194 = tpu.matmul %191, %193, %cst_187 {dimension_numbers = #tpu.dot_dimension_numbers<[1], [0], [0], [1], [0, 0, 1, 1], [], []>} : vector<32x128xf32>, vector<128x256xf32>, vector<32x256xf32> -> vector<32x256xf32>
    %195 = arith.addf %190, %194 : vector<32x256xf32>
    %196 = vector.extract_strided_slice %159 {offsets = [8, 0], sizes = [32, 128], strides = [1, 1]} : vector<48x128xf32> to vector<32x128xf32>
    %c2_188 = arith.constant 2 : index
    %c0_189 = arith.constant 0 : index
    %c0_190 = arith.constant 0 : index
    %197 = vector.load %arg3[%c2_188, %c0_189, %c0_190] : memref<5x128x256xf32, #tpu.memory_space<vmem>>, vector<1x128x256xf32>
    %198 = vector.shape_cast %197 : vector<1x128x256xf32> to vector<128x256xf32>
    %cst_191 = arith.constant dense<0.000000e+00> : vector<32x256xf32>
    %199 = tpu.matmul %196, %198, %cst_191 {dimension_numbers = #tpu.dot_dimension_numbers<[1], [0], [0], [1], [0, 0, 1, 1], [], []>} : vector<32x128xf32>, vector<128x256xf32>, vector<32x256xf32> -> vector<32x256xf32>
    %200 = arith.addf %195, %199 : vector<32x256xf32>
    %201 = vector.extract_strided_slice %79 {offsets = [16, 0], sizes = [32, 128], strides = [1, 1]} : vector<48x128xf32> to vector<32x128xf32>
    %c3_192 = arith.constant 3 : index
    %c0_193 = arith.constant 0 : index
    %c0_194 = arith.constant 0 : index
    %202 = vector.load %arg3[%c3_192, %c0_193, %c0_194] : memref<5x128x256xf32, #tpu.memory_space<vmem>>, vector<1x128x256xf32>
    %203 = vector.shape_cast %202 : vector<1x128x256xf32> to vector<128x256xf32>
    %cst_195 = arith.constant dense<0.000000e+00> : vector<32x256xf32>
    %204 = tpu.matmul %201, %203, %cst_195 {dimension_numbers = #tpu.dot_dimension_numbers<[1], [0], [0], [1], [0, 0, 1, 1], [], []>} : vector<32x128xf32>, vector<128x256xf32>, vector<32x256xf32> -> vector<32x256xf32>
    %205 = arith.addf %200, %204 : vector<32x256xf32>
    %206 = vector.extract_strided_slice %159 {offsets = [16, 0], sizes = [32, 128], strides = [1, 1]} : vector<48x128xf32> to vector<32x128xf32>
    %c4_196 = arith.constant 4 : index
    %c0_197 = arith.constant 0 : index
    %c0_198 = arith.constant 0 : index
    %207 = vector.load %arg3[%c4_196, %c0_197, %c0_198] : memref<5x128x256xf32, #tpu.memory_space<vmem>>, vector<1x128x256xf32>
    %208 = vector.shape_cast %207 : vector<1x128x256xf32> to vector<128x256xf32>
    %cst_199 = arith.constant dense<0.000000e+00> : vector<32x256xf32>
    %209 = tpu.matmul %206, %208, %cst_199 {dimension_numbers = #tpu.dot_dimension_numbers<[1], [0], [0], [1], [0, 0, 1, 1], [], []>} : vector<32x128xf32>, vector<128x256xf32>, vector<32x256xf32> -> vector<32x256xf32>
    %210 = arith.addf %205, %209 : vector<32x256xf32>
    %211 = vector.extract_strided_slice %210 {offsets = [0, 0], sizes = [32, 128], strides = [1, 1]} : vector<32x256xf32> to vector<32x128xf32>
    %212 = vector.extract_strided_slice %210 {offsets = [0, 128], sizes = [32, 128], strides = [1, 1]} : vector<32x256xf32> to vector<32x128xf32>
    %213 = arith.maximumf %211, %212 : vector<32x128xf32>
    %214 = arith.maximumf %186, %213 : vector<32x128xf32>
    %c1_200 = arith.constant 1 : index
    %c0_201 = arith.constant 0 : index
    %215 = vector.load %arg5[%c1_200, %c0_201] : memref<5x128xf32, #tpu.memory_space<vmem>>, vector<1x128xf32>
    %216 = vector.broadcast %215 : vector<1x128xf32> to vector<32x128xf32>
    %217 = arith.addf %214, %216 : vector<32x128xf32>
    %cst_202 = arith.constant 0.000000e+00 : f32
    %218 = vector.broadcast %cst_202 : f32 to vector<32x128xf32>
    %219 = arith.maximumf %217, %218 : vector<32x128xf32>
    %c2_203 = arith.constant 2 : index
    %c0_204 = arith.constant 0 : index
    %220 = vector.load %arg5[%c2_203, %c0_204] : memref<5x128xf32, #tpu.memory_space<vmem>>, vector<1x128xf32>
    %221 = vector.extract_strided_slice %219 {offsets = [0, 0], sizes = [8, 128], strides = [1, 1]} : vector<32x128xf32> to vector<8x128xf32>
    %c0_205 = arith.constant 0 : index
    %c0_206 = arith.constant 0 : index
    %c0_207 = arith.constant 0 : index
    %222 = vector.load %arg4[%c0_205, %c0_206, %c0_207] : memref<6x128x128xf32, #tpu.memory_space<vmem>>, vector<1x128x128xf32>
    %223 = vector.shape_cast %222 : vector<1x128x128xf32> to vector<128x128xf32>
    %cst_208 = arith.constant dense<0.000000e+00> : vector<8x128xf32>
    %224 = tpu.matmul %221, %223, %cst_208 {dimension_numbers = #tpu.dot_dimension_numbers<[1], [0], [0], [1], [0, 0, 1, 1], [], []>} : vector<8x128xf32>, vector<128x128xf32>, vector<8x128xf32> -> vector<8x128xf32>
    %225 = vector.broadcast %220 : vector<1x128xf32> to vector<8x128xf32>
    %226 = arith.addf %225, %224 : vector<8x128xf32>
    %227 = vector.extract_strided_slice %219 {offsets = [8, 0], sizes = [8, 128], strides = [1, 1]} : vector<32x128xf32> to vector<8x128xf32>
    %c1_209 = arith.constant 1 : index
    %c0_210 = arith.constant 0 : index
    %c0_211 = arith.constant 0 : index
    %228 = vector.load %arg4[%c1_209, %c0_210, %c0_211] : memref<6x128x128xf32, #tpu.memory_space<vmem>>, vector<1x128x128xf32>
    %229 = vector.shape_cast %228 : vector<1x128x128xf32> to vector<128x128xf32>
    %cst_212 = arith.constant dense<0.000000e+00> : vector<8x128xf32>
    %230 = tpu.matmul %227, %229, %cst_212 {dimension_numbers = #tpu.dot_dimension_numbers<[1], [0], [0], [1], [0, 0, 1, 1], [], []>} : vector<8x128xf32>, vector<128x128xf32>, vector<8x128xf32> -> vector<8x128xf32>
    %231 = arith.addf %226, %230 : vector<8x128xf32>
    %232 = vector.extract_strided_slice %219 {offsets = [16, 0], sizes = [8, 128], strides = [1, 1]} : vector<32x128xf32> to vector<8x128xf32>
    %c2_213 = arith.constant 2 : index
    %c0_214 = arith.constant 0 : index
    %c0_215 = arith.constant 0 : index
    %233 = vector.load %arg4[%c2_213, %c0_214, %c0_215] : memref<6x128x128xf32, #tpu.memory_space<vmem>>, vector<1x128x128xf32>
    %234 = vector.shape_cast %233 : vector<1x128x128xf32> to vector<128x128xf32>
    %cst_216 = arith.constant dense<0.000000e+00> : vector<8x128xf32>
    %235 = tpu.matmul %232, %234, %cst_216 {dimension_numbers = #tpu.dot_dimension_numbers<[1], [0], [0], [1], [0, 0, 1, 1], [], []>} : vector<8x128xf32>, vector<128x128xf32>, vector<8x128xf32> -> vector<8x128xf32>
    %236 = arith.addf %231, %235 : vector<8x128xf32>
    %237 = vector.extract_strided_slice %219 {offsets = [24, 0], sizes = [8, 128], strides = [1, 1]} : vector<32x128xf32> to vector<8x128xf32>
    %c3_217 = arith.constant 3 : index
    %c0_218 = arith.constant 0 : index
    %c0_219 = arith.constant 0 : index
    %238 = vector.load %arg4[%c3_217, %c0_218, %c0_219] : memref<6x128x128xf32, #tpu.memory_space<vmem>>, vector<1x128x128xf32>
    %239 = vector.shape_cast %238 : vector<1x128x128xf32> to vector<128x128xf32>
    %cst_220 = arith.constant dense<0.000000e+00> : vector<8x128xf32>
    %240 = tpu.matmul %237, %239, %cst_220 {dimension_numbers = #tpu.dot_dimension_numbers<[1], [0], [0], [1], [0, 0, 1, 1], [], []>} : vector<8x128xf32>, vector<128x128xf32>, vector<8x128xf32> -> vector<8x128xf32>
    %241 = arith.addf %236, %240 : vector<8x128xf32>
    %cst_221 = arith.constant 0.000000e+00 : f32
    %242 = vector.broadcast %cst_221 : f32 to vector<8x128xf32>
    %243 = arith.maximumf %241, %242 : vector<8x128xf32>
    %c4_222 = arith.constant 4 : index
    %c0_223 = arith.constant 0 : index
    %c0_224 = arith.constant 0 : index
    %244 = vector.load %arg4[%c4_222, %c0_223, %c0_224] : memref<6x128x128xf32, #tpu.memory_space<vmem>>, vector<1x128x128xf32>
    %245 = vector.shape_cast %244 : vector<1x128x128xf32> to vector<128x128xf32>
    %cst_225 = arith.constant dense<0.000000e+00> : vector<8x128xf32>
    %246 = tpu.matmul %243, %245, %cst_225 {dimension_numbers = #tpu.dot_dimension_numbers<[1], [0], [0], [1], [0, 0, 1, 1], [], []>} : vector<8x128xf32>, vector<128x128xf32>, vector<8x128xf32> -> vector<8x128xf32>
    %c3_226 = arith.constant 3 : index
    %c0_227 = arith.constant 0 : index
    %247 = vector.load %arg5[%c3_226, %c0_227] : memref<5x128xf32, #tpu.memory_space<vmem>>, vector<1x128xf32>
    %248 = vector.broadcast %247 : vector<1x128xf32> to vector<8x128xf32>
    %249 = arith.addf %246, %248 : vector<8x128xf32>
    %cst_228 = arith.constant 0.000000e+00 : f32
    %250 = vector.broadcast %cst_228 : f32 to vector<8x128xf32>
    %251 = arith.maximumf %249, %250 : vector<8x128xf32>
    %c5 = arith.constant 5 : index
    %c0_229 = arith.constant 0 : index
    %c0_230 = arith.constant 0 : index
    %252 = vector.load %arg4[%c5, %c0_229, %c0_230] : memref<6x128x128xf32, #tpu.memory_space<vmem>>, vector<1x128x128xf32>
    %253 = vector.shape_cast %252 : vector<1x128x128xf32> to vector<128x128xf32>
    %cst_231 = arith.constant dense<0.000000e+00> : vector<8x128xf32>
    %254 = tpu.matmul %251, %253, %cst_231 {dimension_numbers = #tpu.dot_dimension_numbers<[1], [0], [0], [1], [0, 0, 1, 1], [], []>} : vector<8x128xf32>, vector<128x128xf32>, vector<8x128xf32> -> vector<8x128xf32>
    %c4_232 = arith.constant 4 : index
    %c0_233 = arith.constant 0 : index
    %255 = vector.load %arg5[%c4_232, %c0_233] : memref<5x128xf32, #tpu.memory_space<vmem>>, vector<1x128xf32>
    %256 = vector.broadcast %255 : vector<1x128xf32> to vector<8x128xf32>
    %257 = arith.addf %254, %256 : vector<8x128xf32>
    %cst_234 = arith.constant dense<0xFF800000> : vector<8xf32>
    %258 = vector.multi_reduction <maximumf>, %257, %cst_234 [1] : vector<8x128xf32> to vector<8xf32>
    %259 = vector.shape_cast %258 : vector<8xf32> to vector<8x1xf32>
    %260 = vector.broadcast %259 : vector<8x1xf32> to vector<8x128xf32>
    %261 = arith.subf %257, %260 : vector<8x128xf32>
    %262 = math.exp %261 : vector<8x128xf32>
    %cst_235 = arith.constant dense<0.000000e+00> : vector<8xf32>
    %263 = vector.multi_reduction <add>, %262, %cst_235 [1] : vector<8x128xf32> to vector<8xf32>
    %264 = vector.shape_cast %263 : vector<8xf32> to vector<8x1xf32>
    %265 = tpu.reciprocal %264 {approx = true} : vector<8x1xf32> -> vector<8x1xf32>
    %266 = vector.broadcast %265 : vector<8x1xf32> to vector<8x128xf32>
    %267 = arith.mulf %262, %266 : vector<8x128xf32>
    %c0_236 = arith.constant 0 : index
    %c0_237 = arith.constant 0 : index
    %268 = vector.load %arg6[%c0_236, %c0_237] : memref<8x128xf32, #tpu.memory_space<vmem>>, vector<8x128xf32>
    tpu.vector_store %arg6[%c0_236, %c0_237], %267 {strides = array<i32>} : memref<8x128xf32, #tpu.memory_space<vmem>>, vector<8x128xf32>,
    return
  }
  func.func @transform_0(%arg0: i32) -> (i32, i32, i32, i32) {
    %c0_i32 = arith.constant 0 : i32
    %c0_i32_0 = arith.constant 0 : i32
    %c0_i32_1 = arith.constant 0 : i32
    %c0_i32_2 = arith.constant 0 : i32
    return %c0_i32, %c0_i32_0, %arg0, %c0_i32_1 : i32, i32, i32, i32
  }
  func.func @transform_1(%arg0: i32) -> (i32, i32, i32) {
    %c0_i32 = arith.constant 0 : i32
    %c0_i32_0 = arith.constant 0 : i32
    %c0_i32_1 = arith.constant 0 : i32
    %c0_i32_2 = arith.constant 0 : i32
    return %c0_i32, %c0_i32_0, %c0_i32_1 : i32, i32, i32
  }
  func.func @transform_2(%arg0: i32) -> (i32, i32, i32) {
    %c0_i32 = arith.constant 0 : i32
    %c0_i32_0 = arith.constant 0 : i32
    %c0_i32_1 = arith.constant 0 : i32
    %c0_i32_2 = arith.constant 0 : i32
    return %c0_i32, %c0_i32_0, %c0_i32_1 : i32, i32, i32
  }
  func.func @transform_3(%arg0: i32) -> (i32, i32, i32) {
    %c0_i32 = arith.constant 0 : i32
    %c0_i32_0 = arith.constant 0 : i32
    %c0_i32_1 = arith.constant 0 : i32
    %c0_i32_2 = arith.constant 0 : i32
    return %c0_i32, %c0_i32_0, %c0_i32_1 : i32, i32, i32
  }
  func.func @transform_4(%arg0: i32) -> (i32, i32) {
    %c0_i32 = arith.constant 0 : i32
    %c0_i32_0 = arith.constant 0 : i32
    %c0_i32_1 = arith.constant 0 : i32
    return %c0_i32, %c0_i32_0 : i32, i32
  }
  func.func @transform_5(%arg0: i32) -> (i32, i32) {
    %c0_i32 = arith.constant 0 : i32
    %c0_i32_0 = arith.constant 0 : i32
    return %arg0, %c0_i32 : i32, i32
  }
}

</mosaic_0001>

<llo_original>
// kernel: network_forward.1
$region0: #{network_forward.1}
  #allocation0 [shape = 'u32[]', space=smem, size = 0x4, offset = 0x4, fixed_abs, tag = 'smem constant byte address 0x4 - core index']
  #allocation1 [shape = 'u32[144,128]{1,0:T(1,128)}', space=vmem, size = 0x12000, scoped, tag = 'internal scratch']
  %s0 = inlined_call_operand.vmem [shape: f32[4,7,8,28], index: 0, kind: input, shape index: {}]
  %s1 = inlined_call_operand.hbm [shape: f32[5,28,256], index: 1, kind: input, shape index: {}]
  %s2 = inlined_call_operand.hbm [shape: f32[5,128,256], index: 2, kind: input, shape index: {}]
  %s3 = inlined_call_operand.vmem [shape: f32[6,128,128], index: 3, kind: input, shape index: {}]
  %s4 = inlined_call_operand.vmem [shape: f32[5,128], index: 4, kind: input, shape index: {}]
  %s5 = inlined_call_operand.vmem [shape: f32[8,128], index: 5, kind: output, shape index: {}]
  %s6 = sld [smem:[#allocation0]]
  $region38: #{network_forward.1} parent=0
    _
  %s8 = ssub.s32 1, %s6
  %s9 = scalar_select 0, %s8, %s6
  $region1: #{network_forward.1} parent=0
    #allocation2 [shape = 'u8[163840]{0}', space=vmem, size = 0x28000, scoped, tag = 'input window, operand 1, single buffered']
    #allocation3 [shape = 's32[1]{0}', space=sflag, size = 0x4, scoped, tag = 'scoped memory for network_forward.1']
    #allocation4 [shape = 'u8[655360]{0}', space=vmem, size = 0xa0000, scoped, tag = 'input window, operand 2, single buffered']
    #allocation5 [shape = 's32[1]{0}', space=sflag, size = 0x4, scoped, tag = 'scoped memory for network_forward.1']
    %10 = vsyncpa [#allocation3], 0
    %11 = vsyncpa [#allocation5], 0
    // Predicated region
    $region2: #{network_forward.1} parent=1 // pred_check
      _
    $region3: #{network_forward.1} parent=1 // pred_check_branch
      %13 = sbr.rel (0) target = $region5
    $region4: #{network_forward.1} parent=1 // pred_region
      _
    $region5: #{network_forward.1} parent=1 // pred_fallthru
      _
    // Predicated region
    $region6: #{network_forward.1} parent=1 // pred_check
      _
    $region7: #{network_forward.1} parent=1 // pred_check_branch
      %15 = sbr.rel (0) target = $region9
    $region8: #{network_forward.1} parent=1 // pred_region
      %s17 = ssub.s32 5120, 5120
      %18 = vsyncadd [#allocation3], %s17
      %s19 = sshll.u32 [#allocation2], 4
      %s20 = int_to_ptr.vmem [resolvable:$true] %s19
      %25 = dma.hbm_to_vmem [thread:$0]  %s1, 5120, %s20, [#allocation3], 256, 256, 16
    $region9: #{network_forward.1} parent=1 // pred_fallthru
      _
    // Predicated region
    $region10: #{network_forward.1} parent=1 // pred_check
      _
    $region11: #{network_forward.1} parent=1 // pred_check_branch
      %27 = sbr.rel (0) target = $region13
    $region12: #{network_forward.1} parent=1 // pred_region
      %s29 = ssub.s32 20480, 20480
      %30 = vsyncadd [#allocation5], %s29
      %s31 = sshll.u32 [#allocation4], 4
      %s32 = int_to_ptr.vmem [resolvable:$true] %s31
      %37 = dma.hbm_to_vmem [thread:$0]  %s2, 20480, %s32, [#allocation5], 256, 256, 16
    $region13: #{network_forward.1} parent=1 // pred_fallthru
      _
    // Predicated region
    $region14: #{network_forward.1} parent=1 // pred_check
      _
    $region15: #{network_forward.1} parent=1 // pred_check_branch
      %39 = sbr.rel (0) target = $region17
    $region16: #{network_forward.1} parent=1 // pred_region
      _
    $region17: #{network_forward.1} parent=1 // pred_fallthru
      _
    // Predicated region
    $region18: #{network_forward.1} parent=1 // pred_check
      _
    $region19: #{network_forward.1} parent=1 // pred_check_branch
      %41 = sbr.rel (0) target = $region21
    $region20: #{network_forward.1} parent=1 // pred_region
      _
    $region21: #{network_forward.1} parent=1 // pred_fallthru
      _
    // Predicated region
    $region22: #{network_forward.1} parent=1 // pred_check
      _
    $region23: #{network_forward.1} parent=1 // pred_check_branch
      %43 = sbr.rel (0) target = $region25
    $region24: #{network_forward.1} parent=1 // pred_region
      %44 = dma.done [#allocation3], 5120
    $region25: #{network_forward.1} parent=1 // pred_fallthru
      _
    // Predicated region
    $region26: #{network_forward.1} parent=1 // pred_check
      _
    $region27: #{network_forward.1} parent=1 // pred_check_branch
      %46 = sbr.rel (0) target = $region29
    $region28: #{network_forward.1} parent=1 // pred_region
      %47 = dma.done [#allocation5], 20480
    $region29: #{network_forward.1} parent=1 // pred_fallthru
      _
    %v48 = vld [vmem:[%s0] sm:$0xff]
    %v49 = vld [vmem:[%s0 + $0x8] sm:$0xff]
    %v50 = vld [vmem:[%s0 + $0x10] sm:$0xff]
    %v51 = vld [vmem:[%s0 + $0x18] sm:$0xff]
    %v52 = vld [vmem:[%s0 + $0x20] sm:$0xff]
    %v53 = vld [vmem:[%s0 + $0x28] sm:$0xff]
    %v54 = vld [vmem:[#allocation2] sm:$0xff]
    %v55 = vld [vmem:[#allocation2 + $0x8] sm:$0xff]
    %v56 = vld [vmem:[#allocation2 + $0x10] sm:$0xff]
    %v57 = vld [vmem:[#allocation2 + $0x18] sm:$0xff]
    %v58 = vld [vmem:[#allocation2 + $0x20] sm:$0xff]
    %v59 = vld [vmem:[#allocation2 + $0x28] sm:$0xff]
    %v60 = vld [vmem:[#allocation2 + $0x30] sm:$0xf]
    %v61 = vld [vmem:[#allocation2 + $0x38] sm:$0xf]
    %s62 = scalar_lea.vmem %s0, 56
    %v63 = vld [vmem:[%s62] sm:$0xff]
    %v64 = vld [vmem:[%s62 + $0x8] sm:$0xff]
    %v65 = vld [vmem:[%s62 + $0x10] sm:$0xff]
    %v66 = vld [vmem:[%s62 + $0x18] sm:$0xff]
    %v67 = vld [vmem:[%s62 + $0x20] sm:$0xff]
    %v68 = vld [vmem:[%s62 + $0x28] sm:$0xff]
    %s69 = scalar_lea.vmem [#allocation2], 64
    %v70 = vld [vmem:[%s69] sm:$0xff]
    %v71 = vld [vmem:[%s69 + $0x8] sm:$0xff]
    %v72 = vld [vmem:[%s69 + $0x10] sm:$0xff]
    %v73 = vld [vmem:[%s69 + $0x18] sm:$0xff]
    %v74 = vld [vmem:[%s69 + $0x20] sm:$0xff]
    %v75 = vld [vmem:[%s69 + $0x28] sm:$0xff]
    %v76 = vld [vmem:[%s69 + $0x30] sm:$0xf]
    %v77 = vld [vmem:[%s69 + $0x38] sm:$0xf]
    %vm78 = vcmask 228352
    %v80 = vsel %vm78, %v63, 0
    %v83 = vsel %vm78, %v64, 0
    %v86 = vsel %vm78, %v65, 0
    %v89 = vsel %vm78, %v66, 0
    %v92 = vsel %vm78, %v67, 0
    %v95 = vsel %vm78, %v68, 0
    %vm97 = vcmask 1043456
    %v99 = vsel %vm97, %v76, 0
    %v102 = vsel %vm97, %v77, 0
    %104 = vmatprep.subr.mxu0 0.0
    %105 = vmatpush1.msra.mxu0 0.0
    %106 = vmatprep.subr.mxu0 0.0
    %107 = vmatpush1.msra.mxu0 0.0
    %108 = vmatprep.subr.mxu0 0.0
    %109 = vmatpush1.msra.mxu0 0.0
    %110 = vmatprep.subr.mxu0 0.0
    %111 = vmatpush1.msra.mxu0 0.0
    %112 = vmatprep.subr.mxu0 0.0
    %113 = vmatpush1.msra.mxu0 0.0
    %114 = vmatprep.subr.mxu0 0.0
    %115 = vmatpush1.msra.mxu0 0.0
    %116 = vmatprep.subr.mxu0 0.0
    %117 = vmatpush1.msra.mxu0 0.0
    %118 = vmatprep.subr.mxu0 0.0
    %119 = vmatpush1.msra.mxu0 0.0
    %120 = vmatprep.subr.mxu0 0.0
    %121 = vmatpush1.msra.mxu0 0.0
    %122 = vmatprep.subr.mxu0 0.0
    %123 = vmatpush1.msra.mxu0 0.0
    %124 = vmatprep.subr.mxu0 0.0
    %125 = vmatpush1.msra.mxu0 0.0
    %126 = vmatprep.subr.mxu0 0.0
    %127 = vmatpush1.msra.mxu0 0.0
    %128 = vmatprep.subr.mxu0 %v102
    %129 = vmatpush1.msra.mxu0 %v99
    %130 = vmatprep.subr.mxu0 %v75
    %131 = vmatpush1.msra.mxu0 %v74
    %132 = vmatprep.subr.mxu0 %v73
    %133 = vmatpush1.msra.mxu0 %v72
    %134 = vmatprep.subr.mxu0 %v71
    %135 = vmatpush1.msra.mxu0 %v70
    %136 = vmatprep.subr.mxu0 0.0
    %137 = vmatpush2.msra.mxu0 0.0
    %138 = vmatprep.subr.mxu0 0.0
    %139 = vmatpush2.msra.mxu0 0.0
    %140 = vmatprep.subr.mxu0 0.0
    %141 = vmatpush2.msra.mxu0 0.0
    %142 = vmatprep.subr.mxu0 0.0
    %143 = vmatpush2.msra.mxu0 0.0
    %144 = vmatprep.subr.mxu0 0.0
    %145 = vmatpush2.msra.mxu0 0.0
    %146 = vmatprep.subr.mxu0 0.0
    %147 = vmatpush2.msra.mxu0 0.0
    %148 = vmatprep.subr.mxu0 0.0
    %149 = vmatpush2.msra.mxu0 0.0
    %150 = vmatprep.subr.mxu0 0.0
    %151 = vmatpush2.msra.mxu0 0.0
    %152 = vmatprep.subr.mxu0 0.0
    %153 = vmatpush2.msra.mxu0 0.0
    %154 = vmatprep.subr.mxu0 0.0
    %155 = vmatpush2.msra.mxu0 0.0
    %156 = vmatprep.subr.mxu0 0.0
    %157 = vmatpush2.msra.mxu0 0.0
    %158 = vmatprep.subr.mxu0 0.0
    %159 = vmatpush2.msra.mxu0 0.0
    %160 = vmatprep.subr.mxu0 0.0
    %161 = vmatpush2.msra.mxu0 0.0
    %162 = vmatprep.subr.mxu0 0.0
    %163 = vmatpush2.msra.mxu0 0.0
    %164 = vmatprep.subr.mxu0 0.0
    %165 = vmatpush2.msra.mxu0 0.0
    %166 = vmatprep.subr.mxu0 0.0
    %167 = vmatpush2.msra.mxu0 0.0
    %168 = vmatprep.mubr.f32.mxu0 0.0
    %169 = vmatmul.mubr.f32.gmra.mxu0 %v80
    %v170 = vpop.f32.mrf.mxu0
    %v171 = vadd.f32 0.0, %v170
    %v172 = vpop.f32.mrf.mxu0
    %v173 = vadd.f32 0.0, %v172
    %174 = vmatprep.mubr.f32.mxu0 0.0
    %175 = vmatmul.mubr.f32.gmra.mxu0 %v83
    %v176 = vpop.f32.mrf.mxu0
    %v177 = vadd.f32 0.0, %v176
    %v178 = vpop.f32.mrf.mxu0
    %v179 = vadd.f32 0.0, %v178
    %180 = vmatprep.mubr.f32.mxu0 0.0
    %181 = vmatmul.mubr.f32.gmra.mxu0 %v86
    %v182 = vpop.f32.mrf.mxu0
    %v183 = vadd.f32 0.0, %v182
    %v184 = vpop.f32.mrf.mxu0
    %v185 = vadd.f32 0.0, %v184
    %186 = vmatprep.mubr.f32.mxu0 0.0
    %187 = vmatmul.mubr.f32.gmra.mxu0 %v89
    %v188 = vpop.f32.mrf.mxu0
    %v189 = vadd.f32 0.0, %v188
    %v190 = vpop.f32.mrf.mxu0
    %v191 = vadd.f32 0.0, %v190
    %192 = vmatprep.mubr.f32.mxu0 0.0
    %193 = vmatmul.mubr.f32.gmra.mxu0 %v92
    %v194 = vpop.f32.mrf.mxu0
    %v195 = vadd.f32 0.0, %v194
    %v196 = vpop.f32.mrf.mxu0
    %v197 = vadd.f32 0.0, %v196
    %198 = vmatprep.mubr.f32.mxu0 0.0
    %199 = vmatmul.mubr.f32.gmra.mxu0 %v95
    %v200 = vpop.f32.mrf.mxu0
    %v201 = vadd.f32 0.0, %v200
    %v202 = vpop.f32.mrf.mxu0
    %v203 = vadd.f32 0.0, %v202
    %204 = vdwg.mxu0
    %v206 = vsel %vm78, %v48, 0
    %v209 = vsel %vm78, %v49, 0
    %v212 = vsel %vm78, %v50, 0
    %v215 = vsel %vm78, %v51, 0
    %v218 = vsel %vm78, %v52, 0
    %v221 = vsel %vm78, %v53, 0
    %v224 = vsel %vm97, %v60, 0
    %v227 = vsel %vm97, %v61, 0
    %229 = vmatprep.subr.mxu0 0.0
    %230 = vmatpush1.msra.mxu0 0.0
    %231 = vmatprep.subr.mxu0 0.0
    %232 = vmatpush1.msra.mxu0 0.0
    %233 = vmatprep.subr.mxu0 0.0
    %234 = vmatpush1.msra.mxu0 0.0
    %235 = vmatprep.subr.mxu0 0.0
    %236 = vmatpush1.msra.mxu0 0.0
    %237 = vmatprep.subr.mxu0 0.0
    %238 = vmatpush1.msra.mxu0 0.0
    %239 = vmatprep.subr.mxu0 0.0
    %240 = vmatpush1.msra.mxu0 0.0
    %241 = vmatprep.subr.mxu0 0.0
    %242 = vmatpush1.msra.mxu0 0.0
    %243 = vmatprep.subr.mxu0 0.0
    %244 = vmatpush1.msra.mxu0 0.0
    %245 = vmatprep.subr.mxu0 0.0
    %246 = vmatpush1.msra.mxu0 0.0
    %247 = vmatprep.subr.mxu0 0.0
    %248 = vmatpush1.msra.mxu0 0.0
    %249 = vmatprep.subr.mxu0 0.0
    %250 = vmatpush1.msra.mxu0 0.0
    %251 = vmatprep.subr.mxu0 0.0
    %252 = vmatpush1.msra.mxu0 0.0
    %253 = vmatprep.subr.mxu0 %v227
    %254 = vmatpush1.msra.mxu0 %v224
    %255 = vmatprep.subr.mxu0 %v59
    %256 = vmatpush1.msra.mxu0 %v58
    %257 = vmatprep.subr.mxu0 %v57
    %258 = vmatpush1.msra.mxu0 %v56
    %259 = vmatprep.subr.mxu0 %v55
    %260 = vmatpush1.msra.mxu0 %v54
    %261 = vmatprep.subr.mxu0 0.0
    %262 = vmatpush2.msra.mxu0 0.0
    %263 = vmatprep.subr.mxu0 0.0
    %264 = vmatpush2.msra.mxu0 0.0
    %265 = vmatprep.subr.mxu0 0.0
    %266 = vmatpush2.msra.mxu0 0.0
    %267 = vmatprep.subr.mxu0 0.0
    %268 = vmatpush2.msra.mxu0 0.0
    %269 = vmatprep.subr.mxu0 0.0
    %270 = vmatpush2.msra.mxu0 0.0
    %271 = vmatprep.subr.mxu0 0.0
    %272 = vmatpush2.msra.mxu0 0.0
    %273 = vmatprep.subr.mxu0 0.0
    %274 = vmatpush2.msra.mxu0 0.0
    %275 = vmatprep.subr.mxu0 0.0
    %276 = vmatpush2.msra.mxu0 0.0
    %277 = vmatprep.subr.mxu0 0.0
    %278 = vmatpush2.msra.mxu0 0.0
    %279 = vmatprep.subr.mxu0 0.0
    %280 = vmatpush2.msra.mxu0 0.0
    %281 = vmatprep.subr.mxu0 0.0
    %282 = vmatpush2.msra.mxu0 0.0
    %283 = vmatprep.subr.mxu0 0.0
    %284 = vmatpush2.msra.mxu0 0.0
    %285 = vmatprep.subr.mxu0 0.0
    %286 = vmatpush2.msra.mxu0 0.0
    %287 = vmatprep.subr.mxu0 0.0
    %288 = vmatpush2.msra.mxu0 0.0
    %289 = vmatprep.subr.mxu0 0.0
    %290 = vmatpush2.msra.mxu0 0.0
    %291 = vmatprep.subr.mxu0 0.0
    %292 = vmatpush2.msra.mxu0 0.0
    %293 = vmatprep.mubr.f32.mxu0 0.0
    %294 = vmatmul.mubr.f32.gmra.mxu0 %v206
    %v295 = vpop.f32.mrf.mxu0
    %v296 = vadd.f32 %v171, %v295
    %v297 = vpop.f32.mrf.mxu0
    %v298 = vadd.f32 %v173, %v297
    %299 = vmatprep.mubr.f32.mxu0 0.0
    %300 = vmatmul.mubr.f32.gmra.mxu0 %v209
    %v301 = vpop.f32.mrf.mxu0
    %v302 = vadd.f32 %v177, %v301
    %v303 = vpop.f32.mrf.mxu0
    %v304 = vadd.f32 %v179, %v303
    %305 = vmatprep.mubr.f32.mxu0 0.0
    %306 = vmatmul.mubr.f32.gmra.mxu0 %v212
    %v307 = vpop.f32.mrf.mxu0
    %v308 = vadd.f32 %v183, %v307
    %v309 = vpop.f32.mrf.mxu0
    %v310 = vadd.f32 %v185, %v309
    %311 = vmatprep.mubr.f32.mxu0 0.0
    %312 = vmatmul.mubr.f32.gmra.mxu0 %v215
    %v313 = vpop.f32.mrf.mxu0
    %v314 = vadd.f32 %v189, %v313
    %v315 = vpop.f32.mrf.mxu0
    %v316 = vadd.f32 %v191, %v315
    %317 = vmatprep.mubr.f32.mxu0 0.0
    %318 = vmatmul.mubr.f32.gmra.mxu0 %v218
    %v319 = vpop.f32.mrf.mxu0
    %v320 = vadd.f32 %v195, %v319
    %v321 = vpop.f32.mrf.mxu0
    %v322 = vadd.f32 %v197, %v321
    %323 = vmatprep.mubr.f32.mxu0 0.0
    %324 = vmatmul.mubr.f32.gmra.mxu0 %v221
    %v325 = vpop.f32.mrf.mxu0
    %v326 = vadd.f32 %v201, %v325
    %v327 = vpop.f32.mrf.mxu0
    %v328 = vadd.f32 %v203, %v327
    %329 = vdwg.mxu0
    %s330 = scalar_lea.vmem %s0, 112
    %v331 = vld [vmem:[%s330] sm:$0xff]
    %v332 = vld [vmem:[%s330 + $0x8] sm:$0xff]
    %v333 = vld [vmem:[%s330 + $0x10] sm:$0xff]
    %v334 = vld [vmem:[%s330 + $0x18] sm:$0xff]
    %v335 = vld [vmem:[%s330 + $0x20] sm:$0xff]
    %v336 = vld [vmem:[%s330 + $0x28] sm:$0xff]
    %s337 = scalar_lea.vmem [#allocation2], 128
    %v338 = vld [vmem:[%s337] sm:$0xff]
    %v339 = vld [vmem:[%s337 + $0x8] sm:$0xff]
    %v340 = vld [vmem:[%s337 + $0x10] sm:$0xff]
    %v341 = vld [vmem:[%s337 + $0x18] sm:$0xff]
    %v342 = vld [vmem:[%s337 + $0x20] sm:$0xff]
    %v343 = vld [vmem:[%s337 + $0x28] sm:$0xff]
    %v344 = vld [vmem:[%s337 + $0x30] sm:$0xf]
    %v345 = vld [vmem:[%s337 + $0x38] sm:$0xf]
    %v347 = vsel %vm78, %v331, 0
    %v350 = vsel %vm78, %v332, 0
    %v353 = vsel %vm78, %v333, 0
    %v356 = vsel %vm78, %v334, 0
    %v359 = vsel %vm78, %v335, 0
    %v362 = vsel %vm78, %v336, 0
    %v365 = vsel %vm97, %v344, 0
    %v368 = vsel %vm97, %v345, 0
    %370 = vmatprep.subr.mxu0 0.0
    %371 = vmatpush1.msra.mxu0 0.0
    %372 = vmatprep.subr.mxu0 0.0
    %373 = vmatpush1.msra.mxu0 0.0
    %374 = vmatprep.subr.mxu0 0.0
    %375 = vmatpush1.msra.mxu0 0.0
    %376 = vmatprep.subr.mxu0 0.0
    %377 = vmatpush1.msra.mxu0 0.0
    %378 = vmatprep.subr.mxu0 0.0
    %379 = vmatpush1.msra.mxu0 0.0
    %380 = vmatprep.subr.mxu0 0.0
    %381 = vmatpush1.msra.mxu0 0.0
    %382 = vmatprep.subr.mxu0 0.0
    %383 = vmatpush1.msra.mxu0 0.0
    %384 = vmatprep.subr.mxu0 0.0
    %385 = vmatpush1.msra.mxu0 0.0
    %386 = vmatprep.subr.mxu0 0.0
    %387 = vmatpush1.msra.mxu0 0.0
    %388 = vmatprep.subr.mxu0 0.0
    %389 = vmatpush1.msra.mxu0 0.0
    %390 = vmatprep.subr.mxu0 0.0
    %391 = vmatpush1.msra.mxu0 0.0
    %392 = vmatprep.subr.mxu0 0.0
    %393 = vmatpush1.msra.mxu0 0.0
    %394 = vmatprep.subr.mxu0 %v368
    %395 = vmatpush1.msra.mxu0 %v365
    %396 = vmatprep.subr.mxu0 %v343
    %397 = vmatpush1.msra.mxu0 %v342
    %398 = vmatprep.subr.mxu0 %v341
    %399 = vmatpush1.msra.mxu0 %v340
    %400 = vmatprep.subr.mxu0 %v339
    %401 = vmatpush1.msra.mxu0 %v338
    %402 = vmatprep.subr.mxu0 0.0
    %403 = vmatpush2.msra.mxu0 0.0
    %404 = vmatprep.subr.mxu0 0.0
    %405 = vmatpush2.msra.mxu0 0.0
    %406 = vmatprep.subr.mxu0 0.0
    %407 = vmatpush2.msra.mxu0 0.0
    %408 = vmatprep.subr.mxu0 0.0
    %409 = vmatpush2.msra.mxu0 0.0
    %410 = vmatprep.subr.mxu0 0.0
    %411 = vmatpush2.msra.mxu0 0.0
    %412 = vmatprep.subr.mxu0 0.0
    %413 = vmatpush2.msra.mxu0 0.0
    %414 = vmatprep.subr.mxu0 0.0
    %415 = vmatpush2.msra.mxu0 0.0
    %416 = vmatprep.subr.mxu0 0.0
    %417 = vmatpush2.msra.mxu0 0.0
    %418 = vmatprep.subr.mxu0 0.0
    %419 = vmatpush2.msra.mxu0 0.0
    %420 = vmatprep.subr.mxu0 0.0
    %421 = vmatpush2.msra.mxu0 0.0
    %422 = vmatprep.subr.mxu0 0.0
    %423 = vmatpush2.msra.mxu0 0.0
    %424 = vmatprep.subr.mxu0 0.0
    %425 = vmatpush2.msra.mxu0 0.0
    %426 = vmatprep.subr.mxu0 0.0
    %427 = vmatpush2.msra.mxu0 0.0
    %428 = vmatprep.subr.mxu0 0.0
    %429 = vmatpush2.msra.mxu0 0.0
    %430 = vmatprep.subr.mxu0 0.0
    %431 = vmatpush2.msra.mxu0 0.0
    %432 = vmatprep.subr.mxu0 0.0
    %433 = vmatpush2.msra.mxu0 0.0
    %434 = vmatprep.mubr.f32.mxu0 0.0
    %435 = vmatmul.mubr.f32.gmra.mxu0 %v347
    %v436 = vpop.f32.mrf.mxu0
    %v437 = vadd.f32 0.0, %v436
    %v438 = vpop.f32.mrf.mxu0
    %v439 = vadd.f32 0.0, %v438
    %440 = vmatprep.mubr.f32.mxu0 0.0
    %441 = vmatmul.mubr.f32.gmra.mxu0 %v350
    %v442 = vpop.f32.mrf.mxu0
    %v443 = vadd.f32 0.0, %v442
    %v444 = vpop.f32.mrf.mxu0
    %v445 = vadd.f32 0.0, %v444
    %446 = vmatprep.mubr.f32.mxu0 0.0
    %447 = vmatmul.mubr.f32.gmra.mxu0 %v353
    %v448 = vpop.f32.mrf.mxu0
    %v449 = vadd.f32 0.0, %v448
    %v450 = vpop.f32.mrf.mxu0
    %v451 = vadd.f32 0.0, %v450
    %452 = vmatprep.mubr.f32.mxu0 0.0
    %453 = vmatmul.mubr.f32.gmra.mxu0 %v356
    %v454 = vpop.f32.mrf.mxu0
    %v455 = vadd.f32 0.0, %v454
    %v456 = vpop.f32.mrf.mxu0
    %v457 = vadd.f32 0.0, %v456
    %458 = vmatprep.mubr.f32.mxu0 0.0
    %459 = vmatmul.mubr.f32.gmra.mxu0 %v359
    %v460 = vpop.f32.mrf.mxu0
    %v461 = vadd.f32 0.0, %v460
    %v462 = vpop.f32.mrf.mxu0
    %v463 = vadd.f32 0.0, %v462
    %464 = vmatprep.mubr.f32.mxu0 0.0
    %465 = vmatmul.mubr.f32.gmra.mxu0 %v362
    %v466 = vpop.f32.mrf.mxu0
    %v467 = vadd.f32 0.0, %v466
    %v468 = vpop.f32.mrf.mxu0
    %v469 = vadd.f32 0.0, %v468
    %470 = vdwg.mxu0
    %v471 = vadd.f32 %v296, %v437
    %v472 = vadd.f32 %v298, %v439
    %v473 = vadd.f32 %v302, %v443
    %v474 = vadd.f32 %v304, %v445
    %v475 = vadd.f32 %v308, %v449
    %v476 = vadd.f32 %v310, %v451
    %v477 = vadd.f32 %v314, %v455
    %v478 = vadd.f32 %v316, %v457
    %v479 = vadd.f32 %v320, %v461
    %v480 = vadd.f32 %v322, %v463
    %v481 = vadd.f32 %v326, %v467
    %v482 = vadd.f32 %v328, %v469
    %s483 = scalar_lea.vmem %s0, 168
    %v484 = vld [vmem:[%s483] sm:$0xff]
    %v485 = vld [vmem:[%s483 + $0x8] sm:$0xff]
    %v486 = vld [vmem:[%s483 + $0x10] sm:$0xff]
    %v487 = vld [vmem:[%s483 + $0x18] sm:$0xff]
    %v488 = vld [vmem:[%s483 + $0x20] sm:$0xff]
    %v489 = vld [vmem:[%s483 + $0x28] sm:$0xff]
    %s490 = scalar_lea.vmem [#allocation2], 192
    %v491 = vld [vmem:[%s490] sm:$0xff]
    %v492 = vld [vmem:[%s490 + $0x8] sm:$0xff]
    %v493 = vld [vmem:[%s490 + $0x10] sm:$0xff]
    %v494 = vld [vmem:[%s490 + $0x18] sm:$0xff]
    %v495 = vld [vmem:[%s490 + $0x20] sm:$0xff]
    %v496 = vld [vmem:[%s490 + $0x28] sm:$0xff]
    %v497 = vld [vmem:[%s490 + $0x30] sm:$0xf]
    %v498 = vld [vmem:[%s490 + $0x38] sm:$0xf]
    %v500 = vsel %vm78, %v484, 0
    %v503 = vsel %vm78, %v485, 0
    %v506 = vsel %vm78, %v486, 0
    %v509 = vsel %vm78, %v487, 0
    %v512 = vsel %vm78, %v488, 0
    %v515 = vsel %vm78, %v489, 0
    %v518 = vsel %vm97, %v497, 0
    %v521 = vsel %vm97, %v498, 0
    %523 = vmatprep.subr.mxu0 0.0
    %524 = vmatpush1.msra.mxu0 0.0
    %525 = vmatprep.subr.mxu0 0.0
    %526 = vmatpush1.msra.mxu0 0.0
    %527 = vmatprep.subr.mxu0 0.0
    %528 = vmatpush1.msra.mxu0 0.0
    %529 = vmatprep.subr.mxu0 0.0
    %530 = vmatpush1.msra.mxu0 0.0
    %531 = vmatprep.subr.mxu0 0.0
    %532 = vmatpush1.msra.mxu0 0.0
    %533 = vmatprep.subr.mxu0 0.0
    %534 = vmatpush1.msra.mxu0 0.0
    %535 = vmatprep.subr.mxu0 0.0
    %536 = vmatpush1.msra.mxu0 0.0
    %537 = vmatprep.subr.mxu0 0.0
    %538 = vmatpush1.msra.mxu0 0.0
    %539 = vmatprep.subr.mxu0 0.0
    %540 = vmatpush1.msra.mxu0 0.0
    %541 = vmatprep.subr.mxu0 0.0
    %542 = vmatpush1.msra.mxu0 0.0
    %543 = vmatprep.subr.mxu0 0.0
    %544 = vmatpush1.msra.mxu0 0.0
    %545 = vmatprep.subr.mxu0 0.0
    %546 = vmatpush1.msra.mxu0 0.0
    %547 = vmatprep.subr.mxu0 %v521
    %548 = vmatpush1.msra.mxu0 %v518
    %549 = vmatprep.subr.mxu0 %v496
    %550 = vmatpush1.msra.mxu0 %v495
    %551 = vmatprep.subr.mxu0 %v494
    %552 = vmatpush1.msra.mxu0 %v493
    %553 = vmatprep.subr.mxu0 %v492
    %554 = vmatpush1.msra.mxu0 %v491
    %555 = vmatprep.subr.mxu0 0.0
    %556 = vmatpush2.msra.mxu0 0.0
    %557 = vmatprep.subr.mxu0 0.0
    %558 = vmatpush2.msra.mxu0 0.0
    %559 = vmatprep.subr.mxu0 0.0
    %560 = vmatpush2.msra.mxu0 0.0
    %561 = vmatprep.subr.mxu0 0.0
    %562 = vmatpush2.msra.mxu0 0.0
    %563 = vmatprep.subr.mxu0 0.0
    %564 = vmatpush2.msra.mxu0 0.0
    %565 = vmatprep.subr.mxu0 0.0
    %566 = vmatpush2.msra.mxu0 0.0
    %567 = vmatprep.subr.mxu0 0.0
    %568 = vmatpush2.msra.mxu0 0.0
    %569 = vmatprep.subr.mxu0 0.0
    %570 = vmatpush2.msra.mxu0 0.0
    %571 = vmatprep.subr.mxu0 0.0
    %572 = vmatpush2.msra.mxu0 0.0
    %573 = vmatprep.subr.mxu0 0.0
    %574 = vmatpush2.msra.mxu0 0.0
    %575 = vmatprep.subr.mxu0 0.0
    %576 = vmatpush2.msra.mxu0 0.0
    %577 = vmatprep.subr.mxu0 0.0
    %578 = vmatpush2.msra.mxu0 0.0
    %579 = vmatprep.subr.mxu0 0.0
    %580 = vmatpush2.msra.mxu0 0.0
    %581 = vmatprep.subr.mxu0 0.0
    %582 = vmatpush2.msra.mxu0 0.0
    %583 = vmatprep.subr.mxu0 0.0
    %584 = vmatpush2.msra.mxu0 0.0
    %585 = vmatprep.subr.mxu0 0.0
    %586 = vmatpush2.msra.mxu0 0.0
    %587 = vmatprep.mubr.f32.mxu0 0.0
    %588 = vmatmul.mubr.f32.gmra.mxu0 %v500
    %v589 = vpop.f32.mrf.mxu0
    %v590 = vadd.f32 0.0, %v589
    %v591 = vpop.f32.mrf.mxu0
    %v592 = vadd.f32 0.0, %v591
    %593 = vmatprep.mubr.f32.mxu0 0.0
    %594 = vmatmul.mubr.f32.gmra.mxu0 %v503
    %v595 = vpop.f32.mrf.mxu0
    %v596 = vadd.f32 0.0, %v595
    %v597 = vpop.f32.mrf.mxu0
    %v598 = vadd.f32 0.0, %v597
    %599 = vmatprep.mubr.f32.mxu0 0.0
    %600 = vmatmul.mubr.f32.gmra.mxu0 %v506
    %v601 = vpop.f32.mrf.mxu0
    %v602 = vadd.f32 0.0, %v601
    %v603 = vpop.f32.mrf.mxu0
    %v604 = vadd.f32 0.0, %v603
    %605 = vmatprep.mubr.f32.mxu0 0.0
    %606 = vmatmul.mubr.f32.gmra.mxu0 %v509
    %v607 = vpop.f32.mrf.mxu0
    %v608 = vadd.f32 0.0, %v607
    %v609 = vpop.f32.mrf.mxu0
    %v610 = vadd.f32 0.0, %v609
    %611 = vmatprep.mubr.f32.mxu0 0.0
    %612 = vmatmul.mubr.f32.gmra.mxu0 %v512
    %v613 = vpop.f32.mrf.mxu0
    %v614 = vadd.f32 0.0, %v613
    %v615 = vpop.f32.mrf.mxu0
    %v616 = vadd.f32 0.0, %v615
    %617 = vmatprep.mubr.f32.mxu0 0.0
    %618 = vmatmul.mubr.f32.gmra.mxu0 %v515
    %v619 = vpop.f32.mrf.mxu0
    %v620 = vadd.f32 0.0, %v619
    %v621 = vpop.f32.mrf.mxu0
    %v622 = vadd.f32 0.0, %v621
    %623 = vdwg.mxu0
    %v624 = vadd.f32 %v471, %v590
    %v625 = vadd.f32 %v472, %v592
    %v626 = vadd.f32 %v473, %v596
    %v627 = vadd.f32 %v474, %v598
    %v628 = vadd.f32 %v475, %v602
    %v629 = vadd.f32 %v476, %v604
    %v630 = vadd.f32 %v477, %v608
    %v631 = vadd.f32 %v478, %v610
    %v632 = vadd.f32 %v479, %v614
    %v633 = vadd.f32 %v480, %v616
    %v634 = vadd.f32 %v481, %v620
    %v635 = vadd.f32 %v482, %v622
    %s636 = scalar_lea.vmem %s0, 8
    %v637 = vld [vmem:[%s636] sm:$0xff]
    %v638 = vld [vmem:[%s636 + $0x8] sm:$0xff]
    %v639 = vld [vmem:[%s636 + $0x10] sm:$0xff]
    %v640 = vld [vmem:[%s636 + $0x18] sm:$0xff]
    %v641 = vld [vmem:[%s636 + $0x20] sm:$0xff]
    %v642 = vld [vmem:[%s636 + $0x28] sm:$0xff]
    %s643 = scalar_lea.vmem [#allocation2], 256
    %v644 = vld [vmem:[%s643] sm:$0xff]
    %v645 = vld [vmem:[%s643 + $0x8] sm:$0xff]
    %v646 = vld [vmem:[%s643 + $0x10] sm:$0xff]
    %v647 = vld [vmem:[%s643 + $0x18] sm:$0xff]
    %v648 = vld [vmem:[%s643 + $0x20] sm:$0xff]
    %v649 = vld [vmem:[%s643 + $0x28] sm:$0xff]
    %v650 = vld [vmem:[%s643 + $0x30] sm:$0xf]
    %v651 = vld [vmem:[%s643 + $0x38] sm:$0xf]
    %v653 = vsel %vm78, %v637, 0
    %v656 = vsel %vm78, %v638, 0
    %v659 = vsel %vm78, %v639, 0
    %v662 = vsel %vm78, %v640, 0
    %v665 = vsel %vm78, %v641, 0
    %v668 = vsel %vm78, %v642, 0
    %v671 = vsel %vm97, %v650, 0
    %v674 = vsel %vm97, %v651, 0
    %676 = vmatprep.subr.mxu0 0.0
    %677 = vmatpush1.msra.mxu0 0.0
    %678 = vmatprep.subr.mxu0 0.0
    %679 = vmatpush1.msra.mxu0 0.0
    %680 = vmatprep.subr.mxu0 0.0
    %681 = vmatpush1.msra.mxu0 0.0
    %682 = vmatprep.subr.mxu0 0.0
    %683 = vmatpush1.msra.mxu0 0.0
    %684 = vmatprep.subr.mxu0 0.0
    %685 = vmatpush1.msra.mxu0 0.0
    %686 = vmatprep.subr.mxu0 0.0
    %687 = vmatpush1.msra.mxu0 0.0
    %688 = vmatprep.subr.mxu0 0.0
    %689 = vmatpush1.msra.mxu0 0.0
    %690 = vmatprep.subr.mxu0 0.0
    %691 = vmatpush1.msra.mxu0 0.0
    %692 = vmatprep.subr.mxu0 0.0
    %693 = vmatpush1.msra.mxu0 0.0
    %694 = vmatprep.subr.mxu0 0.0
    %695 = vmatpush1.msra.mxu0 0.0
    %696 = vmatprep.subr.mxu0 0.0
    %697 = vmatpush1.msra.mxu0 0.0
    %698 = vmatprep.subr.mxu0 0.0
    %699 = vmatpush1.msra.mxu0 0.0
    %700 = vmatprep.subr.mxu0 %v674
    %701 = vmatpush1.msra.mxu0 %v671
    %702 = vmatprep.subr.mxu0 %v649
    %703 = vmatpush1.msra.mxu0 %v648
    %704 = vmatprep.subr.mxu0 %v647
    %705 = vmatpush1.msra.mxu0 %v646
    %706 = vmatprep.subr.mxu0 %v645
    %707 = vmatpush1.msra.mxu0 %v644
    %708 = vmatprep.subr.mxu0 0.0
    %709 = vmatpush2.msra.mxu0 0.0
    %710 = vmatprep.subr.mxu0 0.0
    %711 = vmatpush2.msra.mxu0 0.0
    %712 = vmatprep.subr.mxu0 0.0
    %713 = vmatpush2.msra.mxu0 0.0
    %714 = vmatprep.subr.mxu0 0.0
    %715 = vmatpush2.msra.mxu0 0.0
    %716 = vmatprep.subr.mxu0 0.0
    %717 = vmatpush2.msra.mxu0 0.0
    %718 = vmatprep.subr.mxu0 0.0
    %719 = vmatpush2.msra.mxu0 0.0
    %720 = vmatprep.subr.mxu0 0.0
    %721 = vmatpush2.msra.mxu0 0.0
    %722 = vmatprep.subr.mxu0 0.0
    %723 = vmatpush2.msra.mxu0 0.0
    %724 = vmatprep.subr.mxu0 0.0
    %725 = vmatpush2.msra.mxu0 0.0
    %726 = vmatprep.subr.mxu0 0.0
    %727 = vmatpush2.msra.mxu0 0.0
    %728 = vmatprep.subr.mxu0 0.0
    %729 = vmatpush2.msra.mxu0 0.0
    %730 = vmatprep.subr.mxu0 0.0
    %731 = vmatpush2.msra.mxu0 0.0
    %732 = vmatprep.subr.mxu0 0.0
    %733 = vmatpush2.msra.mxu0 0.0
    %734 = vmatprep.subr.mxu0 0.0
    %735 = vmatpush2.msra.mxu0 0.0
    %736 = vmatprep.subr.mxu0 0.0
    %737 = vmatpush2.msra.mxu0 0.0
    %738 = vmatprep.subr.mxu0 0.0
    %739 = vmatpush2.msra.mxu0 0.0
    %740 = vmatprep.mubr.f32.mxu0 0.0
    %741 = vmatmul.mubr.f32.gmra.mxu0 %v653
    %v742 = vpop.f32.mrf.mxu0
    %v743 = vadd.f32 0.0, %v742
    %v744 = vpop.f32.mrf.mxu0
    %v745 = vadd.f32 0.0, %v744
    %746 = vmatprep.mubr.f32.mxu0 0.0
    %747 = vmatmul.mubr.f32.gmra.mxu0 %v656
    %v748 = vpop.f32.mrf.mxu0
    %v749 = vadd.f32 0.0, %v748
    %v750 = vpop.f32.mrf.mxu0
    %v751 = vadd.f32 0.0, %v750
    %752 = vmatprep.mubr.f32.mxu0 0.0
    %753 = vmatmul.mubr.f32.gmra.mxu0 %v659
    %v754 = vpop.f32.mrf.mxu0
    %v755 = vadd.f32 0.0, %v754
    %v756 = vpop.f32.mrf.mxu0
    %v757 = vadd.f32 0.0, %v756
    %758 = vmatprep.mubr.f32.mxu0 0.0
    %759 = vmatmul.mubr.f32.gmra.mxu0 %v662
    %v760 = vpop.f32.mrf.mxu0
    %v761 = vadd.f32 0.0, %v760
    %v762 = vpop.f32.mrf.mxu0
    %v763 = vadd.f32 0.0, %v762
    %764 = vmatprep.mubr.f32.mxu0 0.0
    %765 = vmatmul.mubr.f32.gmra.mxu0 %v665
    %v766 = vpop.f32.mrf.mxu0
    %v767 = vadd.f32 0.0, %v766
    %v768 = vpop.f32.mrf.mxu0
    %v769 = vadd.f32 0.0, %v768
    %770 = vmatprep.mubr.f32.mxu0 0.0
    %771 = vmatmul.mubr.f32.gmra.mxu0 %v668
    %v772 = vpop.f32.mrf.mxu0
    %v773 = vadd.f32 0.0, %v772
    %v774 = vpop.f32.mrf.mxu0
    %v775 = vadd.f32 0.0, %v774
    %776 = vdwg.mxu0
    %v777 = vadd.f32 %v624, %v743
    %v778 = vadd.f32 %v625, %v745
    %v779 = vadd.f32 %v626, %v749
    %v780 = vadd.f32 %v627, %v751
    %v781 = vadd.f32 %v628, %v755
    %v782 = vadd.f32 %v629, %v757
    %v783 = vadd.f32 %v630, %v761
    %v784 = vadd.f32 %v631, %v763
    %v785 = vadd.f32 %v632, %v767
    %v786 = vadd.f32 %v633, %v769
    %v787 = vadd.f32 %v634, %v773
    %v788 = vadd.f32 %v635, %v775
    %v789 = vmax.f32 %v777, %v778
    %v790 = vmax.f32 %v779, %v780
    %v791 = vmax.f32 %v781, %v782
    %v792 = vmax.f32 %v783, %v784
    %v793 = vmax.f32 %v785, %v786
    %v794 = vmax.f32 %v787, %v788
    %795 = vmatprep.subr.mxu0 0.0
    %796 = vmatpush1.msra.mxu0 0.0
    %797 = vmatprep.subr.mxu0 0.0
    %798 = vmatpush1.msra.mxu0 0.0
    %799 = vmatprep.subr.mxu0 0.0
    %800 = vmatpush1.msra.mxu0 0.0
    %801 = vmatprep.subr.mxu0 0.0
    %802 = vmatpush1.msra.mxu0 0.0
    %803 = vmatprep.subr.mxu0 0.0
    %804 = vmatpush1.msra.mxu0 0.0
    %805 = vmatprep.subr.mxu0 0.0
    %806 = vmatpush1.msra.mxu0 0.0
    %807 = vmatprep.subr.mxu0 0.0
    %808 = vmatpush1.msra.mxu0 0.0
    %809 = vmatprep.subr.mxu0 0.0
    %810 = vmatpush1.msra.mxu0 0.0
    %811 = vmatprep.subr.mxu0 0.0
    %812 = vmatpush1.msra.mxu0 0.0
    %813 = vmatprep.subr.mxu0 0.0
    %814 = vmatpush1.msra.mxu0 0.0
    %815 = vmatprep.subr.mxu0 0.0
    %816 = vmatpush1.msra.mxu0 0.0
    %817 = vmatprep.subr.mxu0 0.0
    %818 = vmatpush1.msra.mxu0 0.0
    %819 = vmatprep.subr.mxu0 %v102
    %820 = vmatpush1.msra.mxu0 %v99
    %821 = vmatprep.subr.mxu0 %v75
    %822 = vmatpush1.msra.mxu0 %v74
    %823 = vmatprep.subr.mxu0 %v73
    %824 = vmatpush1.msra.mxu0 %v72
    %825 = vmatprep.subr.mxu0 %v71
    %826 = vmatpush1.msra.mxu0 %v70
    %827 = vmatprep.subr.mxu0 0.0
    %828 = vmatpush2.msra.mxu0 0.0
    %829 = vmatprep.subr.mxu0 0.0
    %830 = vmatpush2.msra.mxu0 0.0
    %831 = vmatprep.subr.mxu0 0.0
    %832 = vmatpush2.msra.mxu0 0.0
    %833 = vmatprep.subr.mxu0 0.0
    %834 = vmatpush2.msra.mxu0 0.0
    %835 = vmatprep.subr.mxu0 0.0
    %836 = vmatpush2.msra.mxu0 0.0
    %837 = vmatprep.subr.mxu0 0.0
    %838 = vmatpush2.msra.mxu0 0.0
    %839 = vmatprep.subr.mxu0 0.0
    %840 = vmatpush2.msra.mxu0 0.0
    %841 = vmatprep.subr.mxu0 0.0
    %842 = vmatpush2.msra.mxu0 0.0
    %843 = vmatprep.subr.mxu0 0.0
    %844 = vmatpush2.msra.mxu0 0.0
    %845 = vmatprep.subr.mxu0 0.0
    %846 = vmatpush2.msra.mxu0 0.0
    %847 = vmatprep.subr.mxu0 0.0
    %848 = vmatpush2.msra.mxu0 0.0
    %849 = vmatprep.subr.mxu0 0.0
    %850 = vmatpush2.msra.mxu0 0.0
    %851 = vmatprep.subr.mxu0 0.0
    %852 = vmatpush2.msra.mxu0 0.0
    %853 = vmatprep.subr.mxu0 0.0
    %854 = vmatpush2.msra.mxu0 0.0
    %855 = vmatprep.subr.mxu0 0.0
    %856 = vmatpush2.msra.mxu0 0.0
    %857 = vmatprep.subr.mxu0 0.0
    %858 = vmatpush2.msra.mxu0 0.0
    %859 = vmatprep.mubr.f32.mxu0 0.0
    %860 = vmatmul.mubr.f32.gmra.mxu0 %v347
    %v861 = vpop.f32.mrf.mxu0
    %v862 = vadd.f32 0.0, %v861
    %v863 = vpop.f32.mrf.mxu0
    %v864 = vadd.f32 0.0, %v863
    %865 = vmatprep.mubr.f32.mxu0 0.0
    %866 = vmatmul.mubr.f32.gmra.mxu0 %v350
    %v867 = vpop.f32.mrf.mxu0
    %v868 = vadd.f32 0.0, %v867
    %v869 = vpop.f32.mrf.mxu0
    %v870 = vadd.f32 0.0, %v869
    %871 = vmatprep.mubr.f32.mxu0 0.0
    %872 = vmatmul.mubr.f32.gmra.mxu0 %v353
    %v873 = vpop.f32.mrf.mxu0
    %v874 = vadd.f32 0.0, %v873
    %v875 = vpop.f32.mrf.mxu0
    %v876 = vadd.f32 0.0, %v875
    %877 = vmatprep.mubr.f32.mxu0 0.0
    %878 = vmatmul.mubr.f32.gmra.mxu0 %v356
    %v879 = vpop.f32.mrf.mxu0
    %v880 = vadd.f32 0.0, %v879
    %v881 = vpop.f32.mrf.mxu0
    %v882 = vadd.f32 0.0, %v881
    %883 = vmatprep.mubr.f32.mxu0 0.0
    %884 = vmatmul.mubr.f32.gmra.mxu0 %v359
    %v885 = vpop.f32.mrf.mxu0
    %v886 = vadd.f32 0.0, %v885
    %v887 = vpop.f32.mrf.mxu0
    %v888 = vadd.f32 0.0, %v887
    %889 = vmatprep.mubr.f32.mxu0 0.0
    %890 = vmatmul.mubr.f32.gmra.mxu0 %v362
    %v891 = vpop.f32.mrf.mxu0
    %v892 = vadd.f32 0.0, %v891
    %v893 = vpop.f32.mrf.mxu0
    %v894 = vadd.f32 0.0, %v893
    %895 = vdwg.mxu0
    %896 = vmatprep.subr.mxu0 0.0
    %897 = vmatpush1.msra.mxu0 0.0
    %898 = vmatprep.subr.mxu0 0.0
    %899 = vmatpush1.msra.mxu0 0.0
    %900 = vmatprep.subr.mxu0 0.0
    %901 = vmatpush1.msra.mxu0 0.0
    %902 = vmatprep.subr.mxu0 0.0
    %903 = vmatpush1.msra.mxu0 0.0
    %904 = vmatprep.subr.mxu0 0.0
    %905 = vmatpush1.msra.mxu0 0.0
    %906 = vmatprep.subr.mxu0 0.0
    %907 = vmatpush1.msra.mxu0 0.0
    %908 = vmatprep.subr.mxu0 0.0
    %909 = vmatpush1.msra.mxu0 0.0
    %910 = vmatprep.subr.mxu0 0.0
    %911 = vmatpush1.msra.mxu0 0.0
    %912 = vmatprep.subr.mxu0 0.0
    %913 = vmatpush1.msra.mxu0 0.0
    %914 = vmatprep.subr.mxu0 0.0
    %915 = vmatpush1.msra.mxu0 0.0
    %916 = vmatprep.subr.mxu0 0.0
    %917 = vmatpush1.msra.mxu0 0.0
    %918 = vmatprep.subr.mxu0 0.0
    %919 = vmatpush1.msra.mxu0 0.0
    %920 = vmatprep.subr.mxu0 %v227
    %921 = vmatpush1.msra.mxu0 %v224
    %922 = vmatprep.subr.mxu0 %v59
    %923 = vmatpush1.msra.mxu0 %v58
    %924 = vmatprep.subr.mxu0 %v57
    %925 = vmatpush1.msra.mxu0 %v56
    %926 = vmatprep.subr.mxu0 %v55
    %927 = vmatpush1.msra.mxu0 %v54
    %928 = vmatprep.subr.mxu0 0.0
    %929 = vmatpush2.msra.mxu0 0.0
    %930 = vmatprep.subr.mxu0 0.0
    %931 = vmatpush2.msra.mxu0 0.0
    %932 = vmatprep.subr.mxu0 0.0
    %933 = vmatpush2.msra.mxu0 0.0
    %934 = vmatprep.subr.mxu0 0.0
    %935 = vmatpush2.msra.mxu0 0.0
    %936 = vmatprep.subr.mxu0 0.0
    %937 = vmatpush2.msra.mxu0 0.0
    %938 = vmatprep.subr.mxu0 0.0
    %939 = vmatpush2.msra.mxu0 0.0
    %940 = vmatprep.subr.mxu0 0.0
    %941 = vmatpush2.msra.mxu0 0.0
    %942 = vmatprep.subr.mxu0 0.0
    %943 = vmatpush2.msra.mxu0 0.0
    %944 = vmatprep.subr.mxu0 0.0
    %945 = vmatpush2.msra.mxu0 0.0
    %946 = vmatprep.subr.mxu0 0.0
    %947 = vmatpush2.msra.mxu0 0.0
    %948 = vmatprep.subr.mxu0 0.0
    %949 = vmatpush2.msra.mxu0 0.0
    %950 = vmatprep.subr.mxu0 0.0
    %951 = vmatpush2.msra.mxu0 0.0
    %952 = vmatprep.subr.mxu0 0.0
    %953 = vmatpush2.msra.mxu0 0.0
    %954 = vmatprep.subr.mxu0 0.0
    %955 = vmatpush2.msra.mxu0 0.0
    %956 = vmatprep.subr.mxu0 0.0
    %957 = vmatpush2.msra.mxu0 0.0
    %958 = vmatprep.subr.mxu0 0.0
    %959 = vmatpush2.msra.mxu0 0.0
    %960 = vmatprep.mubr.f32.mxu0 0.0
    %961 = vmatmul.mubr.f32.gmra.mxu0 %v80
    %v962 = vpop.f32.mrf.mxu0
    %v963 = vadd.f32 %v862, %v962
    %v964 = vpop.f32.mrf.mxu0
    %v965 = vadd.f32 %v864, %v964
    %966 = vmatprep.mubr.f32.mxu0 0.0
    %967 = vmatmul.mubr.f32.gmra.mxu0 %v83
    %v968 = vpop.f32.mrf.mxu0
    %v969 = vadd.f32 %v868, %v968
    %v970 = vpop.f32.mrf.mxu0
    %v971 = vadd.f32 %v870, %v970
    %972 = vmatprep.mubr.f32.mxu0 0.0
    %973 = vmatmul.mubr.f32.gmra.mxu0 %v86
    %v974 = vpop.f32.mrf.mxu0
    %v975 = vadd.f32 %v874, %v974
    %v976 = vpop.f32.mrf.mxu0
    %v977 = vadd.f32 %v876, %v976
    %978 = vmatprep.mubr.f32.mxu0 0.0
    %979 = vmatmul.mubr.f32.gmra.mxu0 %v89
    %v980 = vpop.f32.mrf.mxu0
    %v981 = vadd.f32 %v880, %v980
    %v982 = vpop.f32.mrf.mxu0
    %v983 = vadd.f32 %v882, %v982
    %984 = vmatprep.mubr.f32.mxu0 0.0
    %985 = vmatmul.mubr.f32.gmra.mxu0 %v92
    %v986 = vpop.f32.mrf.mxu0
    %v987 = vadd.f32 %v886, %v986
    %v988 = vpop.f32.mrf.mxu0
    %v989 = vadd.f32 %v888, %v988
    %990 = vmatprep.mubr.f32.mxu0 0.0
    %991 = vmatmul.mubr.f32.gmra.mxu0 %v95
    %v992 = vpop.f32.mrf.mxu0
    %v993 = vadd.f32 %v892, %v992
    %v994 = vpop.f32.mrf.mxu0
    %v995 = vadd.f32 %v894, %v994
    %996 = vdwg.mxu0
    %997 = vmatprep.subr.mxu0 0.0
    %998 = vmatpush1.msra.mxu0 0.0
    %999 = vmatprep.subr.mxu0 0.0
    %1000 = vmatpush1.msra.mxu0 0.0
    %1001 = vmatprep.subr.mxu0 0.0
    %1002 = vmatpush1.msra.mxu0 0.0
    %1003 = vmatprep.subr.mxu0 0.0
    %1004 = vmatpush1.msra.mxu0 0.0
    %1005 = vmatprep.subr.mxu0 0.0
    %1006 = vmatpush1.msra.mxu0 0.0
    %1007 = vmatprep.subr.mxu0 0.0
    %1008 = vmatpush1.msra.mxu0 0.0
    %1009 = vmatprep.subr.mxu0 0.0
    %1010 = vmatpush1.msra.mxu0 0.0
    %1011 = vmatprep.subr.mxu0 0.0
    %1012 = vmatpush1.msra.mxu0 0.0
    %1013 = vmatprep.subr.mxu0 0.0
    %1014 = vmatpush1.msra.mxu0 0.0
    %1015 = vmatprep.subr.mxu0 0.0
    %1016 = vmatpush1.msra.mxu0 0.0
    %1017 = vmatprep.subr.mxu0 0.0
    %1018 = vmatpush1.msra.mxu0 0.0
    %1019 = vmatprep.subr.mxu0 0.0
    %1020 = vmatpush1.msra.mxu0 0.0
    %1021 = vmatprep.subr.mxu0 %v368
    %1022 = vmatpush1.msra.mxu0 %v365
    %1023 = vmatprep.subr.mxu0 %v343
    %1024 = vmatpush1.msra.mxu0 %v342
    %1025 = vmatprep.subr.mxu0 %v341
    %1026 = vmatpush1.msra.mxu0 %v340
    %1027 = vmatprep.subr.mxu0 %v339
    %1028 = vmatpush1.msra.mxu0 %v338
    %1029 = vmatprep.subr.mxu0 0.0
    %1030 = vmatpush2.msra.mxu0 0.0
    %1031 = vmatprep.subr.mxu0 0.0
    %1032 = vmatpush2.msra.mxu0 0.0
    %1033 = vmatprep.subr.mxu0 0.0
    %1034 = vmatpush2.msra.mxu0 0.0
    %1035 = vmatprep.subr.mxu0 0.0
    %1036 = vmatpush2.msra.mxu0 0.0
    %1037 = vmatprep.subr.mxu0 0.0
    %1038 = vmatpush2.msra.mxu0 0.0
    %1039 = vmatprep.subr.mxu0 0.0
    %1040 = vmatpush2.msra.mxu0 0.0
    %1041 = vmatprep.subr.mxu0 0.0
    %1042 = vmatpush2.msra.mxu0 0.0
    %1043 = vmatprep.subr.mxu0 0.0
    %1044 = vmatpush2.msra.mxu0 0.0
    %1045 = vmatprep.subr.mxu0 0.0
    %1046 = vmatpush2.msra.mxu0 0.0
    %1047 = vmatprep.subr.mxu0 0.0
    %1048 = vmatpush2.msra.mxu0 0.0
    %1049 = vmatprep.subr.mxu0 0.0
    %1050 = vmatpush2.msra.mxu0 0.0
    %1051 = vmatprep.subr.mxu0 0.0
    %1052 = vmatpush2.msra.mxu0 0.0
    %1053 = vmatprep.subr.mxu0 0.0
    %1054 = vmatpush2.msra.mxu0 0.0
    %1055 = vmatprep.subr.mxu0 0.0
    %1056 = vmatpush2.msra.mxu0 0.0
    %1057 = vmatprep.subr.mxu0 0.0
    %1058 = vmatpush2.msra.mxu0 0.0
    %1059 = vmatprep.subr.mxu0 0.0
    %1060 = vmatpush2.msra.mxu0 0.0
    %1061 = vmatprep.mubr.f32.mxu0 0.0
    %1062 = vmatmul.mubr.f32.gmra.mxu0 %v500
    %v1063 = vpop.f32.mrf.mxu0
    %v1064 = vadd.f32 0.0, %v1063
    %v1065 = vpop.f32.mrf.mxu0
    %v1066 = vadd.f32 0.0, %v1065
    %1067 = vmatprep.mubr.f32.mxu0 0.0
    %1068 = vmatmul.mubr.f32.gmra.mxu0 %v503
    %v1069 = vpop.f32.mrf.mxu0
    %v1070 = vadd.f32 0.0, %v1069
    %v1071 = vpop.f32.mrf.mxu0
    %v1072 = vadd.f32 0.0, %v1071
    %1073 = vmatprep.mubr.f32.mxu0 0.0
    %1074 = vmatmul.mubr.f32.gmra.mxu0 %v506
    %v1075 = vpop.f32.mrf.mxu0
    %v1076 = vadd.f32 0.0, %v1075
    %v1077 = vpop.f32.mrf.mxu0
    %v1078 = vadd.f32 0.0, %v1077
    %1079 = vmatprep.mubr.f32.mxu0 0.0
    %1080 = vmatmul.mubr.f32.gmra.mxu0 %v509
    %v1081 = vpop.f32.mrf.mxu0
    %v1082 = vadd.f32 0.0, %v1081
    %v1083 = vpop.f32.mrf.mxu0
    %v1084 = vadd.f32 0.0, %v1083
    %1085 = vmatprep.mubr.f32.mxu0 0.0
    %1086 = vmatmul.mubr.f32.gmra.mxu0 %v512
    %v1087 = vpop.f32.mrf.mxu0
    %v1088 = vadd.f32 0.0, %v1087
    %v1089 = vpop.f32.mrf.mxu0
    %v1090 = vadd.f32 0.0, %v1089
    %1091 = vmatprep.mubr.f32.mxu0 0.0
    %1092 = vmatmul.mubr.f32.gmra.mxu0 %v515
    %v1093 = vpop.f32.mrf.mxu0
    %v1094 = vadd.f32 0.0, %v1093
    %v1095 = vpop.f32.mrf.mxu0
    %v1096 = vadd.f32 0.0, %v1095
    %1097 = vdwg.mxu0
    %v1098 = vadd.f32 %v963, %v1064
    %v1099 = vadd.f32 %v965, %v1066
    %v1100 = vadd.f32 %v969, %v1070
    %v1101 = vadd.f32 %v971, %v1072
    %v1102 = vadd.f32 %v975, %v1076
    %v1103 = vadd.f32 %v977, %v1078
    %v1104 = vadd.f32 %v981, %v1082
    %v1105 = vadd.f32 %v983, %v1084
    %v1106 = vadd.f32 %v987, %v1088
    %v1107 = vadd.f32 %v989, %v1090
    %v1108 = vadd.f32 %v993, %v1094
    %v1109 = vadd.f32 %v995, %v1096
    %1110 = vmatprep.subr.mxu0 0.0
    %1111 = vmatpush1.msra.mxu0 0.0
    %1112 = vmatprep.subr.mxu0 0.0
    %1113 = vmatpush1.msra.mxu0 0.0
    %1114 = vmatprep.subr.mxu0 0.0
    %1115 = vmatpush1.msra.mxu0 0.0
    %1116 = vmatprep.subr.mxu0 0.0
    %1117 = vmatpush1.msra.mxu0 0.0
    %1118 = vmatprep.subr.mxu0 0.0
    %1119 = vmatpush1.msra.mxu0 0.0
    %1120 = vmatprep.subr.mxu0 0.0
    %1121 = vmatpush1.msra.mxu0 0.0
    %1122 = vmatprep.subr.mxu0 0.0
    %1123 = vmatpush1.msra.mxu0 0.0
    %1124 = vmatprep.subr.mxu0 0.0
    %1125 = vmatpush1.msra.mxu0 0.0
    %1126 = vmatprep.subr.mxu0 0.0
    %1127 = vmatpush1.msra.mxu0 0.0
    %1128 = vmatprep.subr.mxu0 0.0
    %1129 = vmatpush1.msra.mxu0 0.0
    %1130 = vmatprep.subr.mxu0 0.0
    %1131 = vmatpush1.msra.mxu0 0.0
    %1132 = vmatprep.subr.mxu0 0.0
    %1133 = vmatpush1.msra.mxu0 0.0
    %1134 = vmatprep.subr.mxu0 %v521
    %1135 = vmatpush1.msra.mxu0 %v518
    %1136 = vmatprep.subr.mxu0 %v496
    %1137 = vmatpush1.msra.mxu0 %v495
    %1138 = vmatprep.subr.mxu0 %v494
    %1139 = vmatpush1.msra.mxu0 %v493
    %1140 = vmatprep.subr.mxu0 %v492
    %1141 = vmatpush1.msra.mxu0 %v491
    %1142 = vmatprep.subr.mxu0 0.0
    %1143 = vmatpush2.msra.mxu0 0.0
    %1144 = vmatprep.subr.mxu0 0.0
    %1145 = vmatpush2.msra.mxu0 0.0
    %1146 = vmatprep.subr.mxu0 0.0
    %1147 = vmatpush2.msra.mxu0 0.0
    %1148 = vmatprep.subr.mxu0 0.0
    %1149 = vmatpush2.msra.mxu0 0.0
    %1150 = vmatprep.subr.mxu0 0.0
    %1151 = vmatpush2.msra.mxu0 0.0
    %1152 = vmatprep.subr.mxu0 0.0
    %1153 = vmatpush2.msra.mxu0 0.0
    %1154 = vmatprep.subr.mxu0 0.0
    %1155 = vmatpush2.msra.mxu0 0.0
    %1156 = vmatprep.subr.mxu0 0.0
    %1157 = vmatpush2.msra.mxu0 0.0
    %1158 = vmatprep.subr.mxu0 0.0
    %1159 = vmatpush2.msra.mxu0 0.0
    %1160 = vmatprep.subr.mxu0 0.0
    %1161 = vmatpush2.msra.mxu0 0.0
    %1162 = vmatprep.subr.mxu0 0.0
    %1163 = vmatpush2.msra.mxu0 0.0
    %1164 = vmatprep.subr.mxu0 0.0
    %1165 = vmatpush2.msra.mxu0 0.0
    %1166 = vmatprep.subr.mxu0 0.0
    %1167 = vmatpush2.msra.mxu0 0.0
    %1168 = vmatprep.subr.mxu0 0.0
    %1169 = vmatpush2.msra.mxu0 0.0
    %1170 = vmatprep.subr.mxu0 0.0
    %1171 = vmatpush2.msra.mxu0 0.0
    %1172 = vmatprep.subr.mxu0 0.0
    %1173 = vmatpush2.msra.mxu0 0.0
    %1174 = vmatprep.mubr.f32.mxu0 0.0
    %1175 = vmatmul.mubr.f32.gmra.mxu0 %v653
    %v1176 = vpop.f32.mrf.mxu0
    %v1177 = vadd.f32 0.0, %v1176
    %v1178 = vpop.f32.mrf.mxu0
    %v1179 = vadd.f32 0.0, %v1178
    %1180 = vmatprep.mubr.f32.mxu0 0.0
    %1181 = vmatmul.mubr.f32.gmra.mxu0 %v656
    %v1182 = vpop.f32.mrf.mxu0
    %v1183 = vadd.f32 0.0, %v1182
    %v1184 = vpop.f32.mrf.mxu0
    %v1185 = vadd.f32 0.0, %v1184
    %1186 = vmatprep.mubr.f32.mxu0 0.0
    %1187 = vmatmul.mubr.f32.gmra.mxu0 %v659
    %v1188 = vpop.f32.mrf.mxu0
    %v1189 = vadd.f32 0.0, %v1188
    %v1190 = vpop.f32.mrf.mxu0
    %v1191 = vadd.f32 0.0, %v1190
    %1192 = vmatprep.mubr.f32.mxu0 0.0
    %1193 = vmatmul.mubr.f32.gmra.mxu0 %v662
    %v1194 = vpop.f32.mrf.mxu0
    %v1195 = vadd.f32 0.0, %v1194
    %v1196 = vpop.f32.mrf.mxu0
    %v1197 = vadd.f32 0.0, %v1196
    %1198 = vmatprep.mubr.f32.mxu0 0.0
    %1199 = vmatmul.mubr.f32.gmra.mxu0 %v665
    %v1200 = vpop.f32.mrf.mxu0
    %v1201 = vadd.f32 0.0, %v1200
    %v1202 = vpop.f32.mrf.mxu0
    %v1203 = vadd.f32 0.0, %v1202
    %1204 = vmatprep.mubr.f32.mxu0 0.0
    %1205 = vmatmul.mubr.f32.gmra.mxu0 %v668
    %v1206 = vpop.f32.mrf.mxu0
    %v1207 = vadd.f32 0.0, %v1206
    %v1208 = vpop.f32.mrf.mxu0
    %v1209 = vadd.f32 0.0, %v1208
    %1210 = vdwg.mxu0
    %v1211 = vadd.f32 %v1098, %v1177
    %v1212 = vadd.f32 %v1099, %v1179
    %v1213 = vadd.f32 %v1100, %v1183
    %v1214 = vadd.f32 %v1101, %v1185
    %v1215 = vadd.f32 %v1102, %v1189
    %v1216 = vadd.f32 %v1103, %v1191
    %v1217 = vadd.f32 %v1104, %v1195
    %v1218 = vadd.f32 %v1105, %v1197
    %v1219 = vadd.f32 %v1106, %v1201
    %v1220 = vadd.f32 %v1107, %v1203
    %v1221 = vadd.f32 %v1108, %v1207
    %v1222 = vadd.f32 %v1109, %v1209
    %s1223 = scalar_lea.vmem %s0, 64
    %v1224 = vld [vmem:[%s1223] sm:$0xff]
    %v1225 = vld [vmem:[%s1223 + $0x8] sm:$0xff]
    %v1226 = vld [vmem:[%s1223 + $0x10] sm:$0xff]
    %v1227 = vld [vmem:[%s1223 + $0x18] sm:$0xff]
    %v1228 = vld [vmem:[%s1223 + $0x20] sm:$0xff]
    %v1229 = vld [vmem:[%s1223 + $0x28] sm:$0xff]
    %v1231 = vsel %vm78, %v1224, 0
    %v1234 = vsel %vm78, %v1225, 0
    %v1237 = vsel %vm78, %v1226, 0
    %v1240 = vsel %vm78, %v1227, 0
    %v1243 = vsel %vm78, %v1228, 0
    %v1246 = vsel %vm78, %v1229, 0
    %1248 = vmatprep.subr.mxu0 0.0
    %1249 = vmatpush1.msra.mxu0 0.0
    %1250 = vmatprep.subr.mxu0 0.0
    %1251 = vmatpush1.msra.mxu0 0.0
    %1252 = vmatprep.subr.mxu0 0.0
    %1253 = vmatpush1.msra.mxu0 0.0
    %1254 = vmatprep.subr.mxu0 0.0
    %1255 = vmatpush1.msra.mxu0 0.0
    %1256 = vmatprep.subr.mxu0 0.0
    %1257 = vmatpush1.msra.mxu0 0.0
    %1258 = vmatprep.subr.mxu0 0.0
    %1259 = vmatpush1.msra.mxu0 0.0
    %1260 = vmatprep.subr.mxu0 0.0
    %1261 = vmatpush1.msra.mxu0 0.0
    %1262 = vmatprep.subr.mxu0 0.0
    %1263 = vmatpush1.msra.mxu0 0.0
    %1264 = vmatprep.subr.mxu0 0.0
    %1265 = vmatpush1.msra.mxu0 0.0
    %1266 = vmatprep.subr.mxu0 0.0
    %1267 = vmatpush1.msra.mxu0 0.0
    %1268 = vmatprep.subr.mxu0 0.0
    %1269 = vmatpush1.msra.mxu0 0.0
    %1270 = vmatprep.subr.mxu0 0.0
    %1271 = vmatpush1.msra.mxu0 0.0
    %1272 = vmatprep.subr.mxu0 %v674
    %1273 = vmatpush1.msra.mxu0 %v671
    %1274 = vmatprep.subr.mxu0 %v649
    %1275 = vmatpush1.msra.mxu0 %v648
    %1276 = vmatprep.subr.mxu0 %v647
    %1277 = vmatpush1.msra.mxu0 %v646
    %1278 = vmatprep.subr.mxu0 %v645
    %1279 = vmatpush1.msra.mxu0 %v644
    %1280 = vmatprep.subr.mxu0 0.0
    %1281 = vmatpush2.msra.mxu0 0.0
    %1282 = vmatprep.subr.mxu0 0.0
    %1283 = vmatpush2.msra.mxu0 0.0
    %1284 = vmatprep.subr.mxu0 0.0
    %1285 = vmatpush2.msra.mxu0 0.0
    %1286 = vmatprep.subr.mxu0 0.0
    %1287 = vmatpush2.msra.mxu0 0.0
    %1288 = vmatprep.subr.mxu0 0.0
    %1289 = vmatpush2.msra.mxu0 0.0
    %1290 = vmatprep.subr.mxu0 0.0
    %1291 = vmatpush2.msra.mxu0 0.0
    %1292 = vmatprep.subr.mxu0 0.0
    %1293 = vmatpush2.msra.mxu0 0.0
    %1294 = vmatprep.subr.mxu0 0.0
    %1295 = vmatpush2.msra.mxu0 0.0
    %1296 = vmatprep.subr.mxu0 0.0
    %1297 = vmatpush2.msra.mxu0 0.0
    %1298 = vmatprep.subr.mxu0 0.0
    %1299 = vmatpush2.msra.mxu0 0.0
    %1300 = vmatprep.subr.mxu0 0.0
    %1301 = vmatpush2.msra.mxu0 0.0
    %1302 = vmatprep.subr.mxu0 0.0
    %1303 = vmatpush2.msra.mxu0 0.0
    %1304 = vmatprep.subr.mxu0 0.0
    %1305 = vmatpush2.msra.mxu0 0.0
    %1306 = vmatprep.subr.mxu0 0.0
    %1307 = vmatpush2.msra.mxu0 0.0
    %1308 = vmatprep.subr.mxu0 0.0
    %1309 = vmatpush2.msra.mxu0 0.0
    %1310 = vmatprep.subr.mxu0 0.0
    %1311 = vmatpush2.msra.mxu0 0.0
    %1312 = vmatprep.mubr.f32.mxu0 0.0
    %1313 = vmatmul.mubr.f32.gmra.mxu0 %v1231
    %v1314 = vpop.f32.mrf.mxu0
    %v1315 = vadd.f32 0.0, %v1314
    %v1316 = vpop.f32.mrf.mxu0
    %v1317 = vadd.f32 0.0, %v1316
    %1318 = vmatprep.mubr.f32.mxu0 0.0
    %1319 = vmatmul.mubr.f32.gmra.mxu0 %v1234
    %v1320 = vpop.f32.mrf.mxu0
    %v1321 = vadd.f32 0.0, %v1320
    %v1322 = vpop.f32.mrf.mxu0
    %v1323 = vadd.f32 0.0, %v1322
    %1324 = vmatprep.mubr.f32.mxu0 0.0
    %1325 = vmatmul.mubr.f32.gmra.mxu0 %v1237
    %v1326 = vpop.f32.mrf.mxu0
    %v1327 = vadd.f32 0.0, %v1326
    %v1328 = vpop.f32.mrf.mxu0
    %v1329 = vadd.f32 0.0, %v1328
    %1330 = vmatprep.mubr.f32.mxu0 0.0
    %1331 = vmatmul.mubr.f32.gmra.mxu0 %v1240
    %v1332 = vpop.f32.mrf.mxu0
    %v1333 = vadd.f32 0.0, %v1332
    %v1334 = vpop.f32.mrf.mxu0
    %v1335 = vadd.f32 0.0, %v1334
    %1336 = vmatprep.mubr.f32.mxu0 0.0
    %1337 = vmatmul.mubr.f32.gmra.mxu0 %v1243
    %v1338 = vpop.f32.mrf.mxu0
    %v1339 = vadd.f32 0.0, %v1338
    %v1340 = vpop.f32.mrf.mxu0
    %v1341 = vadd.f32 0.0, %v1340
    %1342 = vmatprep.mubr.f32.mxu0 0.0
    %1343 = vmatmul.mubr.f32.gmra.mxu0 %v1246
    %v1344 = vpop.f32.mrf.mxu0
    %v1345 = vadd.f32 0.0, %v1344
    %v1346 = vpop.f32.mrf.mxu0
    %v1347 = vadd.f32 0.0, %v1346
    %1348 = vdwg.mxu0
    %v1349 = vadd.f32 %v1211, %v1315
    %v1350 = vadd.f32 %v1212, %v1317
    %v1351 = vadd.f32 %v1213, %v1321
    %v1352 = vadd.f32 %v1214, %v1323
    %v1353 = vadd.f32 %v1215, %v1327
    %v1354 = vadd.f32 %v1216, %v1329
    %v1355 = vadd.f32 %v1217, %v1333
    %v1356 = vadd.f32 %v1218, %v1335
    %v1357 = vadd.f32 %v1219, %v1339
    %v1358 = vadd.f32 %v1220, %v1341
    %v1359 = vadd.f32 %v1221, %v1345
    %v1360 = vadd.f32 %v1222, %v1347
    %v1361 = vmax.f32 %v1349, %v1350
    %v1362 = vmax.f32 %v1351, %v1352
    %v1363 = vmax.f32 %v1353, %v1354
    %v1364 = vmax.f32 %v1355, %v1356
    %v1365 = vmax.f32 %v1357, %v1358
    %v1366 = vmax.f32 %v1359, %v1360
    %v1367 = vmax.f32 %v789, %v1361
    %v1368 = vmax.f32 %v790, %v1362
    %v1369 = vmax.f32 %v791, %v1363
    %v1370 = vmax.f32 %v792, %v1364
    %v1371 = vmax.f32 %v793, %v1365
    %v1372 = vmax.f32 %v794, %v1366
    %v1373 = vld [vmem:[%s4] sm:$0x1]
    %v1374 = vlaneseq
    %v1375 = vshrl.u32 %v1374, 7
    %v1376 = vsub.s32 0, %v1375
    %v1377 = vrot.slane %v1373, %v1376
    %v1378 = vadd.f32 %v1367, %v1377
    %v1379 = vadd.f32 %v1368, %v1377
    %v1380 = vadd.f32 %v1369, %v1377
    %v1381 = vadd.f32 %v1370, %v1377
    %v1382 = vadd.f32 %v1371, %v1377
    %v1383 = vadd.f32 %v1372, %v1377
    %v1384 = vmax.f32 %v1378, 0.0
    %v1385 = vmax.f32 %v1379, 0.0
    %v1386 = vmax.f32 %v1380, 0.0
    %v1387 = vmax.f32 %v1381, 0.0
    %v1388 = vmax.f32 %v1382, 0.0
    %v1389 = vmax.f32 %v1383, 0.0
    %1390 = vmatprep.subr.mxu0 0.0
    %1391 = vmatpush1.msra.mxu0 0.0
    %1392 = vmatprep.subr.mxu0 0.0
    %1393 = vmatpush1.msra.mxu0 0.0
    %1394 = vmatprep.subr.mxu0 0.0
    %1395 = vmatpush1.msra.mxu0 0.0
    %1396 = vmatprep.subr.mxu0 0.0
    %1397 = vmatpush1.msra.mxu0 0.0
    %1398 = vmatprep.subr.mxu0 0.0
    %1399 = vmatpush1.msra.mxu0 0.0
    %1400 = vmatprep.subr.mxu0 0.0
    %1401 = vmatpush1.msra.mxu0 0.0
    %1402 = vmatprep.subr.mxu0 0.0
    %1403 = vmatpush1.msra.mxu0 0.0
    %1404 = vmatprep.subr.mxu0 0.0
    %1405 = vmatpush1.msra.mxu0 0.0
    %1406 = vmatprep.subr.mxu0 0.0
    %1407 = vmatpush1.msra.mxu0 0.0
    %1408 = vmatprep.subr.mxu0 0.0
    %1409 = vmatpush1.msra.mxu0 0.0
    %1410 = vmatprep.subr.mxu0 0.0
    %1411 = vmatpush1.msra.mxu0 0.0
    %1412 = vmatprep.subr.mxu0 0.0
    %1413 = vmatpush1.msra.mxu0 0.0
    %1414 = vmatprep.subr.mxu0 %v102
    %1415 = vmatpush1.msra.mxu0 %v99
    %1416 = vmatprep.subr.mxu0 %v75
    %1417 = vmatpush1.msra.mxu0 %v74
    %1418 = vmatprep.subr.mxu0 %v73
    %1419 = vmatpush1.msra.mxu0 %v72
    %1420 = vmatprep.subr.mxu0 %v71
    %1421 = vmatpush1.msra.mxu0 %v70
    %1422 = vmatprep.subr.mxu0 0.0
    %1423 = vmatpush2.msra.mxu0 0.0
    %1424 = vmatprep.subr.mxu0 0.0
    %1425 = vmatpush2.msra.mxu0 0.0
    %1426 = vmatprep.subr.mxu0 0.0
    %1427 = vmatpush2.msra.mxu0 0.0
    %1428 = vmatprep.subr.mxu0 0.0
    %1429 = vmatpush2.msra.mxu0 0.0
    %1430 = vmatprep.subr.mxu0 0.0
    %1431 = vmatpush2.msra.mxu0 0.0
    %1432 = vmatprep.subr.mxu0 0.0
    %1433 = vmatpush2.msra.mxu0 0.0
    %1434 = vmatprep.subr.mxu0 0.0
    %1435 = vmatpush2.msra.mxu0 0.0
    %1436 = vmatprep.subr.mxu0 0.0
    %1437 = vmatpush2.msra.mxu0 0.0
    %1438 = vmatprep.subr.mxu0 0.0
    %1439 = vmatpush2.msra.mxu0 0.0
    %1440 = vmatprep.subr.mxu0 0.0
    %1441 = vmatpush2.msra.mxu0 0.0
    %1442 = vmatprep.subr.mxu0 0.0
    %1443 = vmatpush2.msra.mxu0 0.0
    %1444 = vmatprep.subr.mxu0 0.0
    %1445 = vmatpush2.msra.mxu0 0.0
    %1446 = vmatprep.subr.mxu0 0.0
    %1447 = vmatpush2.msra.mxu0 0.0
    %1448 = vmatprep.subr.mxu0 0.0
    %1449 = vmatpush2.msra.mxu0 0.0
    %1450 = vmatprep.subr.mxu0 0.0
    %1451 = vmatpush2.msra.mxu0 0.0
    %1452 = vmatprep.subr.mxu0 0.0
    %1453 = vmatpush2.msra.mxu0 0.0
    %1454 = vmatprep.mubr.f32.mxu0 0.0
    %1455 = vmatmul.mubr.f32.gmra.mxu0 %v500
    %v1456 = vpop.f32.mrf.mxu0
    %v1457 = vadd.f32 0.0, %v1456
    %v1458 = vpop.f32.mrf.mxu0
    %v1459 = vadd.f32 0.0, %v1458
    %1460 = vmatprep.mubr.f32.mxu0 0.0
    %1461 = vmatmul.mubr.f32.gmra.mxu0 %v503
    %v1462 = vpop.f32.mrf.mxu0
    %v1463 = vadd.f32 0.0, %v1462
    %v1464 = vpop.f32.mrf.mxu0
    %v1465 = vadd.f32 0.0, %v1464
    %1466 = vmatprep.mubr.f32.mxu0 0.0
    %1467 = vmatmul.mubr.f32.gmra.mxu0 %v506
    %v1468 = vpop.f32.mrf.mxu0
    %v1469 = vadd.f32 0.0, %v1468
    %v1470 = vpop.f32.mrf.mxu0
    %v1471 = vadd.f32 0.0, %v1470
    %1472 = vmatprep.mubr.f32.mxu0 0.0
    %1473 = vmatmul.mubr.f32.gmra.mxu0 %v509
    %v1474 = vpop.f32.mrf.mxu0
    %v1475 = vadd.f32 0.0, %v1474
    %v1476 = vpop.f32.mrf.mxu0
    %v1477 = vadd.f32 0.0, %v1476
    %1478 = vmatprep.mubr.f32.mxu0 0.0
    %1479 = vmatmul.mubr.f32.gmra.mxu0 %v512
    %v1480 = vpop.f32.mrf.mxu0
    %v1481 = vadd.f32 0.0, %v1480
    %v1482 = vpop.f32.mrf.mxu0
    %v1483 = vadd.f32 0.0, %v1482
    %1484 = vmatprep.mubr.f32.mxu0 0.0
    %1485 = vmatmul.mubr.f32.gmra.mxu0 %v515
    %v1486 = vpop.f32.mrf.mxu0
    %v1487 = vadd.f32 0.0, %v1486
    %v1488 = vpop.f32.mrf.mxu0
    %v1489 = vadd.f32 0.0, %v1488
    %1490 = vdwg.mxu0
    %1491 = vmatprep.subr.mxu0 0.0
    %1492 = vmatpush1.msra.mxu0 0.0
    %1493 = vmatprep.subr.mxu0 0.0
    %1494 = vmatpush1.msra.mxu0 0.0
    %1495 = vmatprep.subr.mxu0 0.0
    %1496 = vmatpush1.msra.mxu0 0.0
    %1497 = vmatprep.subr.mxu0 0.0
    %1498 = vmatpush1.msra.mxu0 0.0
    %1499 = vmatprep.subr.mxu0 0.0
    %1500 = vmatpush1.msra.mxu0 0.0
    %1501 = vmatprep.subr.mxu0 0.0
    %1502 = vmatpush1.msra.mxu0 0.0
    %1503 = vmatprep.subr.mxu0 0.0
    %1504 = vmatpush1.msra.mxu0 0.0
    %1505 = vmatprep.subr.mxu0 0.0
    %1506 = vmatpush1.msra.mxu0 0.0
    %1507 = vmatprep.subr.mxu0 0.0
    %1508 = vmatpush1.msra.mxu0 0.0
    %1509 = vmatprep.subr.mxu0 0.0
    %1510 = vmatpush1.msra.mxu0 0.0
    %1511 = vmatprep.subr.mxu0 0.0
    %1512 = vmatpush1.msra.mxu0 0.0
    %1513 = vmatprep.subr.mxu0 0.0
    %1514 = vmatpush1.msra.mxu0 0.0
    %1515 = vmatprep.subr.mxu0 %v227
    %1516 = vmatpush1.msra.mxu0 %v224
    %1517 = vmatprep.subr.mxu0 %v59
    %1518 = vmatpush1.msra.mxu0 %v58
    %1519 = vmatprep.subr.mxu0 %v57
    %1520 = vmatpush1.msra.mxu0 %v56
    %1521 = vmatprep.subr.mxu0 %v55
    %1522 = vmatpush1.msra.mxu0 %v54
    %1523 = vmatprep.subr.mxu0 0.0
    %1524 = vmatpush2.msra.mxu0 0.0
    %1525 = vmatprep.subr.mxu0 0.0
    %1526 = vmatpush2.msra.mxu0 0.0
    %1527 = vmatprep.subr.mxu0 0.0
    %1528 = vmatpush2.msra.mxu0 0.0
    %1529 = vmatprep.subr.mxu0 0.0
    %1530 = vmatpush2.msra.mxu0 0.0
    %1531 = vmatprep.subr.mxu0 0.0
    %1532 = vmatpush2.msra.mxu0 0.0
    %1533 = vmatprep.subr.mxu0 0.0
    %1534 = vmatpush2.msra.mxu0 0.0
    %1535 = vmatprep.subr.mxu0 0.0
    %1536 = vmatpush2.msra.mxu0 0.0
    %1537 = vmatprep.subr.mxu0 0.0
    %1538 = vmatpush2.msra.mxu0 0.0
    %1539 = vmatprep.subr.mxu0 0.0
    %1540 = vmatpush2.msra.mxu0 0.0
    %1541 = vmatprep.subr.mxu0 0.0
    %1542 = vmatpush2.msra.mxu0 0.0
    %1543 = vmatprep.subr.mxu0 0.0
    %1544 = vmatpush2.msra.mxu0 0.0
    %1545 = vmatprep.subr.mxu0 0.0
    %1546 = vmatpush2.msra.mxu0 0.0
    %1547 = vmatprep.subr.mxu0 0.0
    %1548 = vmatpush2.msra.mxu0 0.0
    %1549 = vmatprep.subr.mxu0 0.0
    %1550 = vmatpush2.msra.mxu0 0.0
    %1551 = vmatprep.subr.mxu0 0.0
    %1552 = vmatpush2.msra.mxu0 0.0
    %1553 = vmatprep.subr.mxu0 0.0
    %1554 = vmatpush2.msra.mxu0 0.0
    %1555 = vmatprep.mubr.f32.mxu0 0.0
    %1556 = vmatmul.mubr.f32.gmra.mxu0 %v347
    %v1557 = vpop.f32.mrf.mxu0
    %v1558 = vadd.f32 %v1457, %v1557
    %v1559 = vpop.f32.mrf.mxu0
    %v1560 = vadd.f32 %v1459, %v1559
    %1561 = vmatprep.mubr.f32.mxu0 0.0
    %1562 = vmatmul.mubr.f32.gmra.mxu0 %v350
    %v1563 = vpop.f32.mrf.mxu0
    %v1564 = vadd.f32 %v1463, %v1563
    %v1565 = vpop.f32.mrf.mxu0
    %v1566 = vadd.f32 %v1465, %v1565
    %1567 = vmatprep.mubr.f32.mxu0 0.0
    %1568 = vmatmul.mubr.f32.gmra.mxu0 %v353
    %v1569 = vpop.f32.mrf.mxu0
    %v1570 = vadd.f32 %v1469, %v1569
    %v1571 = vpop.f32.mrf.mxu0
    %v1572 = vadd.f32 %v1471, %v1571
    %1573 = vmatprep.mubr.f32.mxu0 0.0
    %1574 = vmatmul.mubr.f32.gmra.mxu0 %v356
    %v1575 = vpop.f32.mrf.mxu0
    %v1576 = vadd.f32 %v1475, %v1575
    %v1577 = vpop.f32.mrf.mxu0
    %v1578 = vadd.f32 %v1477, %v1577
    %1579 = vmatprep.mubr.f32.mxu0 0.0
    %1580 = vmatmul.mubr.f32.gmra.mxu0 %v359
    %v1581 = vpop.f32.mrf.mxu0
    %v1582 = vadd.f32 %v1481, %v1581
    %v1583 = vpop.f32.mrf.mxu0
    %v1584 = vadd.f32 %v1483, %v1583
    %1585 = vmatprep.mubr.f32.mxu0 0.0
    %1586 = vmatmul.mubr.f32.gmra.mxu0 %v362
    %v1587 = vpop.f32.mrf.mxu0
    %v1588 = vadd.f32 %v1487, %v1587
    %v1589 = vpop.f32.mrf.mxu0
    %v1590 = vadd.f32 %v1489, %v1589
    %1591 = vdwg.mxu0
    %1592 = vmatprep.subr.mxu0 0.0
    %1593 = vmatpush1.msra.mxu0 0.0
    %1594 = vmatprep.subr.mxu0 0.0
    %1595 = vmatpush1.msra.mxu0 0.0
    %1596 = vmatprep.subr.mxu0 0.0
    %1597 = vmatpush1.msra.mxu0 0.0
    %1598 = vmatprep.subr.mxu0 0.0
    %1599 = vmatpush1.msra.mxu0 0.0
    %1600 = vmatprep.subr.mxu0 0.0
    %1601 = vmatpush1.msra.mxu0 0.0
    %1602 = vmatprep.subr.mxu0 0.0
    %1603 = vmatpush1.msra.mxu0 0.0
    %1604 = vmatprep.subr.mxu0 0.0
    %1605 = vmatpush1.msra.mxu0 0.0
    %1606 = vmatprep.subr.mxu0 0.0
    %1607 = vmatpush1.msra.mxu0 0.0
    %1608 = vmatprep.subr.mxu0 0.0
    %1609 = vmatpush1.msra.mxu0 0.0
    %1610 = vmatprep.subr.mxu0 0.0
    %1611 = vmatpush1.msra.mxu0 0.0
    %1612 = vmatprep.subr.mxu0 0.0
    %1613 = vmatpush1.msra.mxu0 0.0
    %1614 = vmatprep.subr.mxu0 0.0
    %1615 = vmatpush1.msra.mxu0 0.0
    %1616 = vmatprep.subr.mxu0 %v368
    %1617 = vmatpush1.msra.mxu0 %v365
    %1618 = vmatprep.subr.mxu0 %v343
    %1619 = vmatpush1.msra.mxu0 %v342
    %1620 = vmatprep.subr.mxu0 %v341
    %1621 = vmatpush1.msra.mxu0 %v340
    %1622 = vmatprep.subr.mxu0 %v339
    %1623 = vmatpush1.msra.mxu0 %v338
    %1624 = vmatprep.subr.mxu0 0.0
    %1625 = vmatpush2.msra.mxu0 0.0
    %1626 = vmatprep.subr.mxu0 0.0
    %1627 = vmatpush2.msra.mxu0 0.0
    %1628 = vmatprep.subr.mxu0 0.0
    %1629 = vmatpush2.msra.mxu0 0.0
    %1630 = vmatprep.subr.mxu0 0.0
    %1631 = vmatpush2.msra.mxu0 0.0
    %1632 = vmatprep.subr.mxu0 0.0
    %1633 = vmatpush2.msra.mxu0 0.0
    %1634 = vmatprep.subr.mxu0 0.0
    %1635 = vmatpush2.msra.mxu0 0.0
    %1636 = vmatprep.subr.mxu0 0.0
    %1637 = vmatpush2.msra.mxu0 0.0
    %1638 = vmatprep.subr.mxu0 0.0
    %1639 = vmatpush2.msra.mxu0 0.0
    %1640 = vmatprep.subr.mxu0 0.0
    %1641 = vmatpush2.msra.mxu0 0.0
    %1642 = vmatprep.subr.mxu0 0.0
    %1643 = vmatpush2.msra.mxu0 0.0
    %1644 = vmatprep.subr.mxu0 0.0
    %1645 = vmatpush2.msra.mxu0 0.0
    %1646 = vmatprep.subr.mxu0 0.0
    %1647 = vmatpush2.msra.mxu0 0.0
    %1648 = vmatprep.subr.mxu0 0.0
    %1649 = vmatpush2.msra.mxu0 0.0
    %1650 = vmatprep.subr.mxu0 0.0
    %1651 = vmatpush2.msra.mxu0 0.0
    %1652 = vmatprep.subr.mxu0 0.0
    %1653 = vmatpush2.msra.mxu0 0.0
    %1654 = vmatprep.subr.mxu0 0.0
    %1655 = vmatpush2.msra.mxu0 0.0
    %1656 = vmatprep.mubr.f32.mxu0 0.0
    %1657 = vmatmul.mubr.f32.gmra.mxu0 %v653
    %v1658 = vpop.f32.mrf.mxu0
    %v1659 = vadd.f32 0.0, %v1658
    %v1660 = vpop.f32.mrf.mxu0
    %v1661 = vadd.f32 0.0, %v1660
    %1662 = vmatprep.mubr.f32.mxu0 0.0
    %1663 = vmatmul.mubr.f32.gmra.mxu0 %v656
    %v1664 = vpop.f32.mrf.mxu0
    %v1665 = vadd.f32 0.0, %v1664
    %v1666 = vpop.f32.mrf.mxu0
    %v1667 = vadd.f32 0.0, %v1666
    %1668 = vmatprep.mubr.f32.mxu0 0.0
    %1669 = vmatmul.mubr.f32.gmra.mxu0 %v659
    %v1670 = vpop.f32.mrf.mxu0
    %v1671 = vadd.f32 0.0, %v1670
    %v1672 = vpop.f32.mrf.mxu0
    %v1673 = vadd.f32 0.0, %v1672
    %1674 = vmatprep.mubr.f32.mxu0 0.0
    %1675 = vmatmul.mubr.f32.gmra.mxu0 %v662
    %v1676 = vpop.f32.mrf.mxu0
    %v1677 = vadd.f32 0.0, %v1676
    %v1678 = vpop.f32.mrf.mxu0
    %v1679 = vadd.f32 0.0, %v1678
    %1680 = vmatprep.mubr.f32.mxu0 0.0
    %1681 = vmatmul.mubr.f32.gmra.mxu0 %v665
    %v1682 = vpop.f32.mrf.mxu0
    %v1683 = vadd.f32 0.0, %v1682
    %v1684 = vpop.f32.mrf.mxu0
    %v1685 = vadd.f32 0.0, %v1684
    %1686 = vmatprep.mubr.f32.mxu0 0.0
    %1687 = vmatmul.mubr.f32.gmra.mxu0 %v668
    %v1688 = vpop.f32.mrf.mxu0
    %v1689 = vadd.f32 0.0, %v1688
    %v1690 = vpop.f32.mrf.mxu0
    %v1691 = vadd.f32 0.0, %v1690
    %1692 = vdwg.mxu0
    %v1693 = vadd.f32 %v1558, %v1659
    %v1694 = vadd.f32 %v1560, %v1661
    %v1695 = vadd.f32 %v1564, %v1665
    %v1696 = vadd.f32 %v1566, %v1667
    %v1697 = vadd.f32 %v1570, %v1671
    %v1698 = vadd.f32 %v1572, %v1673
    %v1699 = vadd.f32 %v1576, %v1677
    %v1700 = vadd.f32 %v1578, %v1679
    %v1701 = vadd.f32 %v1582, %v1683
    %v1702 = vadd.f32 %v1584, %v1685
    %v1703 = vadd.f32 %v1588, %v1689
    %v1704 = vadd.f32 %v1590, %v1691
    %1705 = vmatprep.subr.mxu0 0.0
    %1706 = vmatpush1.msra.mxu0 0.0
    %1707 = vmatprep.subr.mxu0 0.0
    %1708 = vmatpush1.msra.mxu0 0.0
    %1709 = vmatprep.subr.mxu0 0.0
    %1710 = vmatpush1.msra.mxu0 0.0
    %1711 = vmatprep.subr.mxu0 0.0
    %1712 = vmatpush1.msra.mxu0 0.0
    %1713 = vmatprep.subr.mxu0 0.0
    %1714 = vmatpush1.msra.mxu0 0.0
    %1715 = vmatprep.subr.mxu0 0.0
    %1716 = vmatpush1.msra.mxu0 0.0
    %1717 = vmatprep.subr.mxu0 0.0
    %1718 = vmatpush1.msra.mxu0 0.0
    %1719 = vmatprep.subr.mxu0 0.0
    %1720 = vmatpush1.msra.mxu0 0.0
    %1721 = vmatprep.subr.mxu0 0.0
    %1722 = vmatpush1.msra.mxu0 0.0
    %1723 = vmatprep.subr.mxu0 0.0
    %1724 = vmatpush1.msra.mxu0 0.0
    %1725 = vmatprep.subr.mxu0 0.0
    %1726 = vmatpush1.msra.mxu0 0.0
    %1727 = vmatprep.subr.mxu0 0.0
    %1728 = vmatpush1.msra.mxu0 0.0
    %1729 = vmatprep.subr.mxu0 %v521
    %1730 = vmatpush1.msra.mxu0 %v518
    %1731 = vmatprep.subr.mxu0 %v496
    %1732 = vmatpush1.msra.mxu0 %v495
    %1733 = vmatprep.subr.mxu0 %v494
    %1734 = vmatpush1.msra.mxu0 %v493
    %1735 = vmatprep.subr.mxu0 %v492
    %1736 = vmatpush1.msra.mxu0 %v491
    %1737 = vmatprep.subr.mxu0 0.0
    %1738 = vmatpush2.msra.mxu0 0.0
    %1739 = vmatprep.subr.mxu0 0.0
    %1740 = vmatpush2.msra.mxu0 0.0
    %1741 = vmatprep.subr.mxu0 0.0
    %1742 = vmatpush2.msra.mxu0 0.0
    %1743 = vmatprep.subr.mxu0 0.0
    %1744 = vmatpush2.msra.mxu0 0.0
    %1745 = vmatprep.subr.mxu0 0.0
    %1746 = vmatpush2.msra.mxu0 0.0
    %1747 = vmatprep.subr.mxu0 0.0
    %1748 = vmatpush2.msra.mxu0 0.0
    %1749 = vmatprep.subr.mxu0 0.0
    %1750 = vmatpush2.msra.mxu0 0.0
    %1751 = vmatprep.subr.mxu0 0.0
    %1752 = vmatpush2.msra.mxu0 0.0
    %1753 = vmatprep.subr.mxu0 0.0
    %1754 = vmatpush2.msra.mxu0 0.0
    %1755 = vmatprep.subr.mxu0 0.0
    %1756 = vmatpush2.msra.mxu0 0.0
    %1757 = vmatprep.subr.mxu0 0.0
    %1758 = vmatpush2.msra.mxu0 0.0
    %1759 = vmatprep.subr.mxu0 0.0
    %1760 = vmatpush2.msra.mxu0 0.0
    %1761 = vmatprep.subr.mxu0 0.0
    %1762 = vmatpush2.msra.mxu0 0.0
    %1763 = vmatprep.subr.mxu0 0.0
    %1764 = vmatpush2.msra.mxu0 0.0
    %1765 = vmatprep.subr.mxu0 0.0
    %1766 = vmatpush2.msra.mxu0 0.0
    %1767 = vmatprep.subr.mxu0 0.0
    %1768 = vmatpush2.msra.mxu0 0.0
    %1769 = vmatprep.mubr.f32.mxu0 0.0
    %1770 = vmatmul.mubr.f32.gmra.mxu0 %v1231
    %v1771 = vpop.f32.mrf.mxu0
    %v1772 = vadd.f32 0.0, %v1771
    %v1773 = vpop.f32.mrf.mxu0
    %v1774 = vadd.f32 0.0, %v1773
    %1775 = vmatprep.mubr.f32.mxu0 0.0
    %1776 = vmatmul.mubr.f32.gmra.mxu0 %v1234
    %v1777 = vpop.f32.mrf.mxu0
    %v1778 = vadd.f32 0.0, %v1777
    %v1779 = vpop.f32.mrf.mxu0
    %v1780 = vadd.f32 0.0, %v1779
    %1781 = vmatprep.mubr.f32.mxu0 0.0
    %1782 = vmatmul.mubr.f32.gmra.mxu0 %v1237
    %v1783 = vpop.f32.mrf.mxu0
    %v1784 = vadd.f32 0.0, %v1783
    %v1785 = vpop.f32.mrf.mxu0
    %v1786 = vadd.f32 0.0, %v1785
    %1787 = vmatprep.mubr.f32.mxu0 0.0
    %1788 = vmatmul.mubr.f32.gmra.mxu0 %v1240
    %v1789 = vpop.f32.mrf.mxu0
    %v1790 = vadd.f32 0.0, %v1789
    %v1791 = vpop.f32.mrf.mxu0
    %v1792 = vadd.f32 0.0, %v1791
    %1793 = vmatprep.mubr.f32.mxu0 0.0
    %1794 = vmatmul.mubr.f32.gmra.mxu0 %v1243
    %v1795 = vpop.f32.mrf.mxu0
    %v1796 = vadd.f32 0.0, %v1795
    %v1797 = vpop.f32.mrf.mxu0
    %v1798 = vadd.f32 0.0, %v1797
    %1799 = vmatprep.mubr.f32.mxu0 0.0
    %1800 = vmatmul.mubr.f32.gmra.mxu0 %v1246
    %v1801 = vpop.f32.mrf.mxu0
    %v1802 = vadd.f32 0.0, %v1801
    %v1803 = vpop.f32.mrf.mxu0
    %v1804 = vadd.f32 0.0, %v1803
    %1805 = vdwg.mxu0
    %v1806 = vadd.f32 %v1693, %v1772
    %v1807 = vadd.f32 %v1694, %v1774
    %v1808 = vadd.f32 %v1695, %v1778
    %v1809 = vadd.f32 %v1696, %v1780
    %v1810 = vadd.f32 %v1697, %v1784
    %v1811 = vadd.f32 %v1698, %v1786
    %v1812 = vadd.f32 %v1699, %v1790
    %v1813 = vadd.f32 %v1700, %v1792
    %v1814 = vadd.f32 %v1701, %v1796
    %v1815 = vadd.f32 %v1702, %v1798
    %v1816 = vadd.f32 %v1703, %v1802
    %v1817 = vadd.f32 %v1704, %v1804
    %s1818 = scalar_lea.vmem %s0, 120
    %v1819 = vld [vmem:[%s1818] sm:$0xff]
    %v1820 = vld [vmem:[%s1818 + $0x8] sm:$0xff]
    %v1821 = vld [vmem:[%s1818 + $0x10] sm:$0xff]
    %v1822 = vld [vmem:[%s1818 + $0x18] sm:$0xff]
    %v1823 = vld [vmem:[%s1818 + $0x20] sm:$0xff]
    %v1824 = vld [vmem:[%s1818 + $0x28] sm:$0xff]
    %v1826 = vsel %vm78, %v1819, 0
    %v1829 = vsel %vm78, %v1820, 0
    %v1832 = vsel %vm78, %v1821, 0
    %v1835 = vsel %vm78, %v1822, 0
    %v1838 = vsel %vm78, %v1823, 0
    %v1841 = vsel %vm78, %v1824, 0
    %1843 = vmatprep.subr.mxu0 0.0
    %1844 = vmatpush1.msra.mxu0 0.0
    %1845 = vmatprep.subr.mxu0 0.0
    %1846 = vmatpush1.msra.mxu0 0.0
    %1847 = vmatprep.subr.mxu0 0.0
    %1848 = vmatpush1.msra.mxu0 0.0
    %1849 = vmatprep.subr.mxu0 0.0
    %1850 = vmatpush1.msra.mxu0 0.0
    %1851 = vmatprep.subr.mxu0 0.0
    %1852 = vmatpush1.msra.mxu0 0.0
    %1853 = vmatprep.subr.mxu0 0.0
    %1854 = vmatpush1.msra.mxu0 0.0
    %1855 = vmatprep.subr.mxu0 0.0
    %1856 = vmatpush1.msra.mxu0 0.0
    %1857 = vmatprep.subr.mxu0 0.0
    %1858 = vmatpush1.msra.mxu0 0.0
    %1859 = vmatprep.subr.mxu0 0.0
    %1860 = vmatpush1.msra.mxu0 0.0
    %1861 = vmatprep.subr.mxu0 0.0
    %1862 = vmatpush1.msra.mxu0 0.0
    %1863 = vmatprep.subr.mxu0 0.0
    %1864 = vmatpush1.msra.mxu0 0.0
    %1865 = vmatprep.subr.mxu0 0.0
    %1866 = vmatpush1.msra.mxu0 0.0
    %1867 = vmatprep.subr.mxu0 %v674
    %1868 = vmatpush1.msra.mxu0 %v671
    %1869 = vmatprep.subr.mxu0 %v649
    %1870 = vmatpush1.msra.mxu0 %v648
    %1871 = vmatprep.subr.mxu0 %v647
    %1872 = vmatpush1.msra.mxu0 %v646
    %1873 = vmatprep.subr.mxu0 %v645
    %1874 = vmatpush1.msra.mxu0 %v644
    %1875 = vmatprep.subr.mxu0 0.0
    %1876 = vmatpush2.msra.mxu0 0.0
    %1877 = vmatprep.subr.mxu0 0.0
    %1878 = vmatpush2.msra.mxu0 0.0
    %1879 = vmatprep.subr.mxu0 0.0
    %1880 = vmatpush2.msra.mxu0 0.0
    %1881 = vmatprep.subr.mxu0 0.0
    %1882 = vmatpush2.msra.mxu0 0.0
    %1883 = vmatprep.subr.mxu0 0.0
    %1884 = vmatpush2.msra.mxu0 0.0
    %1885 = vmatprep.subr.mxu0 0.0
    %1886 = vmatpush2.msra.mxu0 0.0
    %1887 = vmatprep.subr.mxu0 0.0
    %1888 = vmatpush2.msra.mxu0 0.0
    %1889 = vmatprep.subr.mxu0 0.0
    %1890 = vmatpush2.msra.mxu0 0.0
    %1891 = vmatprep.subr.mxu0 0.0
    %1892 = vmatpush2.msra.mxu0 0.0
    %1893 = vmatprep.subr.mxu0 0.0
    %1894 = vmatpush2.msra.mxu0 0.0
    %1895 = vmatprep.subr.mxu0 0.0
    %1896 = vmatpush2.msra.mxu0 0.0
    %1897 = vmatprep.subr.mxu0 0.0
    %1898 = vmatpush2.msra.mxu0 0.0
    %1899 = vmatprep.subr.mxu0 0.0
    %1900 = vmatpush2.msra.mxu0 0.0
    %1901 = vmatprep.subr.mxu0 0.0
    %1902 = vmatpush2.msra.mxu0 0.0
    %1903 = vmatprep.subr.mxu0 0.0
    %1904 = vmatpush2.msra.mxu0 0.0
    %1905 = vmatprep.subr.mxu0 0.0
    %1906 = vmatpush2.msra.mxu0 0.0
    %1907 = vmatprep.mubr.f32.mxu0 0.0
    %1908 = vmatmul.mubr.f32.gmra.mxu0 %v1826
    %v1909 = vpop.f32.mrf.mxu0
    %v1910 = vadd.f32 0.0, %v1909
    %v1911 = vpop.f32.mrf.mxu0
    %v1912 = vadd.f32 0.0, %v1911
    %1913 = vmatprep.mubr.f32.mxu0 0.0
    %1914 = vmatmul.mubr.f32.gmra.mxu0 %v1829
    %v1915 = vpop.f32.mrf.mxu0
    %v1916 = vadd.f32 0.0, %v1915
    %v1917 = vpop.f32.mrf.mxu0
    %v1918 = vadd.f32 0.0, %v1917
    %1919 = vmatprep.mubr.f32.mxu0 0.0
    %1920 = vmatmul.mubr.f32.gmra.mxu0 %v1832
    %v1921 = vpop.f32.mrf.mxu0
    %v1922 = vadd.f32 0.0, %v1921
    %v1923 = vpop.f32.mrf.mxu0
    %v1924 = vadd.f32 0.0, %v1923
    %1925 = vmatprep.mubr.f32.mxu0 0.0
    %1926 = vmatmul.mubr.f32.gmra.mxu0 %v1835
    %v1927 = vpop.f32.mrf.mxu0
    %v1928 = vadd.f32 0.0, %v1927
    %v1929 = vpop.f32.mrf.mxu0
    %v1930 = vadd.f32 0.0, %v1929
    %1931 = vmatprep.mubr.f32.mxu0 0.0
    %1932 = vmatmul.mubr.f32.gmra.mxu0 %v1838
    %v1933 = vpop.f32.mrf.mxu0
    %v1934 = vadd.f32 0.0, %v1933
    %v1935 = vpop.f32.mrf.mxu0
    %v1936 = vadd.f32 0.0, %v1935
    %1937 = vmatprep.mubr.f32.mxu0 0.0
    %1938 = vmatmul.mubr.f32.gmra.mxu0 %v1841
    %v1939 = vpop.f32.mrf.mxu0
    %v1940 = vadd.f32 0.0, %v1939
    %v1941 = vpop.f32.mrf.mxu0
    %v1942 = vadd.f32 0.0, %v1941
    %1943 = vdwg.mxu0
    %v1944 = vadd.f32 %v1806, %v1910
    %v1945 = vadd.f32 %v1807, %v1912
    %v1946 = vadd.f32 %v1808, %v1916
    %v1947 = vadd.f32 %v1809, %v1918
    %v1948 = vadd.f32 %v1810, %v1922
    %v1949 = vadd.f32 %v1811, %v1924
    %v1950 = vadd.f32 %v1812, %v1928
    %v1951 = vadd.f32 %v1813, %v1930
    %v1952 = vadd.f32 %v1814, %v1934
    %v1953 = vadd.f32 %v1815, %v1936
    %v1954 = vadd.f32 %v1816, %v1940
    %v1955 = vadd.f32 %v1817, %v1942
    %v1956 = vmax.f32 %v1944, %v1945
    %v1957 = vmax.f32 %v1946, %v1947
    %v1958 = vmax.f32 %v1948, %v1949
    %v1959 = vmax.f32 %v1950, %v1951
    %v1960 = vmax.f32 %v1952, %v1953
    %v1961 = vmax.f32 %v1954, %v1955
    %1962 = vmatprep.subr.mxu0 0.0
    %1963 = vmatpush1.msra.mxu0 0.0
    %1964 = vmatprep.subr.mxu0 0.0
    %1965 = vmatpush1.msra.mxu0 0.0
    %1966 = vmatprep.subr.mxu0 0.0
    %1967 = vmatpush1.msra.mxu0 0.0
    %1968 = vmatprep.subr.mxu0 0.0
    %1969 = vmatpush1.msra.mxu0 0.0
    %1970 = vmatprep.subr.mxu0 0.0
    %1971 = vmatpush1.msra.mxu0 0.0
    %1972 = vmatprep.subr.mxu0 0.0
    %1973 = vmatpush1.msra.mxu0 0.0
    %1974 = vmatprep.subr.mxu0 0.0
    %1975 = vmatpush1.msra.mxu0 0.0
    %1976 = vmatprep.subr.mxu0 0.0
    %1977 = vmatpush1.msra.mxu0 0.0
    %1978 = vmatprep.subr.mxu0 0.0
    %1979 = vmatpush1.msra.mxu0 0.0
    %1980 = vmatprep.subr.mxu0 0.0
    %1981 = vmatpush1.msra.mxu0 0.0
    %1982 = vmatprep.subr.mxu0 0.0
    %1983 = vmatpush1.msra.mxu0 0.0
    %1984 = vmatprep.subr.mxu0 0.0
    %1985 = vmatpush1.msra.mxu0 0.0
    %1986 = vmatprep.subr.mxu0 %v102
    %1987 = vmatpush1.msra.mxu0 %v99
    %1988 = vmatprep.subr.mxu0 %v75
    %1989 = vmatpush1.msra.mxu0 %v74
    %1990 = vmatprep.subr.mxu0 %v73
    %1991 = vmatpush1.msra.mxu0 %v72
    %1992 = vmatprep.subr.mxu0 %v71
    %1993 = vmatpush1.msra.mxu0 %v70
    %1994 = vmatprep.subr.mxu0 0.0
    %1995 = vmatpush2.msra.mxu0 0.0
    %1996 = vmatprep.subr.mxu0 0.0
    %1997 = vmatpush2.msra.mxu0 0.0
    %1998 = vmatprep.subr.mxu0 0.0
    %1999 = vmatpush2.msra.mxu0 0.0
    %2000 = vmatprep.subr.mxu0 0.0
    %2001 = vmatpush2.msra.mxu0 0.0
    %2002 = vmatprep.subr.mxu0 0.0
    %2003 = vmatpush2.msra.mxu0 0.0
    %2004 = vmatprep.subr.mxu0 0.0
    %2005 = vmatpush2.msra.mxu0 0.0
    %2006 = vmatprep.subr.mxu0 0.0
    %2007 = vmatpush2.msra.mxu0 0.0
    %2008 = vmatprep.subr.mxu0 0.0
    %2009 = vmatpush2.msra.mxu0 0.0
    %2010 = vmatprep.subr.mxu0 0.0
    %2011 = vmatpush2.msra.mxu0 0.0
    %2012 = vmatprep.subr.mxu0 0.0
    %2013 = vmatpush2.msra.mxu0 0.0
    %2014 = vmatprep.subr.mxu0 0.0
    %2015 = vmatpush2.msra.mxu0 0.0
    %2016 = vmatprep.subr.mxu0 0.0
    %2017 = vmatpush2.msra.mxu0 0.0
    %2018 = vmatprep.subr.mxu0 0.0
    %2019 = vmatpush2.msra.mxu0 0.0
    %2020 = vmatprep.subr.mxu0 0.0
    %2021 = vmatpush2.msra.mxu0 0.0
    %2022 = vmatprep.subr.mxu0 0.0
    %2023 = vmatpush2.msra.mxu0 0.0
    %2024 = vmatprep.subr.mxu0 0.0
    %2025 = vmatpush2.msra.mxu0 0.0
    %2026 = vmatprep.mubr.f32.mxu0 0.0
    %2027 = vmatmul.mubr.f32.gmra.mxu0 %v653
    %v2028 = vpop.f32.mrf.mxu0
    %v2029 = vadd.f32 0.0, %v2028
    %v2030 = vpop.f32.mrf.mxu0
    %v2031 = vadd.f32 0.0, %v2030
    %2032 = vmatprep.mubr.f32.mxu0 0.0
    %2033 = vmatmul.mubr.f32.gmra.mxu0 %v656
    %v2034 = vpop.f32.mrf.mxu0
    %v2035 = vadd.f32 0.0, %v2034
    %v2036 = vpop.f32.mrf.mxu0
    %v2037 = vadd.f32 0.0, %v2036
    %2038 = vmatprep.mubr.f32.mxu0 0.0
    %2039 = vmatmul.mubr.f32.gmra.mxu0 %v659
    %v2040 = vpop.f32.mrf.mxu0
    %v2041 = vadd.f32 0.0, %v2040
    %v2042 = vpop.f32.mrf.mxu0
    %v2043 = vadd.f32 0.0, %v2042
    %2044 = vmatprep.mubr.f32.mxu0 0.0
    %2045 = vmatmul.mubr.f32.gmra.mxu0 %v662
    %v2046 = vpop.f32.mrf.mxu0
    %v2047 = vadd.f32 0.0, %v2046
    %v2048 = vpop.f32.mrf.mxu0
    %v2049 = vadd.f32 0.0, %v2048
    %2050 = vmatprep.mubr.f32.mxu0 0.0
    %2051 = vmatmul.mubr.f32.gmra.mxu0 %v665
    %v2052 = vpop.f32.mrf.mxu0
    %v2053 = vadd.f32 0.0, %v2052
    %v2054 = vpop.f32.mrf.mxu0
    %v2055 = vadd.f32 0.0, %v2054
    %2056 = vmatprep.mubr.f32.mxu0 0.0
    %2057 = vmatmul.mubr.f32.gmra.mxu0 %v668
    %v2058 = vpop.f32.mrf.mxu0
    %v2059 = vadd.f32 0.0, %v2058
    %v2060 = vpop.f32.mrf.mxu0
    %v2061 = vadd.f32 0.0, %v2060
    %2062 = vdwg.mxu0
    %2063 = vmatprep.subr.mxu0 0.0
    %2064 = vmatpush1.msra.mxu0 0.0
    %2065 = vmatprep.subr.mxu0 0.0
    %2066 = vmatpush1.msra.mxu0 0.0
    %2067 = vmatprep.subr.mxu0 0.0
    %2068 = vmatpush1.msra.mxu0 0.0
    %2069 = vmatprep.subr.mxu0 0.0
    %2070 = vmatpush1.msra.mxu0 0.0
    %2071 = vmatprep.subr.mxu0 0.0
    %2072 = vmatpush1.msra.mxu0 0.0
    %2073 = vmatprep.subr.mxu0 0.0
    %2074 = vmatpush1.msra.mxu0 0.0
    %2075 = vmatprep.subr.mxu0 0.0
    %2076 = vmatpush1.msra.mxu0 0.0
    %2077 = vmatprep.subr.mxu0 0.0
    %2078 = vmatpush1.msra.mxu0 0.0
    %2079 = vmatprep.subr.mxu0 0.0
    %2080 = vmatpush1.msra.mxu0 0.0
    %2081 = vmatprep.subr.mxu0 0.0
    %2082 = vmatpush1.msra.mxu0 0.0
    %2083 = vmatprep.subr.mxu0 0.0
    %2084 = vmatpush1.msra.mxu0 0.0
    %2085 = vmatprep.subr.mxu0 0.0
    %2086 = vmatpush1.msra.mxu0 0.0
    %2087 = vmatprep.subr.mxu0 %v227
    %2088 = vmatpush1.msra.mxu0 %v224
    %2089 = vmatprep.subr.mxu0 %v59
    %2090 = vmatpush1.msra.mxu0 %v58
    %2091 = vmatprep.subr.mxu0 %v57
    %2092 = vmatpush1.msra.mxu0 %v56
    %2093 = vmatprep.subr.mxu0 %v55
    %2094 = vmatpush1.msra.mxu0 %v54
    %2095 = vmatprep.subr.mxu0 0.0
    %2096 = vmatpush2.msra.mxu0 0.0
    %2097 = vmatprep.subr.mxu0 0.0
    %2098 = vmatpush2.msra.mxu0 0.0
    %2099 = vmatprep.subr.mxu0 0.0
    %2100 = vmatpush2.msra.mxu0 0.0
    %2101 = vmatprep.subr.mxu0 0.0
    %2102 = vmatpush2.msra.mxu0 0.0
    %2103 = vmatprep.subr.mxu0 0.0
    %2104 = vmatpush2.msra.mxu0 0.0
    %2105 = vmatprep.subr.mxu0 0.0
    %2106 = vmatpush2.msra.mxu0 0.0
    %2107 = vmatprep.subr.mxu0 0.0
    %2108 = vmatpush2.msra.mxu0 0.0
    %2109 = vmatprep.subr.mxu0 0.0
    %2110 = vmatpush2.msra.mxu0 0.0
    %2111 = vmatprep.subr.mxu0 0.0
    %2112 = vmatpush2.msra.mxu0 0.0
    %2113 = vmatprep.subr.mxu0 0.0
    %2114 = vmatpush2.msra.mxu0 0.0
    %2115 = vmatprep.subr.mxu0 0.0
    %2116 = vmatpush2.msra.mxu0 0.0
    %2117 = vmatprep.subr.mxu0 0.0
    %2118 = vmatpush2.msra.mxu0 0.0
    %2119 = vmatprep.subr.mxu0 0.0
    %2120 = vmatpush2.msra.mxu0 0.0
    %2121 = vmatprep.subr.mxu0 0.0
    %2122 = vmatpush2.msra.mxu0 0.0
    %2123 = vmatprep.subr.mxu0 0.0
    %2124 = vmatpush2.msra.mxu0 0.0
    %2125 = vmatprep.subr.mxu0 0.0
    %2126 = vmatpush2.msra.mxu0 0.0
    %2127 = vmatprep.mubr.f32.mxu0 0.0
    %2128 = vmatmul.mubr.f32.gmra.mxu0 %v500
    %v2129 = vpop.f32.mrf.mxu0
    %v2130 = vadd.f32 %v2029, %v2129
    %v2131 = vpop.f32.mrf.mxu0
    %v2132 = vadd.f32 %v2031, %v2131
    %2133 = vmatprep.mubr.f32.mxu0 0.0
    %2134 = vmatmul.mubr.f32.gmra.mxu0 %v503
    %v2135 = vpop.f32.mrf.mxu0
    %v2136 = vadd.f32 %v2035, %v2135
    %v2137 = vpop.f32.mrf.mxu0
    %v2138 = vadd.f32 %v2037, %v2137
    %2139 = vmatprep.mubr.f32.mxu0 0.0
    %2140 = vmatmul.mubr.f32.gmra.mxu0 %v506
    %v2141 = vpop.f32.mrf.mxu0
    %v2142 = vadd.f32 %v2041, %v2141
    %v2143 = vpop.f32.mrf.mxu0
    %v2144 = vadd.f32 %v2043, %v2143
    %2145 = vmatprep.mubr.f32.mxu0 0.0
    %2146 = vmatmul.mubr.f32.gmra.mxu0 %v509
    %v2147 = vpop.f32.mrf.mxu0
    %v2148 = vadd.f32 %v2047, %v2147
    %v2149 = vpop.f32.mrf.mxu0
    %v2150 = vadd.f32 %v2049, %v2149
    %2151 = vmatprep.mubr.f32.mxu0 0.0
    %2152 = vmatmul.mubr.f32.gmra.mxu0 %v512
    %v2153 = vpop.f32.mrf.mxu0
    %v2154 = vadd.f32 %v2053, %v2153
    %v2155 = vpop.f32.mrf.mxu0
    %v2156 = vadd.f32 %v2055, %v2155
    %2157 = vmatprep.mubr.f32.mxu0 0.0
    %2158 = vmatmul.mubr.f32.gmra.mxu0 %v515
    %v2159 = vpop.f32.mrf.mxu0
    %v2160 = vadd.f32 %v2059, %v2159
    %v2161 = vpop.f32.mrf.mxu0
    %v2162 = vadd.f32 %v2061, %v2161
    %2163 = vdwg.mxu0
    %2164 = vmatprep.subr.mxu0 0.0
    %2165 = vmatpush1.msra.mxu0 0.0
    %2166 = vmatprep.subr.mxu0 0.0
    %2167 = vmatpush1.msra.mxu0 0.0
    %2168 = vmatprep.subr.mxu0 0.0
    %2169 = vmatpush1.msra.mxu0 0.0
    %2170 = vmatprep.subr.mxu0 0.0
    %2171 = vmatpush1.msra.mxu0 0.0
    %2172 = vmatprep.subr.mxu0 0.0
    %2173 = vmatpush1.msra.mxu0 0.0
    %2174 = vmatprep.subr.mxu0 0.0
    %2175 = vmatpush1.msra.mxu0 0.0
    %2176 = vmatprep.subr.mxu0 0.0
    %2177 = vmatpush1.msra.mxu0 0.0
    %2178 = vmatprep.subr.mxu0 0.0
    %2179 = vmatpush1.msra.mxu0 0.0
    %2180 = vmatprep.subr.mxu0 0.0
    %2181 = vmatpush1.msra.mxu0 0.0
    %2182 = vmatprep.subr.mxu0 0.0
    %2183 = vmatpush1.msra.mxu0 0.0
    %2184 = vmatprep.subr.mxu0 0.0
    %2185 = vmatpush1.msra.mxu0 0.0
    %2186 = vmatprep.subr.mxu0 0.0
    %2187 = vmatpush1.msra.mxu0 0.0
    %2188 = vmatprep.subr.mxu0 %v368
    %2189 = vmatpush1.msra.mxu0 %v365
    %2190 = vmatprep.subr.mxu0 %v343
    %2191 = vmatpush1.msra.mxu0 %v342
    %2192 = vmatprep.subr.mxu0 %v341
    %2193 = vmatpush1.msra.mxu0 %v340
    %2194 = vmatprep.subr.mxu0 %v339
    %2195 = vmatpush1.msra.mxu0 %v338
    %2196 = vmatprep.subr.mxu0 0.0
    %2197 = vmatpush2.msra.mxu0 0.0
    %2198 = vmatprep.subr.mxu0 0.0
    %2199 = vmatpush2.msra.mxu0 0.0
    %2200 = vmatprep.subr.mxu0 0.0
    %2201 = vmatpush2.msra.mxu0 0.0
    %2202 = vmatprep.subr.mxu0 0.0
    %2203 = vmatpush2.msra.mxu0 0.0
    %2204 = vmatprep.subr.mxu0 0.0
    %2205 = vmatpush2.msra.mxu0 0.0
    %2206 = vmatprep.subr.mxu0 0.0
    %2207 = vmatpush2.msra.mxu0 0.0
    %2208 = vmatprep.subr.mxu0 0.0
    %2209 = vmatpush2.msra.mxu0 0.0
    %2210 = vmatprep.subr.mxu0 0.0
    %2211 = vmatpush2.msra.mxu0 0.0
    %2212 = vmatprep.subr.mxu0 0.0
    %2213 = vmatpush2.msra.mxu0 0.0
    %2214 = vmatprep.subr.mxu0 0.0
    %2215 = vmatpush2.msra.mxu0 0.0
    %2216 = vmatprep.subr.mxu0 0.0
    %2217 = vmatpush2.msra.mxu0 0.0
    %2218 = vmatprep.subr.mxu0 0.0
    %2219 = vmatpush2.msra.mxu0 0.0
    %2220 = vmatprep.subr.mxu0 0.0
    %2221 = vmatpush2.msra.mxu0 0.0
    %2222 = vmatprep.subr.mxu0 0.0
    %2223 = vmatpush2.msra.mxu0 0.0
    %2224 = vmatprep.subr.mxu0 0.0
    %2225 = vmatpush2.msra.mxu0 0.0
    %2226 = vmatprep.subr.mxu0 0.0
    %2227 = vmatpush2.msra.mxu0 0.0
    %2228 = vmatprep.mubr.f32.mxu0 0.0
    %2229 = vmatmul.mubr.f32.gmra.mxu0 %v1231
    %v2230 = vpop.f32.mrf.mxu0
    %v2231 = vadd.f32 0.0, %v2230
    %v2232 = vpop.f32.mrf.mxu0
    %v2233 = vadd.f32 0.0, %v2232
    %2234 = vmatprep.mubr.f32.mxu0 0.0
    %2235 = vmatmul.mubr.f32.gmra.mxu0 %v1234
    %v2236 = vpop.f32.mrf.mxu0
    %v2237 = vadd.f32 0.0, %v2236
    %v2238 = vpop.f32.mrf.mxu0
    %v2239 = vadd.f32 0.0, %v2238
    %2240 = vmatprep.mubr.f32.mxu0 0.0
    %2241 = vmatmul.mubr.f32.gmra.mxu0 %v1237
    %v2242 = vpop.f32.mrf.mxu0
    %v2243 = vadd.f32 0.0, %v2242
    %v2244 = vpop.f32.mrf.mxu0
    %v2245 = vadd.f32 0.0, %v2244
    %2246 = vmatprep.mubr.f32.mxu0 0.0
    %2247 = vmatmul.mubr.f32.gmra.mxu0 %v1240
    %v2248 = vpop.f32.mrf.mxu0
    %v2249 = vadd.f32 0.0, %v2248
    %v2250 = vpop.f32.mrf.mxu0
    %v2251 = vadd.f32 0.0, %v2250
    %2252 = vmatprep.mubr.f32.mxu0 0.0
    %2253 = vmatmul.mubr.f32.gmra.mxu0 %v1243
    %v2254 = vpop.f32.mrf.mxu0
    %v2255 = vadd.f32 0.0, %v2254
    %v2256 = vpop.f32.mrf.mxu0
    %v2257 = vadd.f32 0.0, %v2256
    %2258 = vmatprep.mubr.f32.mxu0 0.0
    %2259 = vmatmul.mubr.f32.gmra.mxu0 %v1246
    %v2260 = vpop.f32.mrf.mxu0
    %v2261 = vadd.f32 0.0, %v2260
    %v2262 = vpop.f32.mrf.mxu0
    %v2263 = vadd.f32 0.0, %v2262
    %2264 = vdwg.mxu0
    %v2265 = vadd.f32 %v2130, %v2231
    %v2266 = vadd.f32 %v2132, %v2233
    %v2267 = vadd.f32 %v2136, %v2237
    %v2268 = vadd.f32 %v2138, %v2239
    %v2269 = vadd.f32 %v2142, %v2243
    %v2270 = vadd.f32 %v2144, %v2245
    %v2271 = vadd.f32 %v2148, %v2249
    %v2272 = vadd.f32 %v2150, %v2251
    %v2273 = vadd.f32 %v2154, %v2255
    %v2274 = vadd.f32 %v2156, %v2257
    %v2275 = vadd.f32 %v2160, %v2261
    %v2276 = vadd.f32 %v2162, %v2263
    %2277 = vmatprep.subr.mxu0 0.0
    %2278 = vmatpush1.msra.mxu0 0.0
    %2279 = vmatprep.subr.mxu0 0.0
    %2280 = vmatpush1.msra.mxu0 0.0
    %2281 = vmatprep.subr.mxu0 0.0
    %2282 = vmatpush1.msra.mxu0 0.0
    %2283 = vmatprep.subr.mxu0 0.0
    %2284 = vmatpush1.msra.mxu0 0.0
    %2285 = vmatprep.subr.mxu0 0.0
    %2286 = vmatpush1.msra.mxu0 0.0
    %2287 = vmatprep.subr.mxu0 0.0
    %2288 = vmatpush1.msra.mxu0 0.0
    %2289 = vmatprep.subr.mxu0 0.0
    %2290 = vmatpush1.msra.mxu0 0.0
    %2291 = vmatprep.subr.mxu0 0.0
    %2292 = vmatpush1.msra.mxu0 0.0
    %2293 = vmatprep.subr.mxu0 0.0
    %2294 = vmatpush1.msra.mxu0 0.0
    %2295 = vmatprep.subr.mxu0 0.0
    %2296 = vmatpush1.msra.mxu0 0.0
    %2297 = vmatprep.subr.mxu0 0.0
    %2298 = vmatpush1.msra.mxu0 0.0
    %2299 = vmatprep.subr.mxu0 0.0
    %2300 = vmatpush1.msra.mxu0 0.0
    %2301 = vmatprep.subr.mxu0 %v521
    %2302 = vmatpush1.msra.mxu0 %v518
    %2303 = vmatprep.subr.mxu0 %v496
    %2304 = vmatpush1.msra.mxu0 %v495
    %2305 = vmatprep.subr.mxu0 %v494
    %2306 = vmatpush1.msra.mxu0 %v493
    %2307 = vmatprep.subr.mxu0 %v492
    %2308 = vmatpush1.msra.mxu0 %v491
    %2309 = vmatprep.subr.mxu0 0.0
    %2310 = vmatpush2.msra.mxu0 0.0
    %2311 = vmatprep.subr.mxu0 0.0
    %2312 = vmatpush2.msra.mxu0 0.0
    %2313 = vmatprep.subr.mxu0 0.0
    %2314 = vmatpush2.msra.mxu0 0.0
    %2315 = vmatprep.subr.mxu0 0.0
    %2316 = vmatpush2.msra.mxu0 0.0
    %2317 = vmatprep.subr.mxu0 0.0
    %2318 = vmatpush2.msra.mxu0 0.0
    %2319 = vmatprep.subr.mxu0 0.0
    %2320 = vmatpush2.msra.mxu0 0.0
    %2321 = vmatprep.subr.mxu0 0.0
    %2322 = vmatpush2.msra.mxu0 0.0
    %2323 = vmatprep.subr.mxu0 0.0
    %2324 = vmatpush2.msra.mxu0 0.0
    %2325 = vmatprep.subr.mxu0 0.0
    %2326 = vmatpush2.msra.mxu0 0.0
    %2327 = vmatprep.subr.mxu0 0.0
    %2328 = vmatpush2.msra.mxu0 0.0
    %2329 = vmatprep.subr.mxu0 0.0
    %2330 = vmatpush2.msra.mxu0 0.0
    %2331 = vmatprep.subr.mxu0 0.0
    %2332 = vmatpush2.msra.mxu0 0.0
    %2333 = vmatprep.subr.mxu0 0.0
    %2334 = vmatpush2.msra.mxu0 0.0
    %2335 = vmatprep.subr.mxu0 0.0
    %2336 = vmatpush2.msra.mxu0 0.0
    %2337 = vmatprep.subr.mxu0 0.0
    %2338 = vmatpush2.msra.mxu0 0.0
    %2339 = vmatprep.subr.mxu0 0.0
    %2340 = vmatpush2.msra.mxu0 0.0
    %2341 = vmatprep.mubr.f32.mxu0 0.0
    %2342 = vmatmul.mubr.f32.gmra.mxu0 %v1826
    %v2343 = vpop.f32.mrf.mxu0
    %v2344 = vadd.f32 0.0, %v2343
    %v2345 = vpop.f32.mrf.mxu0
    %v2346 = vadd.f32 0.0, %v2345
    %2347 = vmatprep.mubr.f32.mxu0 0.0
    %2348 = vmatmul.mubr.f32.gmra.mxu0 %v1829
    %v2349 = vpop.f32.mrf.mxu0
    %v2350 = vadd.f32 0.0, %v2349
    %v2351 = vpop.f32.mrf.mxu0
    %v2352 = vadd.f32 0.0, %v2351
    %2353 = vmatprep.mubr.f32.mxu0 0.0
    %2354 = vmatmul.mubr.f32.gmra.mxu0 %v1832
    %v2355 = vpop.f32.mrf.mxu0
    %v2356 = vadd.f32 0.0, %v2355
    %v2357 = vpop.f32.mrf.mxu0
    %v2358 = vadd.f32 0.0, %v2357
    %2359 = vmatprep.mubr.f32.mxu0 0.0
    %2360 = vmatmul.mubr.f32.gmra.mxu0 %v1835
    %v2361 = vpop.f32.mrf.mxu0
    %v2362 = vadd.f32 0.0, %v2361
    %v2363 = vpop.f32.mrf.mxu0
    %v2364 = vadd.f32 0.0, %v2363
    %2365 = vmatprep.mubr.f32.mxu0 0.0
    %2366 = vmatmul.mubr.f32.gmra.mxu0 %v1838
    %v2367 = vpop.f32.mrf.mxu0
    %v2368 = vadd.f32 0.0, %v2367
    %v2369 = vpop.f32.mrf.mxu0
    %v2370 = vadd.f32 0.0, %v2369
    %2371 = vmatprep.mubr.f32.mxu0 0.0
    %2372 = vmatmul.mubr.f32.gmra.mxu0 %v1841
    %v2373 = vpop.f32.mrf.mxu0
    %v2374 = vadd.f32 0.0, %v2373
    %v2375 = vpop.f32.mrf.mxu0
    %v2376 = vadd.f32 0.0, %v2375
    %2377 = vdwg.mxu0
    %v2378 = vadd.f32 %v2265, %v2344
    %v2379 = vadd.f32 %v2266, %v2346
    %v2380 = vadd.f32 %v2267, %v2350
    %v2381 = vadd.f32 %v2268, %v2352
    %v2382 = vadd.f32 %v2269, %v2356
    %v2383 = vadd.f32 %v2270, %v2358
    %v2384 = vadd.f32 %v2271, %v2362
    %v2385 = vadd.f32 %v2272, %v2364
    %v2386 = vadd.f32 %v2273, %v2368
    %v2387 = vadd.f32 %v2274, %v2370
    %v2388 = vadd.f32 %v2275, %v2374
    %v2389 = vadd.f32 %v2276, %v2376
    %s2390 = scalar_lea.vmem %s0, 176
    %v2391 = vld [vmem:[%s2390] sm:$0xff]
    %v2392 = vld [vmem:[%s2390 + $0x8] sm:$0xff]
    %v2393 = vld [vmem:[%s2390 + $0x10] sm:$0xff]
    %v2394 = vld [vmem:[%s2390 + $0x18] sm:$0xff]
    %v2395 = vld [vmem:[%s2390 + $0x20] sm:$0xff]
    %v2396 = vld [vmem:[%s2390 + $0x28] sm:$0xff]
    %v2398 = vsel %vm78, %v2391, 0
    %v2401 = vsel %vm78, %v2392, 0
    %v2404 = vsel %vm78, %v2393, 0
    %v2407 = vsel %vm78, %v2394, 0
    %v2410 = vsel %vm78, %v2395, 0
    %v2413 = vsel %vm78, %v2396, 0
    %2415 = vmatprep.subr.mxu0 0.0
    %2416 = vmatpush1.msra.mxu0 0.0
    %2417 = vmatprep.subr.mxu0 0.0
    %2418 = vmatpush1.msra.mxu0 0.0
    %2419 = vmatprep.subr.mxu0 0.0
    %2420 = vmatpush1.msra.mxu0 0.0
    %2421 = vmatprep.subr.mxu0 0.0
    %2422 = vmatpush1.msra.mxu0 0.0
    %2423 = vmatprep.subr.mxu0 0.0
    %2424 = vmatpush1.msra.mxu0 0.0
    %2425 = vmatprep.subr.mxu0 0.0
    %2426 = vmatpush1.msra.mxu0 0.0
    %2427 = vmatprep.subr.mxu0 0.0
    %2428 = vmatpush1.msra.mxu0 0.0
    %2429 = vmatprep.subr.mxu0 0.0
    %2430 = vmatpush1.msra.mxu0 0.0
    %2431 = vmatprep.subr.mxu0 0.0
    %2432 = vmatpush1.msra.mxu0 0.0
    %2433 = vmatprep.subr.mxu0 0.0
    %2434 = vmatpush1.msra.mxu0 0.0
    %2435 = vmatprep.subr.mxu0 0.0
    %2436 = vmatpush1.msra.mxu0 0.0
    %2437 = vmatprep.subr.mxu0 0.0
    %2438 = vmatpush1.msra.mxu0 0.0
    %2439 = vmatprep.subr.mxu0 %v674
    %2440 = vmatpush1.msra.mxu0 %v671
    %2441 = vmatprep.subr.mxu0 %v649
    %2442 = vmatpush1.msra.mxu0 %v648
    %2443 = vmatprep.subr.mxu0 %v647
    %2444 = vmatpush1.msra.mxu0 %v646
    %2445 = vmatprep.subr.mxu0 %v645
    %2446 = vmatpush1.msra.mxu0 %v644
    %2447 = vmatprep.subr.mxu0 0.0
    %2448 = vmatpush2.msra.mxu0 0.0
    %2449 = vmatprep.subr.mxu0 0.0
    %2450 = vmatpush2.msra.mxu0 0.0
    %2451 = vmatprep.subr.mxu0 0.0
    %2452 = vmatpush2.msra.mxu0 0.0
    %2453 = vmatprep.subr.mxu0 0.0
    %2454 = vmatpush2.msra.mxu0 0.0
    %2455 = vmatprep.subr.mxu0 0.0
    %2456 = vmatpush2.msra.mxu0 0.0
    %2457 = vmatprep.subr.mxu0 0.0
    %2458 = vmatpush2.msra.mxu0 0.0
    %2459 = vmatprep.subr.mxu0 0.0
    %2460 = vmatpush2.msra.mxu0 0.0
    %2461 = vmatprep.subr.mxu0 0.0
    %2462 = vmatpush2.msra.mxu0 0.0
    %2463 = vmatprep.subr.mxu0 0.0
    %2464 = vmatpush2.msra.mxu0 0.0
    %2465 = vmatprep.subr.mxu0 0.0
    %2466 = vmatpush2.msra.mxu0 0.0
    %2467 = vmatprep.subr.mxu0 0.0
    %2468 = vmatpush2.msra.mxu0 0.0
    %2469 = vmatprep.subr.mxu0 0.0
    %2470 = vmatpush2.msra.mxu0 0.0
    %2471 = vmatprep.subr.mxu0 0.0
    %2472 = vmatpush2.msra.mxu0 0.0
    %2473 = vmatprep.subr.mxu0 0.0
    %2474 = vmatpush2.msra.mxu0 0.0
    %2475 = vmatprep.subr.mxu0 0.0
    %2476 = vmatpush2.msra.mxu0 0.0
    %2477 = vmatprep.subr.mxu0 0.0
    %2478 = vmatpush2.msra.mxu0 0.0
    %2479 = vmatprep.mubr.f32.mxu0 0.0
    %2480 = vmatmul.mubr.f32.gmra.mxu0 %v2398
    %v2481 = vpop.f32.mrf.mxu0
    %v2482 = vadd.f32 0.0, %v2481
    %v2483 = vpop.f32.mrf.mxu0
    %v2484 = vadd.f32 0.0, %v2483
    %2485 = vmatprep.mubr.f32.mxu0 0.0
    %2486 = vmatmul.mubr.f32.gmra.mxu0 %v2401
    %v2487 = vpop.f32.mrf.mxu0
    %v2488 = vadd.f32 0.0, %v2487
    %v2489 = vpop.f32.mrf.mxu0
    %v2490 = vadd.f32 0.0, %v2489
    %2491 = vmatprep.mubr.f32.mxu0 0.0
    %2492 = vmatmul.mubr.f32.gmra.mxu0 %v2404
    %v2493 = vpop.f32.mrf.mxu0
    %v2494 = vadd.f32 0.0, %v2493
    %v2495 = vpop.f32.mrf.mxu0
    %v2496 = vadd.f32 0.0, %v2495
    %2497 = vmatprep.mubr.f32.mxu0 0.0
    %2498 = vmatmul.mubr.f32.gmra.mxu0 %v2407
    %v2499 = vpop.f32.mrf.mxu0
    %v2500 = vadd.f32 0.0, %v2499
    %v2501 = vpop.f32.mrf.mxu0
    %v2502 = vadd.f32 0.0, %v2501
    %2503 = vmatprep.mubr.f32.mxu0 0.0
    %2504 = vmatmul.mubr.f32.gmra.mxu0 %v2410
    %v2505 = vpop.f32.mrf.mxu0
    %v2506 = vadd.f32 0.0, %v2505
    %v2507 = vpop.f32.mrf.mxu0
    %v2508 = vadd.f32 0.0, %v2507
    %2509 = vmatprep.mubr.f32.mxu0 0.0
    %2510 = vmatmul.mubr.f32.gmra.mxu0 %v2413
    %v2511 = vpop.f32.mrf.mxu0
    %v2512 = vadd.f32 0.0, %v2511
    %v2513 = vpop.f32.mrf.mxu0
    %v2514 = vadd.f32 0.0, %v2513
    %2515 = vdwg.mxu0
    %v2516 = vadd.f32 %v2378, %v2482
    %v2517 = vadd.f32 %v2379, %v2484
    %v2518 = vadd.f32 %v2380, %v2488
    %v2519 = vadd.f32 %v2381, %v2490
    %v2520 = vadd.f32 %v2382, %v2494
    %v2521 = vadd.f32 %v2383, %v2496
    %v2522 = vadd.f32 %v2384, %v2500
    %v2523 = vadd.f32 %v2385, %v2502
    %v2524 = vadd.f32 %v2386, %v2506
    %v2525 = vadd.f32 %v2387, %v2508
    %v2526 = vadd.f32 %v2388, %v2512
    %v2527 = vadd.f32 %v2389, %v2514
    %v2528 = vmax.f32 %v2516, %v2517
    %v2529 = vmax.f32 %v2518, %v2519
    %v2530 = vmax.f32 %v2520, %v2521
    %v2531 = vmax.f32 %v2522, %v2523
    %v2532 = vmax.f32 %v2524, %v2525
    %v2533 = vmax.f32 %v2526, %v2527
    %v2534 = vmax.f32 %v1956, %v2528
    %v2535 = vmax.f32 %v1957, %v2529
    %v2536 = vmax.f32 %v1958, %v2530
    %v2537 = vmax.f32 %v1959, %v2531
    %v2538 = vmax.f32 %v1960, %v2532
    %v2539 = vmax.f32 %v1961, %v2533
    %v2540 = vadd.f32 %v2534, %v1377
    %v2541 = vadd.f32 %v2535, %v1377
    %v2542 = vadd.f32 %v2536, %v1377
    %v2543 = vadd.f32 %v2537, %v1377
    %v2544 = vadd.f32 %v2538, %v1377
    %v2545 = vadd.f32 %v2539, %v1377
    %v2546 = vmax.f32 %v2540, 0.0
    %v2547 = vmax.f32 %v2541, 0.0
    %v2548 = vmax.f32 %v2542, 0.0
    %v2549 = vmax.f32 %v2543, 0.0
    %v2550 = vmax.f32 %v2544, 0.0
    %v2551 = vmax.f32 %v2545, 0.0
    %v2552 = vld [vmem:[#allocation4] sm:$0xff]
    %v2553 = vld [vmem:[#allocation4 + $0x8] sm:$0xff]
    %v2554 = vld [vmem:[#allocation4 + $0x10] sm:$0xff]
    %v2555 = vld [vmem:[#allocation4 + $0x18] sm:$0xff]
    %v2556 = vld [vmem:[#allocation4 + $0x20] sm:$0xff]
    %v2557 = vld [vmem:[#allocation4 + $0x28] sm:$0xff]
    %v2558 = vld [vmem:[#allocation4 + $0x30] sm:$0xff]
    %v2559 = vld [vmem:[#allocation4 + $0x38] sm:$0xff]
    %v2560 = vld [vmem:[#allocation4 + $0x40] sm:$0xff]
    %v2561 = vld [vmem:[#allocation4 + $0x48] sm:$0xff]
    %v2562 = vld [vmem:[#allocation4 + $0x50] sm:$0xff]
    %v2563 = vld [vmem:[#allocation4 + $0x58] sm:$0xff]
    %v2564 = vld [vmem:[#allocation4 + $0x60] sm:$0xff]
    %v2565 = vld [vmem:[#allocation4 + $0x68] sm:$0xff]
    %v2566 = vld [vmem:[#allocation4 + $0x70] sm:$0xff]
    %v2567 = vld [vmem:[#allocation4 + $0x78] sm:$0xff]
    %v2568 = vld [vmem:[#allocation4 + $0x80] sm:$0xff]
    %v2569 = vld [vmem:[#allocation4 + $0x88] sm:$0xff]
    %v2570 = vld [vmem:[#allocation4 + $0x90] sm:$0xff]
    %v2571 = vld [vmem:[#allocation4 + $0x98] sm:$0xff]
    %v2572 = vld [vmem:[#allocation4 + $0xa0] sm:$0xff]
    %v2573 = vld [vmem:[#allocation4 + $0xa8] sm:$0xff]
    %v2574 = vld [vmem:[#allocation4 + $0xb0] sm:$0xff]
    %v2575 = vld [vmem:[#allocation4 + $0xb8] sm:$0xff]
    %v2576 = vld [vmem:[#allocation4 + $0xc0] sm:$0xff]
    %v2577 = vld [vmem:[#allocation4 + $0xc8] sm:$0xff]
    %v2578 = vld [vmem:[#allocation4 + $0xd0] sm:$0xff]
    %v2579 = vld [vmem:[#allocation4 + $0xd8] sm:$0xff]
    %v2580 = vld [vmem:[#allocation4 + $0xe0] sm:$0xff]
    %v2581 = vld [vmem:[#allocation4 + $0xe8] sm:$0xff]
    %v2582 = vld [vmem:[#allocation4 + $0xf0] sm:$0xff]
    %v2583 = vld [vmem:[#allocation4 + $0xf8] sm:$0xff]
    %s2584 = scalar_lea.vmem [#allocation4], 256
    %v2585 = vld [vmem:[%s2584] sm:$0xff]
    %v2586 = vld [vmem:[%s2584 + $0x8] sm:$0xff]
    %v2587 = vld [vmem:[%s2584 + $0x10] sm:$0xff]
    %v2588 = vld [vmem:[%s2584 + $0x18] sm:$0xff]
    %v2589 = vld [vmem:[%s2584 + $0x20] sm:$0xff]
    %v2590 = vld [vmem:[%s2584 + $0x28] sm:$0xff]
    %v2591 = vld [vmem:[%s2584 + $0x30] sm:$0xff]
    %v2592 = vld [vmem:[%s2584 + $0x38] sm:$0xff]
    %v2593 = vld [vmem:[%s2584 + $0x40] sm:$0xff]
    %v2594 = vld [vmem:[%s2584 + $0x48] sm:$0xff]
    %v2595 = vld [vmem:[%s2584 + $0x50] sm:$0xff]
    %v2596 = vld [vmem:[%s2584 + $0x58] sm:$0xff]
    %v2597 = vld [vmem:[%s2584 + $0x60] sm:$0xff]
    %v2598 = vld [vmem:[%s2584 + $0x68] sm:$0xff]
    %v2599 = vld [vmem:[%s2584 + $0x70] sm:$0xff]
    %v2600 = vld [vmem:[%s2584 + $0x78] sm:$0xff]
    %v2601 = vld [vmem:[%s2584 + $0x80] sm:$0xff]
    %v2602 = vld [vmem:[%s2584 + $0x88] sm:$0xff]
    %v2603 = vld [vmem:[%s2584 + $0x90] sm:$0xff]
    %v2604 = vld [vmem:[%s2584 + $0x98] sm:$0xff]
    %v2605 = vld [vmem:[%s2584 + $0xa0] sm:$0xff]
    %v2606 = vld [vmem:[%s2584 + $0xa8] sm:$0xff]
    %v2607 = vld [vmem:[%s2584 + $0xb0] sm:$0xff]
    %v2608 = vld [vmem:[%s2584 + $0xb8] sm:$0xff]
    %v2609 = vld [vmem:[%s2584 + $0xc0] sm:$0xff]
    %v2610 = vld [vmem:[%s2584 + $0xc8] sm:$0xff]
    %v2611 = vld [vmem:[%s2584 + $0xd0] sm:$0xff]
    %v2612 = vld [vmem:[%s2584 + $0xd8] sm:$0xff]
    %v2613 = vld [vmem:[%s2584 + $0xe0] sm:$0xff]
    %v2614 = vld [vmem:[%s2584 + $0xe8] sm:$0xff]
    %v2615 = vld [vmem:[%s2584 + $0xf0] sm:$0xff]
    %v2616 = vld [vmem:[%s2584 + $0xf8] sm:$0xff]
    %2617 = vmatprep.subr.mxu0 %v2616
    %2618 = vmatpush1.msra.mxu0 %v2615
    %2619 = vmatprep.subr.mxu0 %v2614
    %2620 = vmatpush1.msra.mxu0 %v2613
    %2621 = vmatprep.subr.mxu0 %v2612
    %2622 = vmatpush1.msra.mxu0 %v2611
    %2623 = vmatprep.subr.mxu0 %v2610
    %2624 = vmatpush1.msra.mxu0 %v2609
    %2625 = vmatprep.subr.mxu0 %v2608
    %2626 = vmatpush1.msra.mxu0 %v2607
    %2627 = vmatprep.subr.mxu0 %v2606
    %2628 = vmatpush1.msra.mxu0 %v2605
    %2629 = vmatprep.subr.mxu0 %v2604
    %2630 = vmatpush1.msra.mxu0 %v2603
    %2631 = vmatprep.subr.mxu0 %v2602
    %2632 = vmatpush1.msra.mxu0 %v2601
    %2633 = vmatprep.subr.mxu0 %v2600
    %2634 = vmatpush1.msra.mxu0 %v2599
    %2635 = vmatprep.subr.mxu0 %v2598
    %2636 = vmatpush1.msra.mxu0 %v2597
    %2637 = vmatprep.subr.mxu0 %v2596
    %2638 = vmatpush1.msra.mxu0 %v2595
    %2639 = vmatprep.subr.mxu0 %v2594
    %2640 = vmatpush1.msra.mxu0 %v2593
    %2641 = vmatprep.subr.mxu0 %v2592
    %2642 = vmatpush1.msra.mxu0 %v2591
    %2643 = vmatprep.subr.mxu0 %v2590
    %2644 = vmatpush1.msra.mxu0 %v2589
    %2645 = vmatprep.subr.mxu0 %v2588
    %2646 = vmatpush1.msra.mxu0 %v2587
    %2647 = vmatprep.subr.mxu0 %v2586
    %2648 = vmatpush1.msra.mxu0 %v2585
    %2649 = vmatprep.subr.mxu0 0.0
    %2650 = vmatpush2.msra.mxu0 0.0
    %2651 = vmatprep.subr.mxu0 0.0
    %2652 = vmatpush2.msra.mxu0 0.0
    %2653 = vmatprep.subr.mxu0 0.0
    %2654 = vmatpush2.msra.mxu0 0.0
    %2655 = vmatprep.subr.mxu0 0.0
    %2656 = vmatpush2.msra.mxu0 0.0
    %2657 = vmatprep.subr.mxu0 0.0
    %2658 = vmatpush2.msra.mxu0 0.0
    %2659 = vmatprep.subr.mxu0 0.0
    %2660 = vmatpush2.msra.mxu0 0.0
    %2661 = vmatprep.subr.mxu0 0.0
    %2662 = vmatpush2.msra.mxu0 0.0
    %2663 = vmatprep.subr.mxu0 0.0
    %2664 = vmatpush2.msra.mxu0 0.0
    %2665 = vmatprep.subr.mxu0 0.0
    %2666 = vmatpush2.msra.mxu0 0.0
    %2667 = vmatprep.subr.mxu0 0.0
    %2668 = vmatpush2.msra.mxu0 0.0
    %2669 = vmatprep.subr.mxu0 0.0
    %2670 = vmatpush2.msra.mxu0 0.0
    %2671 = vmatprep.subr.mxu0 0.0
    %2672 = vmatpush2.msra.mxu0 0.0
    %2673 = vmatprep.subr.mxu0 0.0
    %2674 = vmatpush2.msra.mxu0 0.0
    %2675 = vmatprep.subr.mxu0 0.0
    %2676 = vmatpush2.msra.mxu0 0.0
    %2677 = vmatprep.subr.mxu0 0.0
    %2678 = vmatpush2.msra.mxu0 0.0
    %2679 = vmatprep.subr.mxu0 0.0
    %2680 = vmatpush2.msra.mxu0 0.0
    %2681 = vmatprep.mubr.f32.mxu0 0.0
    %2682 = vmatmul.mubr.f32.gmra.mxu0 %v2546
    %v2683 = vpop.f32.mrf.mxu0
    %v2684 = vadd.f32 0.0, %v2683
    %v2685 = vpop.f32.mrf.mxu0
    %v2686 = vadd.f32 0.0, %v2685
    %2687 = vmatprep.mubr.f32.mxu0 0.0
    %2688 = vmatmul.mubr.f32.gmra.mxu0 %v2547
    %v2689 = vpop.f32.mrf.mxu0
    %v2690 = vadd.f32 0.0, %v2689
    %v2691 = vpop.f32.mrf.mxu0
    %v2692 = vadd.f32 0.0, %v2691
    %2693 = vmatprep.mubr.f32.mxu0 0.0
    %2694 = vmatmul.mubr.f32.gmra.mxu0 %v2548
    %v2695 = vpop.f32.mrf.mxu0
    %v2696 = vadd.f32 0.0, %v2695
    %v2697 = vpop.f32.mrf.mxu0
    %v2698 = vadd.f32 0.0, %v2697
    %2699 = vmatprep.mubr.f32.mxu0 0.0
    %2700 = vmatmul.mubr.f32.gmra.mxu0 %v2549
    %v2701 = vpop.f32.mrf.mxu0
    %v2702 = vadd.f32 0.0, %v2701
    %v2703 = vpop.f32.mrf.mxu0
    %v2704 = vadd.f32 0.0, %v2703
    %2705 = vdwg.mxu0
    %2706 = vmatprep.subr.mxu0 %v2583
    %2707 = vmatpush1.msra.mxu0 %v2582
    %2708 = vmatprep.subr.mxu0 %v2581
    %2709 = vmatpush1.msra.mxu0 %v2580
    %2710 = vmatprep.subr.mxu0 %v2579
    %2711 = vmatpush1.msra.mxu0 %v2578
    %2712 = vmatprep.subr.mxu0 %v2577
    %2713 = vmatpush1.msra.mxu0 %v2576
    %2714 = vmatprep.subr.mxu0 %v2575
    %2715 = vmatpush1.msra.mxu0 %v2574
    %2716 = vmatprep.subr.mxu0 %v2573
    %2717 = vmatpush1.msra.mxu0 %v2572
    %2718 = vmatprep.subr.mxu0 %v2571
    %2719 = vmatpush1.msra.mxu0 %v2570
    %2720 = vmatprep.subr.mxu0 %v2569
    %2721 = vmatpush1.msra.mxu0 %v2568
    %2722 = vmatprep.subr.mxu0 %v2567
    %2723 = vmatpush1.msra.mxu0 %v2566
    %2724 = vmatprep.subr.mxu0 %v2565
    %2725 = vmatpush1.msra.mxu0 %v2564
    %2726 = vmatprep.subr.mxu0 %v2563
    %2727 = vmatpush1.msra.mxu0 %v2562
    %2728 = vmatprep.subr.mxu0 %v2561
    %2729 = vmatpush1.msra.mxu0 %v2560
    %2730 = vmatprep.subr.mxu0 %v2559
    %2731 = vmatpush1.msra.mxu0 %v2558
    %2732 = vmatprep.subr.mxu0 %v2557
    %2733 = vmatpush1.msra.mxu0 %v2556
    %2734 = vmatprep.subr.mxu0 %v2555
    %2735 = vmatpush1.msra.mxu0 %v2554
    %2736 = vmatprep.subr.mxu0 %v2553
    %2737 = vmatpush1.msra.mxu0 %v2552
    %2738 = vmatprep.subr.mxu0 0.0
    %2739 = vmatpush2.msra.mxu0 0.0
    %2740 = vmatprep.subr.mxu0 0.0
    %2741 = vmatpush2.msra.mxu0 0.0
    %2742 = vmatprep.subr.mxu0 0.0
    %2743 = vmatpush2.msra.mxu0 0.0
    %2744 = vmatprep.subr.mxu0 0.0
    %2745 = vmatpush2.msra.mxu0 0.0
    %2746 = vmatprep.subr.mxu0 0.0
    %2747 = vmatpush2.msra.mxu0 0.0
    %2748 = vmatprep.subr.mxu0 0.0
    %2749 = vmatpush2.msra.mxu0 0.0
    %2750 = vmatprep.subr.mxu0 0.0
    %2751 = vmatpush2.msra.mxu0 0.0
    %2752 = vmatprep.subr.mxu0 0.0
    %2753 = vmatpush2.msra.mxu0 0.0
    %2754 = vmatprep.subr.mxu0 0.0
    %2755 = vmatpush2.msra.mxu0 0.0
    %2756 = vmatprep.subr.mxu0 0.0
    %2757 = vmatpush2.msra.mxu0 0.0
    %2758 = vmatprep.subr.mxu0 0.0
    %2759 = vmatpush2.msra.mxu0 0.0
    %2760 = vmatprep.subr.mxu0 0.0
    %2761 = vmatpush2.msra.mxu0 0.0
    %2762 = vmatprep.subr.mxu0 0.0
    %2763 = vmatpush2.msra.mxu0 0.0
    %2764 = vmatprep.subr.mxu0 0.0
    %2765 = vmatpush2.msra.mxu0 0.0
    %2766 = vmatprep.subr.mxu0 0.0
    %2767 = vmatpush2.msra.mxu0 0.0
    %2768 = vmatprep.subr.mxu0 0.0
    %2769 = vmatpush2.msra.mxu0 0.0
    %2770 = vmatprep.mubr.f32.mxu0 0.0
    %2771 = vmatmul.mubr.f32.gmra.mxu0 %v1384
    %v2772 = vpop.f32.mrf.mxu0
    %v2773 = vadd.f32 %v2684, %v2772
    %v2774 = vpop.f32.mrf.mxu0
    %v2775 = vadd.f32 %v2686, %v2774
    %2776 = vmatprep.mubr.f32.mxu0 0.0
    %2777 = vmatmul.mubr.f32.gmra.mxu0 %v1385
    %v2778 = vpop.f32.mrf.mxu0
    %v2779 = vadd.f32 %v2690, %v2778
    %v2780 = vpop.f32.mrf.mxu0
    %v2781 = vadd.f32 %v2692, %v2780
    %2782 = vmatprep.mubr.f32.mxu0 0.0
    %2783 = vmatmul.mubr.f32.gmra.mxu0 %v1386
    %v2784 = vpop.f32.mrf.mxu0
    %v2785 = vadd.f32 %v2696, %v2784
    %v2786 = vpop.f32.mrf.mxu0
    %v2787 = vadd.f32 %v2698, %v2786
    %2788 = vmatprep.mubr.f32.mxu0 0.0
    %2789 = vmatmul.mubr.f32.gmra.mxu0 %v1387
    %v2790 = vpop.f32.mrf.mxu0
    %v2791 = vadd.f32 %v2702, %v2790
    %v2792 = vpop.f32.mrf.mxu0
    %v2793 = vadd.f32 %v2704, %v2792
    %2794 = vdwg.mxu0
    %s2795 = scalar_lea.vmem [#allocation4], 512
    %v2796 = vld [vmem:[%s2795] sm:$0xff]
    %v2797 = vld [vmem:[%s2795 + $0x8] sm:$0xff]
    %v2798 = vld [vmem:[%s2795 + $0x10] sm:$0xff]
    %v2799 = vld [vmem:[%s2795 + $0x18] sm:$0xff]
    %v2800 = vld [vmem:[%s2795 + $0x20] sm:$0xff]
    %v2801 = vld [vmem:[%s2795 + $0x28] sm:$0xff]
    %v2802 = vld [vmem:[%s2795 + $0x30] sm:$0xff]
    %v2803 = vld [vmem:[%s2795 + $0x38] sm:$0xff]
    %v2804 = vld [vmem:[%s2795 + $0x40] sm:$0xff]
    %v2805 = vld [vmem:[%s2795 + $0x48] sm:$0xff]
    %v2806 = vld [vmem:[%s2795 + $0x50] sm:$0xff]
    %v2807 = vld [vmem:[%s2795 + $0x58] sm:$0xff]
    %v2808 = vld [vmem:[%s2795 + $0x60] sm:$0xff]
    %v2809 = vld [vmem:[%s2795 + $0x68] sm:$0xff]
    %v2810 = vld [vmem:[%s2795 + $0x70] sm:$0xff]
    %v2811 = vld [vmem:[%s2795 + $0x78] sm:$0xff]
    %v2812 = vld [vmem:[%s2795 + $0x80] sm:$0xff]
    %v2813 = vld [vmem:[%s2795 + $0x88] sm:$0xff]
    %v2814 = vld [vmem:[%s2795 + $0x90] sm:$0xff]
    %v2815 = vld [vmem:[%s2795 + $0x98] sm:$0xff]
    %v2816 = vld [vmem:[%s2795 + $0xa0] sm:$0xff]
    %v2817 = vld [vmem:[%s2795 + $0xa8] sm:$0xff]
    %v2818 = vld [vmem:[%s2795 + $0xb0] sm:$0xff]
    %v2819 = vld [vmem:[%s2795 + $0xb8] sm:$0xff]
    %v2820 = vld [vmem:[%s2795 + $0xc0] sm:$0xff]
    %v2821 = vld [vmem:[%s2795 + $0xc8] sm:$0xff]
    %v2822 = vld [vmem:[%s2795 + $0xd0] sm:$0xff]
    %v2823 = vld [vmem:[%s2795 + $0xd8] sm:$0xff]
    %v2824 = vld [vmem:[%s2795 + $0xe0] sm:$0xff]
    %v2825 = vld [vmem:[%s2795 + $0xe8] sm:$0xff]
    %v2826 = vld [vmem:[%s2795 + $0xf0] sm:$0xff]
    %v2827 = vld [vmem:[%s2795 + $0xf8] sm:$0xff]
    %2828 = vmatprep.subr.mxu0 %v2827
    %2829 = vmatpush1.msra.mxu0 %v2826
    %2830 = vmatprep.subr.mxu0 %v2825
    %2831 = vmatpush1.msra.mxu0 %v2824
    %2832 = vmatprep.subr.mxu0 %v2823
    %2833 = vmatpush1.msra.mxu0 %v2822
    %2834 = vmatprep.subr.mxu0 %v2821
    %2835 = vmatpush1.msra.mxu0 %v2820
    %2836 = vmatprep.subr.mxu0 %v2819
    %2837 = vmatpush1.msra.mxu0 %v2818
    %2838 = vmatprep.subr.mxu0 %v2817
    %2839 = vmatpush1.msra.mxu0 %v2816
    %2840 = vmatprep.subr.mxu0 %v2815
    %2841 = vmatpush1.msra.mxu0 %v2814
    %2842 = vmatprep.subr.mxu0 %v2813
    %2843 = vmatpush1.msra.mxu0 %v2812
    %2844 = vmatprep.subr.mxu0 %v2811
    %2845 = vmatpush1.msra.mxu0 %v2810
    %2846 = vmatprep.subr.mxu0 %v2809
    %2847 = vmatpush1.msra.mxu0 %v2808
    %2848 = vmatprep.subr.mxu0 %v2807
    %2849 = vmatpush1.msra.mxu0 %v2806
    %2850 = vmatprep.subr.mxu0 %v2805
    %2851 = vmatpush1.msra.mxu0 %v2804
    %2852 = vmatprep.subr.mxu0 %v2803
    %2853 = vmatpush1.msra.mxu0 %v2802
    %2854 = vmatprep.subr.mxu0 %v2801
    %2855 = vmatpush1.msra.mxu0 %v2800
    %2856 = vmatprep.subr.mxu0 %v2799
    %2857 = vmatpush1.msra.mxu0 %v2798
    %2858 = vmatprep.subr.mxu0 %v2797
    %2859 = vmatpush1.msra.mxu0 %v2796
    %2860 = vmatprep.subr.mxu0 0.0
    %2861 = vmatpush2.msra.mxu0 0.0
    %2862 = vmatprep.subr.mxu0 0.0
    %2863 = vmatpush2.msra.mxu0 0.0
    %2864 = vmatprep.subr.mxu0 0.0
    %2865 = vmatpush2.msra.mxu0 0.0
    %2866 = vmatprep.subr.mxu0 0.0
    %2867 = vmatpush2.msra.mxu0 0.0
    %2868 = vmatprep.subr.mxu0 0.0
    %2869 = vmatpush2.msra.mxu0 0.0
    %2870 = vmatprep.subr.mxu0 0.0
    %2871 = vmatpush2.msra.mxu0 0.0
    %2872 = vmatprep.subr.mxu0 0.0
    %2873 = vmatpush2.msra.mxu0 0.0
    %2874 = vmatprep.subr.mxu0 0.0
    %2875 = vmatpush2.msra.mxu0 0.0
    %2876 = vmatprep.subr.mxu0 0.0
    %2877 = vmatpush2.msra.mxu0 0.0
    %2878 = vmatprep.subr.mxu0 0.0
    %2879 = vmatpush2.msra.mxu0 0.0
    %2880 = vmatprep.subr.mxu0 0.0
    %2881 = vmatpush2.msra.mxu0 0.0
    %2882 = vmatprep.subr.mxu0 0.0
    %2883 = vmatpush2.msra.mxu0 0.0
    %2884 = vmatprep.subr.mxu0 0.0
    %2885 = vmatpush2.msra.mxu0 0.0
    %2886 = vmatprep.subr.mxu0 0.0
    %2887 = vmatpush2.msra.mxu0 0.0
    %2888 = vmatprep.subr.mxu0 0.0
    %2889 = vmatpush2.msra.mxu0 0.0
    %2890 = vmatprep.subr.mxu0 0.0
    %2891 = vmatpush2.msra.mxu0 0.0
    %2892 = vmatprep.mubr.f32.mxu0 0.0
    %2893 = vmatmul.mubr.f32.gmra.mxu0 %v1385
    %v2894 = vpop.f32.mrf.mxu0
    %v2895 = vadd.f32 0.0, %v2894
    %v2896 = vpop.f32.mrf.mxu0
    %v2897 = vadd.f32 0.0, %v2896
    %2898 = vmatprep.mubr.f32.mxu0 0.0
    %2899 = vmatmul.mubr.f32.gmra.mxu0 %v1386
    %v2900 = vpop.f32.mrf.mxu0
    %v2901 = vadd.f32 0.0, %v2900
    %v2902 = vpop.f32.mrf.mxu0
    %v2903 = vadd.f32 0.0, %v2902
    %2904 = vmatprep.mubr.f32.mxu0 0.0
    %2905 = vmatmul.mubr.f32.gmra.mxu0 %v1387
    %v2906 = vpop.f32.mrf.mxu0
    %v2907 = vadd.f32 0.0, %v2906
    %v2908 = vpop.f32.mrf.mxu0
    %v2909 = vadd.f32 0.0, %v2908
    %2910 = vmatprep.mubr.f32.mxu0 0.0
    %2911 = vmatmul.mubr.f32.gmra.mxu0 %v1388
    %v2912 = vpop.f32.mrf.mxu0
    %v2913 = vadd.f32 0.0, %v2912
    %v2914 = vpop.f32.mrf.mxu0
    %v2915 = vadd.f32 0.0, %v2914
    %2916 = vdwg.mxu0
    %v2917 = vadd.f32 %v2773, %v2895
    %v2918 = vadd.f32 %v2775, %v2897
    %v2919 = vadd.f32 %v2779, %v2901
    %v2920 = vadd.f32 %v2781, %v2903
    %v2921 = vadd.f32 %v2785, %v2907
    %v2922 = vadd.f32 %v2787, %v2909
    %v2923 = vadd.f32 %v2791, %v2913
    %v2924 = vadd.f32 %v2793, %v2915
    %s2925 = scalar_lea.vmem [#allocation4], 768
    %v2926 = vld [vmem:[%s2925] sm:$0xff]
    %v2927 = vld [vmem:[%s2925 + $0x8] sm:$0xff]
    %v2928 = vld [vmem:[%s2925 + $0x10] sm:$0xff]
    %v2929 = vld [vmem:[%s2925 + $0x18] sm:$0xff]
    %v2930 = vld [vmem:[%s2925 + $0x20] sm:$0xff]
    %v2931 = vld [vmem:[%s2925 + $0x28] sm:$0xff]
    %v2932 = vld [vmem:[%s2925 + $0x30] sm:$0xff]
    %v2933 = vld [vmem:[%s2925 + $0x38] sm:$0xff]
    %v2934 = vld [vmem:[%s2925 + $0x40] sm:$0xff]
    %v2935 = vld [vmem:[%s2925 + $0x48] sm:$0xff]
    %v2936 = vld [vmem:[%s2925 + $0x50] sm:$0xff]
    %v2937 = vld [vmem:[%s2925 + $0x58] sm:$0xff]
    %v2938 = vld [vmem:[%s2925 + $0x60] sm:$0xff]
    %v2939 = vld [vmem:[%s2925 + $0x68] sm:$0xff]
    %v2940 = vld [vmem:[%s2925 + $0x70] sm:$0xff]
    %v2941 = vld [vmem:[%s2925 + $0x78] sm:$0xff]
    %v2942 = vld [vmem:[%s2925 + $0x80] sm:$0xff]
    %v2943 = vld [vmem:[%s2925 + $0x88] sm:$0xff]
    %v2944 = vld [vmem:[%s2925 + $0x90] sm:$0xff]
    %v2945 = vld [vmem:[%s2925 + $0x98] sm:$0xff]
    %v2946 = vld [vmem:[%s2925 + $0xa0] sm:$0xff]
    %v2947 = vld [vmem:[%s2925 + $0xa8] sm:$0xff]
    %v2948 = vld [vmem:[%s2925 + $0xb0] sm:$0xff]
    %v2949 = vld [vmem:[%s2925 + $0xb8] sm:$0xff]
    %v2950 = vld [vmem:[%s2925 + $0xc0] sm:$0xff]
    %v2951 = vld [vmem:[%s2925 + $0xc8] sm:$0xff]
    %v2952 = vld [vmem:[%s2925 + $0xd0] sm:$0xff]
    %v2953 = vld [vmem:[%s2925 + $0xd8] sm:$0xff]
    %v2954 = vld [vmem:[%s2925 + $0xe0] sm:$0xff]
    %v2955 = vld [vmem:[%s2925 + $0xe8] sm:$0xff]
    %v2956 = vld [vmem:[%s2925 + $0xf0] sm:$0xff]
    %v2957 = vld [vmem:[%s2925 + $0xf8] sm:$0xff]
    %2958 = vmatprep.subr.mxu0 %v2957
    %2959 = vmatpush1.msra.mxu0 %v2956
    %2960 = vmatprep.subr.mxu0 %v2955
    %2961 = vmatpush1.msra.mxu0 %v2954
    %2962 = vmatprep.subr.mxu0 %v2953
    %2963 = vmatpush1.msra.mxu0 %v2952
    %2964 = vmatprep.subr.mxu0 %v2951
    %2965 = vmatpush1.msra.mxu0 %v2950
    %2966 = vmatprep.subr.mxu0 %v2949
    %2967 = vmatpush1.msra.mxu0 %v2948
    %2968 = vmatprep.subr.mxu0 %v2947
    %2969 = vmatpush1.msra.mxu0 %v2946
    %2970 = vmatprep.subr.mxu0 %v2945
    %2971 = vmatpush1.msra.mxu0 %v2944
    %2972 = vmatprep.subr.mxu0 %v2943
    %2973 = vmatpush1.msra.mxu0 %v2942
    %2974 = vmatprep.subr.mxu0 %v2941
    %2975 = vmatpush1.msra.mxu0 %v2940
    %2976 = vmatprep.subr.mxu0 %v2939
    %2977 = vmatpush1.msra.mxu0 %v2938
    %2978 = vmatprep.subr.mxu0 %v2937
    %2979 = vmatpush1.msra.mxu0 %v2936
    %2980 = vmatprep.subr.mxu0 %v2935
    %2981 = vmatpush1.msra.mxu0 %v2934
    %2982 = vmatprep.subr.mxu0 %v2933
    %2983 = vmatpush1.msra.mxu0 %v2932
    %2984 = vmatprep.subr.mxu0 %v2931
    %2985 = vmatpush1.msra.mxu0 %v2930
    %2986 = vmatprep.subr.mxu0 %v2929
    %2987 = vmatpush1.msra.mxu0 %v2928
    %2988 = vmatprep.subr.mxu0 %v2927
    %2989 = vmatpush1.msra.mxu0 %v2926
    %2990 = vmatprep.subr.mxu0 0.0
    %2991 = vmatpush2.msra.mxu0 0.0
    %2992 = vmatprep.subr.mxu0 0.0
    %2993 = vmatpush2.msra.mxu0 0.0
    %2994 = vmatprep.subr.mxu0 0.0
    %2995 = vmatpush2.msra.mxu0 0.0
    %2996 = vmatprep.subr.mxu0 0.0
    %2997 = vmatpush2.msra.mxu0 0.0
    %2998 = vmatprep.subr.mxu0 0.0
    %2999 = vmatpush2.msra.mxu0 0.0
    %3000 = vmatprep.subr.mxu0 0.0
    %3001 = vmatpush2.msra.mxu0 0.0
    %3002 = vmatprep.subr.mxu0 0.0
    %3003 = vmatpush2.msra.mxu0 0.0
    %3004 = vmatprep.subr.mxu0 0.0
    %3005 = vmatpush2.msra.mxu0 0.0
    %3006 = vmatprep.subr.mxu0 0.0
    %3007 = vmatpush2.msra.mxu0 0.0
    %3008 = vmatprep.subr.mxu0 0.0
    %3009 = vmatpush2.msra.mxu0 0.0
    %3010 = vmatprep.subr.mxu0 0.0
    %3011 = vmatpush2.msra.mxu0 0.0
    %3012 = vmatprep.subr.mxu0 0.0
    %3013 = vmatpush2.msra.mxu0 0.0
    %3014 = vmatprep.subr.mxu0 0.0
    %3015 = vmatpush2.msra.mxu0 0.0
    %3016 = vmatprep.subr.mxu0 0.0
    %3017 = vmatpush2.msra.mxu0 0.0
    %3018 = vmatprep.subr.mxu0 0.0
    %3019 = vmatpush2.msra.mxu0 0.0
    %3020 = vmatprep.subr.mxu0 0.0
    %3021 = vmatpush2.msra.mxu0 0.0
    %3022 = vmatprep.mubr.f32.mxu0 0.0
    %3023 = vmatmul.mubr.f32.gmra.mxu0 %v2547
    %v3024 = vpop.f32.mrf.mxu0
    %v3025 = vadd.f32 0.0, %v3024
    %v3026 = vpop.f32.mrf.mxu0
    %v3027 = vadd.f32 0.0, %v3026
    %3028 = vmatprep.mubr.f32.mxu0 0.0
    %3029 = vmatmul.mubr.f32.gmra.mxu0 %v2548
    %v3030 = vpop.f32.mrf.mxu0
    %v3031 = vadd.f32 0.0, %v3030
    %v3032 = vpop.f32.mrf.mxu0
    %v3033 = vadd.f32 0.0, %v3032
    %3034 = vmatprep.mubr.f32.mxu0 0.0
    %3035 = vmatmul.mubr.f32.gmra.mxu0 %v2549
    %v3036 = vpop.f32.mrf.mxu0
    %v3037 = vadd.f32 0.0, %v3036
    %v3038 = vpop.f32.mrf.mxu0
    %v3039 = vadd.f32 0.0, %v3038
    %3040 = vmatprep.mubr.f32.mxu0 0.0
    %3041 = vmatmul.mubr.f32.gmra.mxu0 %v2550
    %v3042 = vpop.f32.mrf.mxu0
    %v3043 = vadd.f32 0.0, %v3042
    %v3044 = vpop.f32.mrf.mxu0
    %v3045 = vadd.f32 0.0, %v3044
    %3046 = vdwg.mxu0
    %v3047 = vadd.f32 %v2917, %v3025
    %v3048 = vadd.f32 %v2918, %v3027
    %v3049 = vadd.f32 %v2919, %v3031
    %v3050 = vadd.f32 %v2920, %v3033
    %v3051 = vadd.f32 %v2921, %v3037
    %v3052 = vadd.f32 %v2922, %v3039
    %v3053 = vadd.f32 %v2923, %v3043
    %v3054 = vadd.f32 %v2924, %v3045
    %s3055 = scalar_lea.vmem [#allocation4], 1024
    %v3056 = vld [vmem:[%s3055] sm:$0xff]
    %v3057 = vld [vmem:[%s3055 + $0x8] sm:$0xff]
    %v3058 = vld [vmem:[%s3055 + $0x10] sm:$0xff]
    %v3059 = vld [vmem:[%s3055 + $0x18] sm:$0xff]
    %v3060 = vld [vmem:[%s3055 + $0x20] sm:$0xff]
    %v3061 = vld [vmem:[%s3055 + $0x28] sm:$0xff]
    %v3062 = vld [vmem:[%s3055 + $0x30] sm:$0xff]
    %v3063 = vld [vmem:[%s3055 + $0x38] sm:$0xff]
    %v3064 = vld [vmem:[%s3055 + $0x40] sm:$0xff]
    %v3065 = vld [vmem:[%s3055 + $0x48] sm:$0xff]
    %v3066 = vld [vmem:[%s3055 + $0x50] sm:$0xff]
    %v3067 = vld [vmem:[%s3055 + $0x58] sm:$0xff]
    %v3068 = vld [vmem:[%s3055 + $0x60] sm:$0xff]
    %v3069 = vld [vmem:[%s3055 + $0x68] sm:$0xff]
    %v3070 = vld [vmem:[%s3055 + $0x70] sm:$0xff]
    %v3071 = vld [vmem:[%s3055 + $0x78] sm:$0xff]
    %v3072 = vld [vmem:[%s3055 + $0x80] sm:$0xff]
    %v3073 = vld [vmem:[%s3055 + $0x88] sm:$0xff]
    %v3074 = vld [vmem:[%s3055 + $0x90] sm:$0xff]
    %v3075 = vld [vmem:[%s3055 + $0x98] sm:$0xff]
    %v3076 = vld [vmem:[%s3055 + $0xa0] sm:$0xff]
    %v3077 = vld [vmem:[%s3055 + $0xa8] sm:$0xff]
    %v3078 = vld [vmem:[%s3055 + $0xb0] sm:$0xff]
    %v3079 = vld [vmem:[%s3055 + $0xb8] sm:$0xff]
    %v3080 = vld [vmem:[%s3055 + $0xc0] sm:$0xff]
    %v3081 = vld [vmem:[%s3055 + $0xc8] sm:$0xff]
    %v3082 = vld [vmem:[%s3055 + $0xd0] sm:$0xff]
    %v3083 = vld [vmem:[%s3055 + $0xd8] sm:$0xff]
    %v3084 = vld [vmem:[%s3055 + $0xe0] sm:$0xff]
    %v3085 = vld [vmem:[%s3055 + $0xe8] sm:$0xff]
    %v3086 = vld [vmem:[%s3055 + $0xf0] sm:$0xff]
    %v3087 = vld [vmem:[%s3055 + $0xf8] sm:$0xff]
    %3088 = vmatprep.subr.mxu0 %v3087
    %3089 = vmatpush1.msra.mxu0 %v3086
    %3090 = vmatprep.subr.mxu0 %v3085
    %3091 = vmatpush1.msra.mxu0 %v3084
    %3092 = vmatprep.subr.mxu0 %v3083
    %3093 = vmatpush1.msra.mxu0 %v3082
    %3094 = vmatprep.subr.mxu0 %v3081
    %3095 = vmatpush1.msra.mxu0 %v3080
    %3096 = vmatprep.subr.mxu0 %v3079
    %3097 = vmatpush1.msra.mxu0 %v3078
    %3098 = vmatprep.subr.mxu0 %v3077
    %3099 = vmatpush1.msra.mxu0 %v3076
    %3100 = vmatprep.subr.mxu0 %v3075
    %3101 = vmatpush1.msra.mxu0 %v3074
    %3102 = vmatprep.subr.mxu0 %v3073
    %3103 = vmatpush1.msra.mxu0 %v3072
    %3104 = vmatprep.subr.mxu0 %v3071
    %3105 = vmatpush1.msra.mxu0 %v3070
    %3106 = vmatprep.subr.mxu0 %v3069
    %3107 = vmatpush1.msra.mxu0 %v3068
    %3108 = vmatprep.subr.mxu0 %v3067
    %3109 = vmatpush1.msra.mxu0 %v3066
    %3110 = vmatprep.subr.mxu0 %v3065
    %3111 = vmatpush1.msra.mxu0 %v3064
    %3112 = vmatprep.subr.mxu0 %v3063
    %3113 = vmatpush1.msra.mxu0 %v3062
    %3114 = vmatprep.subr.mxu0 %v3061
    %3115 = vmatpush1.msra.mxu0 %v3060
    %3116 = vmatprep.subr.mxu0 %v3059
    %3117 = vmatpush1.msra.mxu0 %v3058
    %3118 = vmatprep.subr.mxu0 %v3057
    %3119 = vmatpush1.msra.mxu0 %v3056
    %3120 = vmatprep.subr.mxu0 0.0
    %3121 = vmatpush2.msra.mxu0 0.0
    %3122 = vmatprep.subr.mxu0 0.0
    %3123 = vmatpush2.msra.mxu0 0.0
    %3124 = vmatprep.subr.mxu0 0.0
    %3125 = vmatpush2.msra.mxu0 0.0
    %3126 = vmatprep.subr.mxu0 0.0
    %3127 = vmatpush2.msra.mxu0 0.0
    %3128 = vmatprep.subr.mxu0 0.0
    %3129 = vmatpush2.msra.mxu0 0.0
    %3130 = vmatprep.subr.mxu0 0.0
    %3131 = vmatpush2.msra.mxu0 0.0
    %3132 = vmatprep.subr.mxu0 0.0
    %3133 = vmatpush2.msra.mxu0 0.0
    %3134 = vmatprep.subr.mxu0 0.0
    %3135 = vmatpush2.msra.mxu0 0.0
    %3136 = vmatprep.subr.mxu0 0.0
    %3137 = vmatpush2.msra.mxu0 0.0
    %3138 = vmatprep.subr.mxu0 0.0
    %3139 = vmatpush2.msra.mxu0 0.0
    %3140 = vmatprep.subr.mxu0 0.0
    %3141 = vmatpush2.msra.mxu0 0.0
    %3142 = vmatprep.subr.mxu0 0.0
    %3143 = vmatpush2.msra.mxu0 0.0
    %3144 = vmatprep.subr.mxu0 0.0
    %3145 = vmatpush2.msra.mxu0 0.0
    %3146 = vmatprep.subr.mxu0 0.0
    %3147 = vmatpush2.msra.mxu0 0.0
    %3148 = vmatprep.subr.mxu0 0.0
    %3149 = vmatpush2.msra.mxu0 0.0
    %3150 = vmatprep.subr.mxu0 0.0
    %3151 = vmatpush2.msra.mxu0 0.0
    %3152 = vmatprep.mubr.f32.mxu0 0.0
    %3153 = vmatmul.mubr.f32.gmra.mxu0 %v1386
    %v3154 = vpop.f32.mrf.mxu0
    %v3155 = vadd.f32 0.0, %v3154
    %v3156 = vpop.f32.mrf.mxu0
    %v3157 = vadd.f32 0.0, %v3156
    %3158 = vmatprep.mubr.f32.mxu0 0.0
    %3159 = vmatmul.mubr.f32.gmra.mxu0 %v1387
    %v3160 = vpop.f32.mrf.mxu0
    %v3161 = vadd.f32 0.0, %v3160
    %v3162 = vpop.f32.mrf.mxu0
    %v3163 = vadd.f32 0.0, %v3162
    %3164 = vmatprep.mubr.f32.mxu0 0.0
    %3165 = vmatmul.mubr.f32.gmra.mxu0 %v1388
    %v3166 = vpop.f32.mrf.mxu0
    %v3167 = vadd.f32 0.0, %v3166
    %v3168 = vpop.f32.mrf.mxu0
    %v3169 = vadd.f32 0.0, %v3168
    %3170 = vmatprep.mubr.f32.mxu0 0.0
    %3171 = vmatmul.mubr.f32.gmra.mxu0 %v1389
    %v3172 = vpop.f32.mrf.mxu0
    %v3173 = vadd.f32 0.0, %v3172
    %v3174 = vpop.f32.mrf.mxu0
    %v3175 = vadd.f32 0.0, %v3174
    %3176 = vdwg.mxu0
    %v3177 = vadd.f32 %v3047, %v3155
    %v3178 = vadd.f32 %v3048, %v3157
    %v3179 = vadd.f32 %v3049, %v3161
    %v3180 = vadd.f32 %v3050, %v3163
    %v3181 = vadd.f32 %v3051, %v3167
    %v3182 = vadd.f32 %v3052, %v3169
    %v3183 = vadd.f32 %v3053, %v3173
    %v3184 = vadd.f32 %v3054, %v3175
    %v3185 = vmax.f32 %v3177, %v3178
    %v3186 = vmax.f32 %v3179, %v3180
    %v3187 = vmax.f32 %v3181, %v3182
    %v3188 = vmax.f32 %v3183, %v3184
    %3189 = vmatprep.subr.mxu0 %v2616
    %3190 = vmatpush1.msra.mxu0 %v2615
    %3191 = vmatprep.subr.mxu0 %v2614
    %3192 = vmatpush1.msra.mxu0 %v2613
    %3193 = vmatprep.subr.mxu0 %v2612
    %3194 = vmatpush1.msra.mxu0 %v2611
    %3195 = vmatprep.subr.mxu0 %v2610
    %3196 = vmatpush1.msra.mxu0 %v2609
    %3197 = vmatprep.subr.mxu0 %v2608
    %3198 = vmatpush1.msra.mxu0 %v2607
    %3199 = vmatprep.subr.mxu0 %v2606
    %3200 = vmatpush1.msra.mxu0 %v2605
    %3201 = vmatprep.subr.mxu0 %v2604
    %3202 = vmatpush1.msra.mxu0 %v2603
    %3203 = vmatprep.subr.mxu0 %v2602
    %3204 = vmatpush1.msra.mxu0 %v2601
    %3205 = vmatprep.subr.mxu0 %v2600
    %3206 = vmatpush1.msra.mxu0 %v2599
    %3207 = vmatprep.subr.mxu0 %v2598
    %3208 = vmatpush1.msra.mxu0 %v2597
    %3209 = vmatprep.subr.mxu0 %v2596
    %3210 = vmatpush1.msra.mxu0 %v2595
    %3211 = vmatprep.subr.mxu0 %v2594
    %3212 = vmatpush1.msra.mxu0 %v2593
    %3213 = vmatprep.subr.mxu0 %v2592
    %3214 = vmatpush1.msra.mxu0 %v2591
    %3215 = vmatprep.subr.mxu0 %v2590
    %3216 = vmatpush1.msra.mxu0 %v2589
    %3217 = vmatprep.subr.mxu0 %v2588
    %3218 = vmatpush1.msra.mxu0 %v2587
    %3219 = vmatprep.subr.mxu0 %v2586
    %3220 = vmatpush1.msra.mxu0 %v2585
    %3221 = vmatprep.subr.mxu0 0.0
    %3222 = vmatpush2.msra.mxu0 0.0
    %3223 = vmatprep.subr.mxu0 0.0
    %3224 = vmatpush2.msra.mxu0 0.0
    %3225 = vmatprep.subr.mxu0 0.0
    %3226 = vmatpush2.msra.mxu0 0.0
    %3227 = vmatprep.subr.mxu0 0.0
    %3228 = vmatpush2.msra.mxu0 0.0
    %3229 = vmatprep.subr.mxu0 0.0
    %3230 = vmatpush2.msra.mxu0 0.0
    %3231 = vmatprep.subr.mxu0 0.0
    %3232 = vmatpush2.msra.mxu0 0.0
    %3233 = vmatprep.subr.mxu0 0.0
    %3234 = vmatpush2.msra.mxu0 0.0
    %3235 = vmatprep.subr.mxu0 0.0
    %3236 = vmatpush2.msra.mxu0 0.0
    %3237 = vmatprep.subr.mxu0 0.0
    %3238 = vmatpush2.msra.mxu0 0.0
    %3239 = vmatprep.subr.mxu0 0.0
    %3240 = vmatpush2.msra.mxu0 0.0
    %3241 = vmatprep.subr.mxu0 0.0
    %3242 = vmatpush2.msra.mxu0 0.0
    %3243 = vmatprep.subr.mxu0 0.0
    %3244 = vmatpush2.msra.mxu0 0.0
    %3245 = vmatprep.subr.mxu0 0.0
    %3246 = vmatpush2.msra.mxu0 0.0
    %3247 = vmatprep.subr.mxu0 0.0
    %3248 = vmatpush2.msra.mxu0 0.0
    %3249 = vmatprep.subr.mxu0 0.0
    %3250 = vmatpush2.msra.mxu0 0.0
    %3251 = vmatprep.subr.mxu0 0.0
    %3252 = vmatpush2.msra.mxu0 0.0
    %3253 = vmatprep.mubr.f32.mxu0 0.0
    %3254 = vmatmul.mubr.f32.gmra.mxu0 %v1385
    %v3255 = vpop.f32.mrf.mxu0
    %v3256 = vadd.f32 0.0, %v3255
    %v3257 = vpop.f32.mrf.mxu0
    %v3258 = vadd.f32 0.0, %v3257
    %3259 = vmatprep.mubr.f32.mxu0 0.0
    %3260 = vmatmul.mubr.f32.gmra.mxu0 %v1386
    %v3261 = vpop.f32.mrf.mxu0
    %v3262 = vadd.f32 0.0, %v3261
    %v3263 = vpop.f32.mrf.mxu0
    %v3264 = vadd.f32 0.0, %v3263
    %3265 = vmatprep.mubr.f32.mxu0 0.0
    %3266 = vmatmul.mubr.f32.gmra.mxu0 %v1387
    %v3267 = vpop.f32.mrf.mxu0
    %v3268 = vadd.f32 0.0, %v3267
    %v3269 = vpop.f32.mrf.mxu0
    %v3270 = vadd.f32 0.0, %v3269
    %3271 = vmatprep.mubr.f32.mxu0 0.0
    %3272 = vmatmul.mubr.f32.gmra.mxu0 %v1388
    %v3273 = vpop.f32.mrf.mxu0
    %v3274 = vadd.f32 0.0, %v3273
    %v3275 = vpop.f32.mrf.mxu0
    %v3276 = vadd.f32 0.0, %v3275
    %3277 = vdwg.mxu0
    %3278 = vmatprep.subr.mxu0 %v2583
    %3279 = vmatpush1.msra.mxu0 %v2582
    %3280 = vmatprep.subr.mxu0 %v2581
    %3281 = vmatpush1.msra.mxu0 %v2580
    %3282 = vmatprep.subr.mxu0 %v2579
    %3283 = vmatpush1.msra.mxu0 %v2578
    %3284 = vmatprep.subr.mxu0 %v2577
    %3285 = vmatpush1.msra.mxu0 %v2576
    %3286 = vmatprep.subr.mxu0 %v2575
    %3287 = vmatpush1.msra.mxu0 %v2574
    %3288 = vmatprep.subr.mxu0 %v2573
    %3289 = vmatpush1.msra.mxu0 %v2572
    %3290 = vmatprep.subr.mxu0 %v2571
    %3291 = vmatpush1.msra.mxu0 %v2570
    %3292 = vmatprep.subr.mxu0 %v2569
    %3293 = vmatpush1.msra.mxu0 %v2568
    %3294 = vmatprep.subr.mxu0 %v2567
    %3295 = vmatpush1.msra.mxu0 %v2566
    %3296 = vmatprep.subr.mxu0 %v2565
    %3297 = vmatpush1.msra.mxu0 %v2564
    %3298 = vmatprep.subr.mxu0 %v2563
    %3299 = vmatpush1.msra.mxu0 %v2562
    %3300 = vmatprep.subr.mxu0 %v2561
    %3301 = vmatpush1.msra.mxu0 %v2560
    %3302 = vmatprep.subr.mxu0 %v2559
    %3303 = vmatpush1.msra.mxu0 %v2558
    %3304 = vmatprep.subr.mxu0 %v2557
    %3305 = vmatpush1.msra.mxu0 %v2556
    %3306 = vmatprep.subr.mxu0 %v2555
    %3307 = vmatpush1.msra.mxu0 %v2554
    %3308 = vmatprep.subr.mxu0 %v2553
    %3309 = vmatpush1.msra.mxu0 %v2552
    %3310 = vmatprep.subr.mxu0 0.0
    %3311 = vmatpush2.msra.mxu0 0.0
    %3312 = vmatprep.subr.mxu0 0.0
    %3313 = vmatpush2.msra.mxu0 0.0
    %3314 = vmatprep.subr.mxu0 0.0
    %3315 = vmatpush2.msra.mxu0 0.0
    %3316 = vmatprep.subr.mxu0 0.0
    %3317 = vmatpush2.msra.mxu0 0.0
    %3318 = vmatprep.subr.mxu0 0.0
    %3319 = vmatpush2.msra.mxu0 0.0
    %3320 = vmatprep.subr.mxu0 0.0
    %3321 = vmatpush2.msra.mxu0 0.0
    %3322 = vmatprep.subr.mxu0 0.0
    %3323 = vmatpush2.msra.mxu0 0.0
    %3324 = vmatprep.subr.mxu0 0.0
    %3325 = vmatpush2.msra.mxu0 0.0
    %3326 = vmatprep.subr.mxu0 0.0
    %3327 = vmatpush2.msra.mxu0 0.0
    %3328 = vmatprep.subr.mxu0 0.0
    %3329 = vmatpush2.msra.mxu0 0.0
    %3330 = vmatprep.subr.mxu0 0.0
    %3331 = vmatpush2.msra.mxu0 0.0
    %3332 = vmatprep.subr.mxu0 0.0
    %3333 = vmatpush2.msra.mxu0 0.0
    %3334 = vmatprep.subr.mxu0 0.0
    %3335 = vmatpush2.msra.mxu0 0.0
    %3336 = vmatprep.subr.mxu0 0.0
    %3337 = vmatpush2.msra.mxu0 0.0
    %3338 = vmatprep.subr.mxu0 0.0
    %3339 = vmatpush2.msra.mxu0 0.0
    %3340 = vmatprep.subr.mxu0 0.0
    %3341 = vmatpush2.msra.mxu0 0.0
    %3342 = vmatprep.mubr.f32.mxu0 0.0
    %3343 = vmatmul.mubr.f32.gmra.mxu0 %v2546
    %v3344 = vpop.f32.mrf.mxu0
    %v3345 = vadd.f32 %v3256, %v3344
    %v3346 = vpop.f32.mrf.mxu0
    %v3347 = vadd.f32 %v3258, %v3346
    %3348 = vmatprep.mubr.f32.mxu0 0.0
    %3349 = vmatmul.mubr.f32.gmra.mxu0 %v2547
    %v3350 = vpop.f32.mrf.mxu0
    %v3351 = vadd.f32 %v3262, %v3350
    %v3352 = vpop.f32.mrf.mxu0
    %v3353 = vadd.f32 %v3264, %v3352
    %3354 = vmatprep.mubr.f32.mxu0 0.0
    %3355 = vmatmul.mubr.f32.gmra.mxu0 %v2548
    %v3356 = vpop.f32.mrf.mxu0
    %v3357 = vadd.f32 %v3268, %v3356
    %v3358 = vpop.f32.mrf.mxu0
    %v3359 = vadd.f32 %v3270, %v3358
    %3360 = vmatprep.mubr.f32.mxu0 0.0
    %3361 = vmatmul.mubr.f32.gmra.mxu0 %v2549
    %v3362 = vpop.f32.mrf.mxu0
    %v3363 = vadd.f32 %v3274, %v3362
    %v3364 = vpop.f32.mrf.mxu0
    %v3365 = vadd.f32 %v3276, %v3364
    %3366 = vdwg.mxu0
    %3367 = vmatprep.subr.mxu0 %v2827
    %3368 = vmatpush1.msra.mxu0 %v2826
    %3369 = vmatprep.subr.mxu0 %v2825
    %3370 = vmatpush1.msra.mxu0 %v2824
    %3371 = vmatprep.subr.mxu0 %v2823
    %3372 = vmatpush1.msra.mxu0 %v2822
    %3373 = vmatprep.subr.mxu0 %v2821
    %3374 = vmatpush1.msra.mxu0 %v2820
    %3375 = vmatprep.subr.mxu0 %v2819
    %3376 = vmatpush1.msra.mxu0 %v2818
    %3377 = vmatprep.subr.mxu0 %v2817
    %3378 = vmatpush1.msra.mxu0 %v2816
    %3379 = vmatprep.subr.mxu0 %v2815
    %3380 = vmatpush1.msra.mxu0 %v2814
    %3381 = vmatprep.subr.mxu0 %v2813
    %3382 = vmatpush1.msra.mxu0 %v2812
    %3383 = vmatprep.subr.mxu0 %v2811
    %3384 = vmatpush1.msra.mxu0 %v2810
    %3385 = vmatprep.subr.mxu0 %v2809
    %3386 = vmatpush1.msra.mxu0 %v2808
    %3387 = vmatprep.subr.mxu0 %v2807
    %3388 = vmatpush1.msra.mxu0 %v2806
    %3389 = vmatprep.subr.mxu0 %v2805
    %3390 = vmatpush1.msra.mxu0 %v2804
    %3391 = vmatprep.subr.mxu0 %v2803
    %3392 = vmatpush1.msra.mxu0 %v2802
    %3393 = vmatprep.subr.mxu0 %v2801
    %3394 = vmatpush1.msra.mxu0 %v2800
    %3395 = vmatprep.subr.mxu0 %v2799
    %3396 = vmatpush1.msra.mxu0 %v2798
    %3397 = vmatprep.subr.mxu0 %v2797
    %3398 = vmatpush1.msra.mxu0 %v2796
    %3399 = vmatprep.subr.mxu0 0.0
    %3400 = vmatpush2.msra.mxu0 0.0
    %3401 = vmatprep.subr.mxu0 0.0
    %3402 = vmatpush2.msra.mxu0 0.0
    %3403 = vmatprep.subr.mxu0 0.0
    %3404 = vmatpush2.msra.mxu0 0.0
    %3405 = vmatprep.subr.mxu0 0.0
    %3406 = vmatpush2.msra.mxu0 0.0
    %3407 = vmatprep.subr.mxu0 0.0
    %3408 = vmatpush2.msra.mxu0 0.0
    %3409 = vmatprep.subr.mxu0 0.0
    %3410 = vmatpush2.msra.mxu0 0.0
    %3411 = vmatprep.subr.mxu0 0.0
    %3412 = vmatpush2.msra.mxu0 0.0
    %3413 = vmatprep.subr.mxu0 0.0
    %3414 = vmatpush2.msra.mxu0 0.0
    %3415 = vmatprep.subr.mxu0 0.0
    %3416 = vmatpush2.msra.mxu0 0.0
    %3417 = vmatprep.subr.mxu0 0.0
    %3418 = vmatpush2.msra.mxu0 0.0
    %3419 = vmatprep.subr.mxu0 0.0
    %3420 = vmatpush2.msra.mxu0 0.0
    %3421 = vmatprep.subr.mxu0 0.0
    %3422 = vmatpush2.msra.mxu0 0.0
    %3423 = vmatprep.subr.mxu0 0.0
    %3424 = vmatpush2.msra.mxu0 0.0
    %3425 = vmatprep.subr.mxu0 0.0
    %3426 = vmatpush2.msra.mxu0 0.0
    %3427 = vmatprep.subr.mxu0 0.0
    %3428 = vmatpush2.msra.mxu0 0.0
    %3429 = vmatprep.subr.mxu0 0.0
    %3430 = vmatpush2.msra.mxu0 0.0
    %3431 = vmatprep.mubr.f32.mxu0 0.0
    %3432 = vmatmul.mubr.f32.gmra.mxu0 %v2547
    %v3433 = vpop.f32.mrf.mxu0
    %v3434 = vadd.f32 0.0, %v3433
    %v3435 = vpop.f32.mrf.mxu0
    %v3436 = vadd.f32 0.0, %v3435
    %3437 = vmatprep.mubr.f32.mxu0 0.0
    %3438 = vmatmul.mubr.f32.gmra.mxu0 %v2548
    %v3439 = vpop.f32.mrf.mxu0
    %v3440 = vadd.f32 0.0, %v3439
    %v3441 = vpop.f32.mrf.mxu0
    %v3442 = vadd.f32 0.0, %v3441
    %3443 = vmatprep.mubr.f32.mxu0 0.0
    %3444 = vmatmul.mubr.f32.gmra.mxu0 %v2549
    %v3445 = vpop.f32.mrf.mxu0
    %v3446 = vadd.f32 0.0, %v3445
    %v3447 = vpop.f32.mrf.mxu0
    %v3448 = vadd.f32 0.0, %v3447
    %3449 = vmatprep.mubr.f32.mxu0 0.0
    %3450 = vmatmul.mubr.f32.gmra.mxu0 %v2550
    %v3451 = vpop.f32.mrf.mxu0
    %v3452 = vadd.f32 0.0, %v3451
    %v3453 = vpop.f32.mrf.mxu0
    %v3454 = vadd.f32 0.0, %v3453
    %3455 = vdwg.mxu0
    %v3456 = vadd.f32 %v3345, %v3434
    %v3457 = vadd.f32 %v3347, %v3436
    %v3458 = vadd.f32 %v3351, %v3440
    %v3459 = vadd.f32 %v3353, %v3442
    %v3460 = vadd.f32 %v3357, %v3446
    %v3461 = vadd.f32 %v3359, %v3448
    %v3462 = vadd.f32 %v3363, %v3452
    %v3463 = vadd.f32 %v3365, %v3454
    %3464 = vmatprep.subr.mxu0 %v2957
    %3465 = vmatpush1.msra.mxu0 %v2956
    %3466 = vmatprep.subr.mxu0 %v2955
    %3467 = vmatpush1.msra.mxu0 %v2954
    %3468 = vmatprep.subr.mxu0 %v2953
    %3469 = vmatpush1.msra.mxu0 %v2952
    %3470 = vmatprep.subr.mxu0 %v2951
    %3471 = vmatpush1.msra.mxu0 %v2950
    %3472 = vmatprep.subr.mxu0 %v2949
    %3473 = vmatpush1.msra.mxu0 %v2948
    %3474 = vmatprep.subr.mxu0 %v2947
    %3475 = vmatpush1.msra.mxu0 %v2946
    %3476 = vmatprep.subr.mxu0 %v2945
    %3477 = vmatpush1.msra.mxu0 %v2944
    %3478 = vmatprep.subr.mxu0 %v2943
    %3479 = vmatpush1.msra.mxu0 %v2942
    %3480 = vmatprep.subr.mxu0 %v2941
    %3481 = vmatpush1.msra.mxu0 %v2940
    %3482 = vmatprep.subr.mxu0 %v2939
    %3483 = vmatpush1.msra.mxu0 %v2938
    %3484 = vmatprep.subr.mxu0 %v2937
    %3485 = vmatpush1.msra.mxu0 %v2936
    %3486 = vmatprep.subr.mxu0 %v2935
    %3487 = vmatpush1.msra.mxu0 %v2934
    %3488 = vmatprep.subr.mxu0 %v2933
    %3489 = vmatpush1.msra.mxu0 %v2932
    %3490 = vmatprep.subr.mxu0 %v2931
    %3491 = vmatpush1.msra.mxu0 %v2930
    %3492 = vmatprep.subr.mxu0 %v2929
    %3493 = vmatpush1.msra.mxu0 %v2928
    %3494 = vmatprep.subr.mxu0 %v2927
    %3495 = vmatpush1.msra.mxu0 %v2926
    %3496 = vmatprep.subr.mxu0 0.0
    %3497 = vmatpush2.msra.mxu0 0.0
    %3498 = vmatprep.subr.mxu0 0.0
    %3499 = vmatpush2.msra.mxu0 0.0
    %3500 = vmatprep.subr.mxu0 0.0
    %3501 = vmatpush2.msra.mxu0 0.0
    %3502 = vmatprep.subr.mxu0 0.0
    %3503 = vmatpush2.msra.mxu0 0.0
    %3504 = vmatprep.subr.mxu0 0.0
    %3505 = vmatpush2.msra.mxu0 0.0
    %3506 = vmatprep.subr.mxu0 0.0
    %3507 = vmatpush2.msra.mxu0 0.0
    %3508 = vmatprep.subr.mxu0 0.0
    %3509 = vmatpush2.msra.mxu0 0.0
    %3510 = vmatprep.subr.mxu0 0.0
    %3511 = vmatpush2.msra.mxu0 0.0
    %3512 = vmatprep.subr.mxu0 0.0
    %3513 = vmatpush2.msra.mxu0 0.0
    %3514 = vmatprep.subr.mxu0 0.0
    %3515 = vmatpush2.msra.mxu0 0.0
    %3516 = vmatprep.subr.mxu0 0.0
    %3517 = vmatpush2.msra.mxu0 0.0
    %3518 = vmatprep.subr.mxu0 0.0
    %3519 = vmatpush2.msra.mxu0 0.0
    %3520 = vmatprep.subr.mxu0 0.0
    %3521 = vmatpush2.msra.mxu0 0.0
    %3522 = vmatprep.subr.mxu0 0.0
    %3523 = vmatpush2.msra.mxu0 0.0
    %3524 = vmatprep.subr.mxu0 0.0
    %3525 = vmatpush2.msra.mxu0 0.0
    %3526 = vmatprep.subr.mxu0 0.0
    %3527 = vmatpush2.msra.mxu0 0.0
    %3528 = vmatprep.mubr.f32.mxu0 0.0
    %3529 = vmatmul.mubr.f32.gmra.mxu0 %v1386
    %v3530 = vpop.f32.mrf.mxu0
    %v3531 = vadd.f32 0.0, %v3530
    %v3532 = vpop.f32.mrf.mxu0
    %v3533 = vadd.f32 0.0, %v3532
    %3534 = vmatprep.mubr.f32.mxu0 0.0
    %3535 = vmatmul.mubr.f32.gmra.mxu0 %v1387
    %v3536 = vpop.f32.mrf.mxu0
    %v3537 = vadd.f32 0.0, %v3536
    %v3538 = vpop.f32.mrf.mxu0
    %v3539 = vadd.f32 0.0, %v3538
    %3540 = vmatprep.mubr.f32.mxu0 0.0
    %3541 = vmatmul.mubr.f32.gmra.mxu0 %v1388
    %v3542 = vpop.f32.mrf.mxu0
    %v3543 = vadd.f32 0.0, %v3542
    %v3544 = vpop.f32.mrf.mxu0
    %v3545 = vadd.f32 0.0, %v3544
    %3546 = vmatprep.mubr.f32.mxu0 0.0
    %3547 = vmatmul.mubr.f32.gmra.mxu0 %v1389
    %v3548 = vpop.f32.mrf.mxu0
    %v3549 = vadd.f32 0.0, %v3548
    %v3550 = vpop.f32.mrf.mxu0
    %v3551 = vadd.f32 0.0, %v3550
    %3552 = vdwg.mxu0
    %v3553 = vadd.f32 %v3456, %v3531
    %v3554 = vadd.f32 %v3457, %v3533
    %v3555 = vadd.f32 %v3458, %v3537
    %v3556 = vadd.f32 %v3459, %v3539
    %v3557 = vadd.f32 %v3460, %v3543
    %v3558 = vadd.f32 %v3461, %v3545
    %v3559 = vadd.f32 %v3462, %v3549
    %v3560 = vadd.f32 %v3463, %v3551
    %3561 = vmatprep.subr.mxu0 %v3087
    %3562 = vmatpush1.msra.mxu0 %v3086
    %3563 = vmatprep.subr.mxu0 %v3085
    %3564 = vmatpush1.msra.mxu0 %v3084
    %3565 = vmatprep.subr.mxu0 %v3083
    %3566 = vmatpush1.msra.mxu0 %v3082
    %3567 = vmatprep.subr.mxu0 %v3081
    %3568 = vmatpush1.msra.mxu0 %v3080
    %3569 = vmatprep.subr.mxu0 %v3079
    %3570 = vmatpush1.msra.mxu0 %v3078
    %3571 = vmatprep.subr.mxu0 %v3077
    %3572 = vmatpush1.msra.mxu0 %v3076
    %3573 = vmatprep.subr.mxu0 %v3075
    %3574 = vmatpush1.msra.mxu0 %v3074
    %3575 = vmatprep.subr.mxu0 %v3073
    %3576 = vmatpush1.msra.mxu0 %v3072
    %3577 = vmatprep.subr.mxu0 %v3071
    %3578 = vmatpush1.msra.mxu0 %v3070
    %3579 = vmatprep.subr.mxu0 %v3069
    %3580 = vmatpush1.msra.mxu0 %v3068
    %3581 = vmatprep.subr.mxu0 %v3067
    %3582 = vmatpush1.msra.mxu0 %v3066
    %3583 = vmatprep.subr.mxu0 %v3065
    %3584 = vmatpush1.msra.mxu0 %v3064
    %3585 = vmatprep.subr.mxu0 %v3063
    %3586 = vmatpush1.msra.mxu0 %v3062
    %3587 = vmatprep.subr.mxu0 %v3061
    %3588 = vmatpush1.msra.mxu0 %v3060
    %3589 = vmatprep.subr.mxu0 %v3059
    %3590 = vmatpush1.msra.mxu0 %v3058
    %3591 = vmatprep.subr.mxu0 %v3057
    %3592 = vmatpush1.msra.mxu0 %v3056
    %3593 = vmatprep.subr.mxu0 0.0
    %3594 = vmatpush2.msra.mxu0 0.0
    %3595 = vmatprep.subr.mxu0 0.0
    %3596 = vmatpush2.msra.mxu0 0.0
    %3597 = vmatprep.subr.mxu0 0.0
    %3598 = vmatpush2.msra.mxu0 0.0
    %3599 = vmatprep.subr.mxu0 0.0
    %3600 = vmatpush2.msra.mxu0 0.0
    %3601 = vmatprep.subr.mxu0 0.0
    %3602 = vmatpush2.msra.mxu0 0.0
    %3603 = vmatprep.subr.mxu0 0.0
    %3604 = vmatpush2.msra.mxu0 0.0
    %3605 = vmatprep.subr.mxu0 0.0
    %3606 = vmatpush2.msra.mxu0 0.0
    %3607 = vmatprep.subr.mxu0 0.0
    %3608 = vmatpush2.msra.mxu0 0.0
    %3609 = vmatprep.subr.mxu0 0.0
    %3610 = vmatpush2.msra.mxu0 0.0
    %3611 = vmatprep.subr.mxu0 0.0
    %3612 = vmatpush2.msra.mxu0 0.0
    %3613 = vmatprep.subr.mxu0 0.0
    %3614 = vmatpush2.msra.mxu0 0.0
    %3615 = vmatprep.subr.mxu0 0.0
    %3616 = vmatpush2.msra.mxu0 0.0
    %3617 = vmatprep.subr.mxu0 0.0
    %3618 = vmatpush2.msra.mxu0 0.0
    %3619 = vmatprep.subr.mxu0 0.0
    %3620 = vmatpush2.msra.mxu0 0.0
    %3621 = vmatprep.subr.mxu0 0.0
    %3622 = vmatpush2.msra.mxu0 0.0
    %3623 = vmatprep.subr.mxu0 0.0
    %3624 = vmatpush2.msra.mxu0 0.0
    %3625 = vmatprep.mubr.f32.mxu0 0.0
    %3626 = vmatmul.mubr.f32.gmra.mxu0 %v2548
    %v3627 = vpop.f32.mrf.mxu0
    %v3628 = vadd.f32 0.0, %v3627
    %v3629 = vpop.f32.mrf.mxu0
    %v3630 = vadd.f32 0.0, %v3629
    %3631 = vmatprep.mubr.f32.mxu0 0.0
    %3632 = vmatmul.mubr.f32.gmra.mxu0 %v2549
    %v3633 = vpop.f32.mrf.mxu0
    %v3634 = vadd.f32 0.0, %v3633
    %v3635 = vpop.f32.mrf.mxu0
    %v3636 = vadd.f32 0.0, %v3635
    %3637 = vmatprep.mubr.f32.mxu0 0.0
    %3638 = vmatmul.mubr.f32.gmra.mxu0 %v2550
    %v3639 = vpop.f32.mrf.mxu0
    %v3640 = vadd.f32 0.0, %v3639
    %v3641 = vpop.f32.mrf.mxu0
    %v3642 = vadd.f32 0.0, %v3641
    %3643 = vmatprep.mubr.f32.mxu0 0.0
    %3644 = vmatmul.mubr.f32.gmra.mxu0 %v2551
    %v3645 = vpop.f32.mrf.mxu0
    %v3646 = vadd.f32 0.0, %v3645
    %v3647 = vpop.f32.mrf.mxu0
    %v3648 = vadd.f32 0.0, %v3647
    %3649 = vdwg.mxu0
    %v3650 = vadd.f32 %v3553, %v3628
    %v3651 = vadd.f32 %v3554, %v3630
    %v3652 = vadd.f32 %v3555, %v3634
    %v3653 = vadd.f32 %v3556, %v3636
    %v3654 = vadd.f32 %v3557, %v3640
    %v3655 = vadd.f32 %v3558, %v3642
    %v3656 = vadd.f32 %v3559, %v3646
    %v3657 = vadd.f32 %v3560, %v3648
    %v3658 = vmax.f32 %v3650, %v3651
    %v3659 = vmax.f32 %v3652, %v3653
    %v3660 = vmax.f32 %v3654, %v3655
    %v3661 = vmax.f32 %v3656, %v3657
    %v3662 = vmax.f32 %v3185, %v3658
    %v3663 = vmax.f32 %v3186, %v3659
    %v3664 = vmax.f32 %v3187, %v3660
    %v3665 = vmax.f32 %v3188, %v3661
    %v3666 = vld [vmem:[%s4 + $0x1] sm:$0x1]
    %v3667 = vlaneseq
    %v3668 = vshrl.u32 %v3667, 7
    %v3669 = vsub.s32 0, %v3668
    %v3670 = vrot.slane %v3666, %v3669
    %v3671 = vadd.f32 %v3662, %v3670
    %v3672 = vadd.f32 %v3663, %v3670
    %v3673 = vadd.f32 %v3664, %v3670
    %v3674 = vadd.f32 %v3665, %v3670
    %v3675 = vmax.f32 %v3671, 0.0
    %v3676 = vmax.f32 %v3672, 0.0
    %v3677 = vmax.f32 %v3673, 0.0
    %v3678 = vmax.f32 %v3674, 0.0
    %v3679 = vld [vmem:[%s4 + $0x2] sm:$0x1]
    %v3680 = vld [vmem:[%s3] sm:$0xff]
    %v3681 = vld [vmem:[%s3 + $0x8] sm:$0xff]
    %v3682 = vld [vmem:[%s3 + $0x10] sm:$0xff]
    %v3683 = vld [vmem:[%s3 + $0x18] sm:$0xff]
    %v3684 = vld [vmem:[%s3 + $0x20] sm:$0xff]
    %v3685 = vld [vmem:[%s3 + $0x28] sm:$0xff]
    %v3686 = vld [vmem:[%s3 + $0x30] sm:$0xff]
    %v3687 = vld [vmem:[%s3 + $0x38] sm:$0xff]
    %v3688 = vld [vmem:[%s3 + $0x40] sm:$0xff]
    %v3689 = vld [vmem:[%s3 + $0x48] sm:$0xff]
    %v3690 = vld [vmem:[%s3 + $0x50] sm:$0xff]
    %v3691 = vld [vmem:[%s3 + $0x58] sm:$0xff]
    %v3692 = vld [vmem:[%s3 + $0x60] sm:$0xff]
    %v3693 = vld [vmem:[%s3 + $0x68] sm:$0xff]
    %v3694 = vld [vmem:[%s3 + $0x70] sm:$0xff]
    %v3695 = vld [vmem:[%s3 + $0x78] sm:$0xff]
    %3696 = vmatprep.subr.mxu0 0.0
    %3697 = vmatpush1.msra.mxu0 %v3695
    %3698 = vmatprep.subr.mxu0 0.0
    %3699 = vmatpush1.msra.mxu0 %v3694
    %3700 = vmatprep.subr.mxu0 0.0
    %3701 = vmatpush1.msra.mxu0 %v3693
    %3702 = vmatprep.subr.mxu0 0.0
    %3703 = vmatpush1.msra.mxu0 %v3692
    %3704 = vmatprep.subr.mxu0 0.0
    %3705 = vmatpush1.msra.mxu0 %v3691
    %3706 = vmatprep.subr.mxu0 0.0
    %3707 = vmatpush1.msra.mxu0 %v3690
    %3708 = vmatprep.subr.mxu0 0.0
    %3709 = vmatpush1.msra.mxu0 %v3689
    %3710 = vmatprep.subr.mxu0 0.0
    %3711 = vmatpush1.msra.mxu0 %v3688
    %3712 = vmatprep.subr.mxu0 0.0
    %3713 = vmatpush1.msra.mxu0 %v3687
    %3714 = vmatprep.subr.mxu0 0.0
    %3715 = vmatpush1.msra.mxu0 %v3686
    %3716 = vmatprep.subr.mxu0 0.0
    %3717 = vmatpush1.msra.mxu0 %v3685
    %3718 = vmatprep.subr.mxu0 0.0
    %3719 = vmatpush1.msra.mxu0 %v3684
    %3720 = vmatprep.subr.mxu0 0.0
    %3721 = vmatpush1.msra.mxu0 %v3683
    %3722 = vmatprep.subr.mxu0 0.0
    %3723 = vmatpush1.msra.mxu0 %v3682
    %3724 = vmatprep.subr.mxu0 0.0
    %3725 = vmatpush1.msra.mxu0 %v3681
    %3726 = vmatprep.subr.mxu0 0.0
    %3727 = vmatpush1.msra.mxu0 %v3680
    %3728 = vmatprep.subr.mxu0 0.0
    %3729 = vmatpush2.msra.mxu0 0.0
    %3730 = vmatprep.subr.mxu0 0.0
    %3731 = vmatpush2.msra.mxu0 0.0
    %3732 = vmatprep.subr.mxu0 0.0
    %3733 = vmatpush2.msra.mxu0 0.0
    %3734 = vmatprep.subr.mxu0 0.0
    %3735 = vmatpush2.msra.mxu0 0.0
    %3736 = vmatprep.subr.mxu0 0.0
    %3737 = vmatpush2.msra.mxu0 0.0
    %3738 = vmatprep.subr.mxu0 0.0
    %3739 = vmatpush2.msra.mxu0 0.0
    %3740 = vmatprep.subr.mxu0 0.0
    %3741 = vmatpush2.msra.mxu0 0.0
    %3742 = vmatprep.subr.mxu0 0.0
    %3743 = vmatpush2.msra.mxu0 0.0
    %3744 = vmatprep.subr.mxu0 0.0
    %3745 = vmatpush2.msra.mxu0 0.0
    %3746 = vmatprep.subr.mxu0 0.0
    %3747 = vmatpush2.msra.mxu0 0.0
    %3748 = vmatprep.subr.mxu0 0.0
    %3749 = vmatpush2.msra.mxu0 0.0
    %3750 = vmatprep.subr.mxu0 0.0
    %3751 = vmatpush2.msra.mxu0 0.0
    %3752 = vmatprep.subr.mxu0 0.0
    %3753 = vmatpush2.msra.mxu0 0.0
    %3754 = vmatprep.subr.mxu0 0.0
    %3755 = vmatpush2.msra.mxu0 0.0
    %3756 = vmatprep.subr.mxu0 0.0
    %3757 = vmatpush2.msra.mxu0 0.0
    %3758 = vmatprep.subr.mxu0 0.0
    %3759 = vmatpush2.msra.mxu0 0.0
    %3760 = vmatprep.mubr.f32.mxu0 0.0
    %3761 = vmatmul.mubr.f32.gmra.mxu0 %v3675
    %v3762 = vpop.f32.mrf.mxu0
    %v3763 = vadd.f32 0.0, %v3762
    %v3764 = vpop.f32.mrf.mxu0
    %3765 = vdwg.mxu0
    %v3766 = vlaneseq
    %v3767 = vshrl.u32 %v3766, 7
    %v3768 = vsub.s32 0, %v3767
    %v3769 = vrot.slane %v3679, %v3768
    %v3770 = vadd.f32 %v3769, %v3763
    %s3771 = scalar_lea.vmem %s3, 128
    %v3772 = vld [vmem:[%s3771] sm:$0xff]
    %v3773 = vld [vmem:[%s3771 + $0x8] sm:$0xff]
    %v3774 = vld [vmem:[%s3771 + $0x10] sm:$0xff]
    %v3775 = vld [vmem:[%s3771 + $0x18] sm:$0xff]
    %v3776 = vld [vmem:[%s3771 + $0x20] sm:$0xff]
    %v3777 = vld [vmem:[%s3771 + $0x28] sm:$0xff]
    %v3778 = vld [vmem:[%s3771 + $0x30] sm:$0xff]
    %v3779 = vld [vmem:[%s3771 + $0x38] sm:$0xff]
    %v3780 = vld [vmem:[%s3771 + $0x40] sm:$0xff]
    %v3781 = vld [vmem:[%s3771 + $0x48] sm:$0xff]
    %v3782 = vld [vmem:[%s3771 + $0x50] sm:$0xff]
    %v3783 = vld [vmem:[%s3771 + $0x58] sm:$0xff]
    %v3784 = vld [vmem:[%s3771 + $0x60] sm:$0xff]
    %v3785 = vld [vmem:[%s3771 + $0x68] sm:$0xff]
    %v3786 = vld [vmem:[%s3771 + $0x70] sm:$0xff]
    %v3787 = vld [vmem:[%s3771 + $0x78] sm:$0xff]
    %3788 = vmatprep.subr.mxu0 0.0
    %3789 = vmatpush1.msra.mxu0 %v3787
    %3790 = vmatprep.subr.mxu0 0.0
    %3791 = vmatpush1.msra.mxu0 %v3786
    %3792 = vmatprep.subr.mxu0 0.0
    %3793 = vmatpush1.msra.mxu0 %v3785
    %3794 = vmatprep.subr.mxu0 0.0
    %3795 = vmatpush1.msra.mxu0 %v3784
    %3796 = vmatprep.subr.mxu0 0.0
    %3797 = vmatpush1.msra.mxu0 %v3783
    %3798 = vmatprep.subr.mxu0 0.0
    %3799 = vmatpush1.msra.mxu0 %v3782
    %3800 = vmatprep.subr.mxu0 0.0
    %3801 = vmatpush1.msra.mxu0 %v3781
    %3802 = vmatprep.subr.mxu0 0.0
    %3803 = vmatpush1.msra.mxu0 %v3780
    %3804 = vmatprep.subr.mxu0 0.0
    %3805 = vmatpush1.msra.mxu0 %v3779
    %3806 = vmatprep.subr.mxu0 0.0
    %3807 = vmatpush1.msra.mxu0 %v3778
    %3808 = vmatprep.subr.mxu0 0.0
    %3809 = vmatpush1.msra.mxu0 %v3777
    %3810 = vmatprep.subr.mxu0 0.0
    %3811 = vmatpush1.msra.mxu0 %v3776
    %3812 = vmatprep.subr.mxu0 0.0
    %3813 = vmatpush1.msra.mxu0 %v3775
    %3814 = vmatprep.subr.mxu0 0.0
    %3815 = vmatpush1.msra.mxu0 %v3774
    %3816 = vmatprep.subr.mxu0 0.0
    %3817 = vmatpush1.msra.mxu0 %v3773
    %3818 = vmatprep.subr.mxu0 0.0
    %3819 = vmatpush1.msra.mxu0 %v3772
    %3820 = vmatprep.subr.mxu0 0.0
    %3821 = vmatpush2.msra.mxu0 0.0
    %3822 = vmatprep.subr.mxu0 0.0
    %3823 = vmatpush2.msra.mxu0 0.0
    %3824 = vmatprep.subr.mxu0 0.0
    %3825 = vmatpush2.msra.mxu0 0.0
    %3826 = vmatprep.subr.mxu0 0.0
    %3827 = vmatpush2.msra.mxu0 0.0
    %3828 = vmatprep.subr.mxu0 0.0
    %3829 = vmatpush2.msra.mxu0 0.0
    %3830 = vmatprep.subr.mxu0 0.0
    %3831 = vmatpush2.msra.mxu0 0.0
    %3832 = vmatprep.subr.mxu0 0.0
    %3833 = vmatpush2.msra.mxu0 0.0
    %3834 = vmatprep.subr.mxu0 0.0
    %3835 = vmatpush2.msra.mxu0 0.0
    %3836 = vmatprep.subr.mxu0 0.0
    %3837 = vmatpush2.msra.mxu0 0.0
    %3838 = vmatprep.subr.mxu0 0.0
    %3839 = vmatpush2.msra.mxu0 0.0
    %3840 = vmatprep.subr.mxu0 0.0
    %3841 = vmatpush2.msra.mxu0 0.0
    %3842 = vmatprep.subr.mxu0 0.0
    %3843 = vmatpush2.msra.mxu0 0.0
    %3844 = vmatprep.subr.mxu0 0.0
    %3845 = vmatpush2.msra.mxu0 0.0
    %3846 = vmatprep.subr.mxu0 0.0
    %3847 = vmatpush2.msra.mxu0 0.0
    %3848 = vmatprep.subr.mxu0 0.0
    %3849 = vmatpush2.msra.mxu0 0.0
    %3850 = vmatprep.subr.mxu0 0.0
    %3851 = vmatpush2.msra.mxu0 0.0
    %3852 = vmatprep.mubr.f32.mxu0 0.0
    %3853 = vmatmul.mubr.f32.gmra.mxu0 %v3676
    %v3854 = vpop.f32.mrf.mxu0
    %v3855 = vadd.f32 0.0, %v3854
    %v3856 = vpop.f32.mrf.mxu0
    %3857 = vdwg.mxu0
    %v3858 = vadd.f32 %v3770, %v3855
    %s3859 = scalar_lea.vmem %s3, 256
    %v3860 = vld [vmem:[%s3859] sm:$0xff]
    %v3861 = vld [vmem:[%s3859 + $0x8] sm:$0xff]
    %v3862 = vld [vmem:[%s3859 + $0x10] sm:$0xff]
    %v3863 = vld [vmem:[%s3859 + $0x18] sm:$0xff]
    %v3864 = vld [vmem:[%s3859 + $0x20] sm:$0xff]
    %v3865 = vld [vmem:[%s3859 + $0x28] sm:$0xff]
    %v3866 = vld [vmem:[%s3859 + $0x30] sm:$0xff]
    %v3867 = vld [vmem:[%s3859 + $0x38] sm:$0xff]
    %v3868 = vld [vmem:[%s3859 + $0x40] sm:$0xff]
    %v3869 = vld [vmem:[%s3859 + $0x48] sm:$0xff]
    %v3870 = vld [vmem:[%s3859 + $0x50] sm:$0xff]
    %v3871 = vld [vmem:[%s3859 + $0x58] sm:$0xff]
    %v3872 = vld [vmem:[%s3859 + $0x60] sm:$0xff]
    %v3873 = vld [vmem:[%s3859 + $0x68] sm:$0xff]
    %v3874 = vld [vmem:[%s3859 + $0x70] sm:$0xff]
    %v3875 = vld [vmem:[%s3859 + $0x78] sm:$0xff]
    %3876 = vmatprep.subr.mxu0 0.0
    %3877 = vmatpush1.msra.mxu0 %v3875
    %3878 = vmatprep.subr.mxu0 0.0
    %3879 = vmatpush1.msra.mxu0 %v3874
    %3880 = vmatprep.subr.mxu0 0.0
    %3881 = vmatpush1.msra.mxu0 %v3873
    %3882 = vmatprep.subr.mxu0 0.0
    %3883 = vmatpush1.msra.mxu0 %v3872
    %3884 = vmatprep.subr.mxu0 0.0
    %3885 = vmatpush1.msra.mxu0 %v3871
    %3886 = vmatprep.subr.mxu0 0.0
    %3887 = vmatpush1.msra.mxu0 %v3870
    %3888 = vmatprep.subr.mxu0 0.0
    %3889 = vmatpush1.msra.mxu0 %v3869
    %3890 = vmatprep.subr.mxu0 0.0
    %3891 = vmatpush1.msra.mxu0 %v3868
    %3892 = vmatprep.subr.mxu0 0.0
    %3893 = vmatpush1.msra.mxu0 %v3867
    %3894 = vmatprep.subr.mxu0 0.0
    %3895 = vmatpush1.msra.mxu0 %v3866
    %3896 = vmatprep.subr.mxu0 0.0
    %3897 = vmatpush1.msra.mxu0 %v3865
    %3898 = vmatprep.subr.mxu0 0.0
    %3899 = vmatpush1.msra.mxu0 %v3864
    %3900 = vmatprep.subr.mxu0 0.0
    %3901 = vmatpush1.msra.mxu0 %v3863
    %3902 = vmatprep.subr.mxu0 0.0
    %3903 = vmatpush1.msra.mxu0 %v3862
    %3904 = vmatprep.subr.mxu0 0.0
    %3905 = vmatpush1.msra.mxu0 %v3861
    %3906 = vmatprep.subr.mxu0 0.0
    %3907 = vmatpush1.msra.mxu0 %v3860
    %3908 = vmatprep.subr.mxu0 0.0
    %3909 = vmatpush2.msra.mxu0 0.0
    %3910 = vmatprep.subr.mxu0 0.0
    %3911 = vmatpush2.msra.mxu0 0.0
    %3912 = vmatprep.subr.mxu0 0.0
    %3913 = vmatpush2.msra.mxu0 0.0
    %3914 = vmatprep.subr.mxu0 0.0
    %3915 = vmatpush2.msra.mxu0 0.0
    %3916 = vmatprep.subr.mxu0 0.0
    %3917 = vmatpush2.msra.mxu0 0.0
    %3918 = vmatprep.subr.mxu0 0.0
    %3919 = vmatpush2.msra.mxu0 0.0
    %3920 = vmatprep.subr.mxu0 0.0
    %3921 = vmatpush2.msra.mxu0 0.0
    %3922 = vmatprep.subr.mxu0 0.0
    %3923 = vmatpush2.msra.mxu0 0.0
    %3924 = vmatprep.subr.mxu0 0.0
    %3925 = vmatpush2.msra.mxu0 0.0
    %3926 = vmatprep.subr.mxu0 0.0
    %3927 = vmatpush2.msra.mxu0 0.0
    %3928 = vmatprep.subr.mxu0 0.0
    %3929 = vmatpush2.msra.mxu0 0.0
    %3930 = vmatprep.subr.mxu0 0.0
    %3931 = vmatpush2.msra.mxu0 0.0
    %3932 = vmatprep.subr.mxu0 0.0
    %3933 = vmatpush2.msra.mxu0 0.0
    %3934 = vmatprep.subr.mxu0 0.0
    %3935 = vmatpush2.msra.mxu0 0.0
    %3936 = vmatprep.subr.mxu0 0.0
    %3937 = vmatpush2.msra.mxu0 0.0
    %3938 = vmatprep.subr.mxu0 0.0
    %3939 = vmatpush2.msra.mxu0 0.0
    %3940 = vmatprep.mubr.f32.mxu0 0.0
    %3941 = vmatmul.mubr.f32.gmra.mxu0 %v3677
    %v3942 = vpop.f32.mrf.mxu0
    %v3943 = vadd.f32 0.0, %v3942
    %v3944 = vpop.f32.mrf.mxu0
    %3945 = vdwg.mxu0
    %v3946 = vadd.f32 %v3858, %v3943
    %s3947 = scalar_lea.vmem %s3, 384
    %v3948 = vld [vmem:[%s3947] sm:$0xff]
    %v3949 = vld [vmem:[%s3947 + $0x8] sm:$0xff]
    %v3950 = vld [vmem:[%s3947 + $0x10] sm:$0xff]
    %v3951 = vld [vmem:[%s3947 + $0x18] sm:$0xff]
    %v3952 = vld [vmem:[%s3947 + $0x20] sm:$0xff]
    %v3953 = vld [vmem:[%s3947 + $0x28] sm:$0xff]
    %v3954 = vld [vmem:[%s3947 + $0x30] sm:$0xff]
    %v3955 = vld [vmem:[%s3947 + $0x38] sm:$0xff]
    %v3956 = vld [vmem:[%s3947 + $0x40] sm:$0xff]
    %v3957 = vld [vmem:[%s3947 + $0x48] sm:$0xff]
    %v3958 = vld [vmem:[%s3947 + $0x50] sm:$0xff]
    %v3959 = vld [vmem:[%s3947 + $0x58] sm:$0xff]
    %v3960 = vld [vmem:[%s3947 + $0x60] sm:$0xff]
    %v3961 = vld [vmem:[%s3947 + $0x68] sm:$0xff]
    %v3962 = vld [vmem:[%s3947 + $0x70] sm:$0xff]
    %v3963 = vld [vmem:[%s3947 + $0x78] sm:$0xff]
    %3964 = vmatprep.subr.mxu0 0.0
    %3965 = vmatpush1.msra.mxu0 %v3963
    %3966 = vmatprep.subr.mxu0 0.0
    %3967 = vmatpush1.msra.mxu0 %v3962
    %3968 = vmatprep.subr.mxu0 0.0
    %3969 = vmatpush1.msra.mxu0 %v3961
    %3970 = vmatprep.subr.mxu0 0.0
    %3971 = vmatpush1.msra.mxu0 %v3960
    %3972 = vmatprep.subr.mxu0 0.0
    %3973 = vmatpush1.msra.mxu0 %v3959
    %3974 = vmatprep.subr.mxu0 0.0
    %3975 = vmatpush1.msra.mxu0 %v3958
    %3976 = vmatprep.subr.mxu0 0.0
    %3977 = vmatpush1.msra.mxu0 %v3957
    %3978 = vmatprep.subr.mxu0 0.0
    %3979 = vmatpush1.msra.mxu0 %v3956
    %3980 = vmatprep.subr.mxu0 0.0
    %3981 = vmatpush1.msra.mxu0 %v3955
    %3982 = vmatprep.subr.mxu0 0.0
    %3983 = vmatpush1.msra.mxu0 %v3954
    %3984 = vmatprep.subr.mxu0 0.0
    %3985 = vmatpush1.msra.mxu0 %v3953
    %3986 = vmatprep.subr.mxu0 0.0
    %3987 = vmatpush1.msra.mxu0 %v3952
    %3988 = vmatprep.subr.mxu0 0.0
    %3989 = vmatpush1.msra.mxu0 %v3951
    %3990 = vmatprep.subr.mxu0 0.0
    %3991 = vmatpush1.msra.mxu0 %v3950
    %3992 = vmatprep.subr.mxu0 0.0
    %3993 = vmatpush1.msra.mxu0 %v3949
    %3994 = vmatprep.subr.mxu0 0.0
    %3995 = vmatpush1.msra.mxu0 %v3948
    %3996 = vmatprep.subr.mxu0 0.0
    %3997 = vmatpush2.msra.mxu0 0.0
    %3998 = vmatprep.subr.mxu0 0.0
    %3999 = vmatpush2.msra.mxu0 0.0
    %4000 = vmatprep.subr.mxu0 0.0
    %4001 = vmatpush2.msra.mxu0 0.0
    %4002 = vmatprep.subr.mxu0 0.0
    %4003 = vmatpush2.msra.mxu0 0.0
    %4004 = vmatprep.subr.mxu0 0.0
    %4005 = vmatpush2.msra.mxu0 0.0
    %4006 = vmatprep.subr.mxu0 0.0
    %4007 = vmatpush2.msra.mxu0 0.0
    %4008 = vmatprep.subr.mxu0 0.0
    %4009 = vmatpush2.msra.mxu0 0.0
    %4010 = vmatprep.subr.mxu0 0.0
    %4011 = vmatpush2.msra.mxu0 0.0
    %4012 = vmatprep.subr.mxu0 0.0
    %4013 = vmatpush2.msra.mxu0 0.0
    %4014 = vmatprep.subr.mxu0 0.0
    %4015 = vmatpush2.msra.mxu0 0.0
    %4016 = vmatprep.subr.mxu0 0.0
    %4017 = vmatpush2.msra.mxu0 0.0
    %4018 = vmatprep.subr.mxu0 0.0
    %4019 = vmatpush2.msra.mxu0 0.0
    %4020 = vmatprep.subr.mxu0 0.0
    %4021 = vmatpush2.msra.mxu0 0.0
    %4022 = vmatprep.subr.mxu0 0.0
    %4023 = vmatpush2.msra.mxu0 0.0
    %4024 = vmatprep.subr.mxu0 0.0
    %4025 = vmatpush2.msra.mxu0 0.0
    %4026 = vmatprep.subr.mxu0 0.0
    %4027 = vmatpush2.msra.mxu0 0.0
    %4028 = vmatprep.mubr.f32.mxu0 0.0
    %4029 = vmatmul.mubr.f32.gmra.mxu0 %v3678
    %v4030 = vpop.f32.mrf.mxu0
    %v4031 = vadd.f32 0.0, %v4030
    %v4032 = vpop.f32.mrf.mxu0
    %4033 = vdwg.mxu0
    %v4034 = vadd.f32 %v3946, %v4031
    %v4035 = vmax.f32 %v4034, 0.0
    %s4036 = scalar_lea.vmem %s3, 512
    %v4037 = vld [vmem:[%s4036] sm:$0xff]
    %v4038 = vld [vmem:[%s4036 + $0x8] sm:$0xff]
    %v4039 = vld [vmem:[%s4036 + $0x10] sm:$0xff]
    %v4040 = vld [vmem:[%s4036 + $0x18] sm:$0xff]
    %v4041 = vld [vmem:[%s4036 + $0x20] sm:$0xff]
    %v4042 = vld [vmem:[%s4036 + $0x28] sm:$0xff]
    %v4043 = vld [vmem:[%s4036 + $0x30] sm:$0xff]
    %v4044 = vld [vmem:[%s4036 + $0x38] sm:$0xff]
    %v4045 = vld [vmem:[%s4036 + $0x40] sm:$0xff]
    %v4046 = vld [vmem:[%s4036 + $0x48] sm:$0xff]
    %v4047 = vld [vmem:[%s4036 + $0x50] sm:$0xff]
    %v4048 = vld [vmem:[%s4036 + $0x58] sm:$0xff]
    %v4049 = vld [vmem:[%s4036 + $0x60] sm:$0xff]
    %v4050 = vld [vmem:[%s4036 + $0x68] sm:$0xff]
    %v4051 = vld [vmem:[%s4036 + $0x70] sm:$0xff]
    %v4052 = vld [vmem:[%s4036 + $0x78] sm:$0xff]
    %v4053 = vld [vmem:[%s4 + $0x3] sm:$0x1]
    %v4054 = vlaneseq
    %v4055 = vshrl.u32 %v4054, 7
    %v4056 = vsub.s32 0, %v4055
    %v4057 = vrot.slane %v4053, %v4056
    %4058 = vmatprep.subr.mxu0 0.0
    %4059 = vmatpush1.msra.mxu0 %v4052
    %4060 = vmatprep.subr.mxu0 0.0
    %4061 = vmatpush1.msra.mxu0 %v4051
    %4062 = vmatprep.subr.mxu0 0.0
    %4063 = vmatpush1.msra.mxu0 %v4050
    %4064 = vmatprep.subr.mxu0 0.0
    %4065 = vmatpush1.msra.mxu0 %v4049
    %4066 = vmatprep.subr.mxu0 0.0
    %4067 = vmatpush1.msra.mxu0 %v4048
    %4068 = vmatprep.subr.mxu0 0.0
    %4069 = vmatpush1.msra.mxu0 %v4047
    %4070 = vmatprep.subr.mxu0 0.0
    %4071 = vmatpush1.msra.mxu0 %v4046
    %4072 = vmatprep.subr.mxu0 0.0
    %4073 = vmatpush1.msra.mxu0 %v4045
    %4074 = vmatprep.subr.mxu0 0.0
    %4075 = vmatpush1.msra.mxu0 %v4044
    %4076 = vmatprep.subr.mxu0 0.0
    %4077 = vmatpush1.msra.mxu0 %v4043
    %4078 = vmatprep.subr.mxu0 0.0
    %4079 = vmatpush1.msra.mxu0 %v4042
    %4080 = vmatprep.subr.mxu0 0.0
    %4081 = vmatpush1.msra.mxu0 %v4041
    %4082 = vmatprep.subr.mxu0 0.0
    %4083 = vmatpush1.msra.mxu0 %v4040
    %4084 = vmatprep.subr.mxu0 0.0
    %4085 = vmatpush1.msra.mxu0 %v4039
    %4086 = vmatprep.subr.mxu0 0.0
    %4087 = vmatpush1.msra.mxu0 %v4038
    %4088 = vmatprep.subr.mxu0 0.0
    %4089 = vmatpush1.msra.mxu0 %v4037
    %4090 = vmatprep.subr.mxu0 0.0
    %4091 = vmatpush2.msra.mxu0 0.0
    %4092 = vmatprep.subr.mxu0 0.0
    %4093 = vmatpush2.msra.mxu0 0.0
    %4094 = vmatprep.subr.mxu0 0.0
    %4095 = vmatpush2.msra.mxu0 0.0
    %4096 = vmatprep.subr.mxu0 0.0
    %4097 = vmatpush2.msra.mxu0 0.0
    %4098 = vmatprep.subr.mxu0 0.0
    %4099 = vmatpush2.msra.mxu0 0.0
    %4100 = vmatprep.subr.mxu0 0.0
    %4101 = vmatpush2.msra.mxu0 0.0
    %4102 = vmatprep.subr.mxu0 0.0
    %4103 = vmatpush2.msra.mxu0 0.0
    %4104 = vmatprep.subr.mxu0 0.0
    %4105 = vmatpush2.msra.mxu0 0.0
    %4106 = vmatprep.subr.mxu0 0.0
    %4107 = vmatpush2.msra.mxu0 0.0
    %4108 = vmatprep.subr.mxu0 0.0
    %4109 = vmatpush2.msra.mxu0 0.0
    %4110 = vmatprep.subr.mxu0 0.0
    %4111 = vmatpush2.msra.mxu0 0.0
    %4112 = vmatprep.subr.mxu0 0.0
    %4113 = vmatpush2.msra.mxu0 0.0
    %4114 = vmatprep.subr.mxu0 0.0
    %4115 = vmatpush2.msra.mxu0 0.0
    %4116 = vmatprep.subr.mxu0 0.0
    %4117 = vmatpush2.msra.mxu0 0.0
    %4118 = vmatprep.subr.mxu0 0.0
    %4119 = vmatpush2.msra.mxu0 0.0
    %4120 = vmatprep.subr.mxu0 0.0
    %4121 = vmatpush2.msra.mxu0 0.0
    %4122 = vmatprep.mubr.f32.mxu0 0.0
    %4123 = vmatmul.mubr.f32.gmra.mxu0 %v4035
    %v4124 = vpop.f32.mrf.mxu0
    %v4125 = vadd.f32 %v4057, %v4124
    %v4126 = vpop.f32.mrf.mxu0
    %4127 = vdwg.mxu0
    %v4128 = vmax.f32 %v4125, 0.0
    %s4129 = scalar_lea.vmem %s3, 640
    %v4130 = vld [vmem:[%s4129] sm:$0xff]
    %v4131 = vld [vmem:[%s4129 + $0x8] sm:$0xff]
    %v4132 = vld [vmem:[%s4129 + $0x10] sm:$0xff]
    %v4133 = vld [vmem:[%s4129 + $0x18] sm:$0xff]
    %v4134 = vld [vmem:[%s4129 + $0x20] sm:$0xff]
    %v4135 = vld [vmem:[%s4129 + $0x28] sm:$0xff]
    %v4136 = vld [vmem:[%s4129 + $0x30] sm:$0xff]
    %v4137 = vld [vmem:[%s4129 + $0x38] sm:$0xff]
    %v4138 = vld [vmem:[%s4129 + $0x40] sm:$0xff]
    %v4139 = vld [vmem:[%s4129 + $0x48] sm:$0xff]
    %v4140 = vld [vmem:[%s4129 + $0x50] sm:$0xff]
    %v4141 = vld [vmem:[%s4129 + $0x58] sm:$0xff]
    %v4142 = vld [vmem:[%s4129 + $0x60] sm:$0xff]
    %v4143 = vld [vmem:[%s4129 + $0x68] sm:$0xff]
    %v4144 = vld [vmem:[%s4129 + $0x70] sm:$0xff]
    %v4145 = vld [vmem:[%s4129 + $0x78] sm:$0xff]
    %v4146 = vld [vmem:[%s4 + $0x4] sm:$0x1]
    %v4147 = vlaneseq
    %v4148 = vshrl.u32 %v4147, 7
    %v4149 = vsub.s32 0, %v4148
    %v4150 = vrot.slane %v4146, %v4149
    %4151 = vmatprep.subr.mxu0 0.0
    %4152 = vmatpush1.msra.mxu0 %v4145
    %4153 = vmatprep.subr.mxu0 0.0
    %4154 = vmatpush1.msra.mxu0 %v4144
    %4155 = vmatprep.subr.mxu0 0.0
    %4156 = vmatpush1.msra.mxu0 %v4143
    %4157 = vmatprep.subr.mxu0 0.0
    %4158 = vmatpush1.msra.mxu0 %v4142
    %4159 = vmatprep.subr.mxu0 0.0
    %4160 = vmatpush1.msra.mxu0 %v4141
    %4161 = vmatprep.subr.mxu0 0.0
    %4162 = vmatpush1.msra.mxu0 %v4140
    %4163 = vmatprep.subr.mxu0 0.0
    %4164 = vmatpush1.msra.mxu0 %v4139
    %4165 = vmatprep.subr.mxu0 0.0
    %4166 = vmatpush1.msra.mxu0 %v4138
    %4167 = vmatprep.subr.mxu0 0.0
    %4168 = vmatpush1.msra.mxu0 %v4137
    %4169 = vmatprep.subr.mxu0 0.0
    %4170 = vmatpush1.msra.mxu0 %v4136
    %4171 = vmatprep.subr.mxu0 0.0
    %4172 = vmatpush1.msra.mxu0 %v4135
    %4173 = vmatprep.subr.mxu0 0.0
    %4174 = vmatpush1.msra.mxu0 %v4134
    %4175 = vmatprep.subr.mxu0 0.0
    %4176 = vmatpush1.msra.mxu0 %v4133
    %4177 = vmatprep.subr.mxu0 0.0
    %4178 = vmatpush1.msra.mxu0 %v4132
    %4179 = vmatprep.subr.mxu0 0.0
    %4180 = vmatpush1.msra.mxu0 %v4131
    %4181 = vmatprep.subr.mxu0 0.0
    %4182 = vmatpush1.msra.mxu0 %v4130
    %4183 = vmatprep.subr.mxu0 0.0
    %4184 = vmatpush2.msra.mxu0 0.0
    %4185 = vmatprep.subr.mxu0 0.0
    %4186 = vmatpush2.msra.mxu0 0.0
    %4187 = vmatprep.subr.mxu0 0.0
    %4188 = vmatpush2.msra.mxu0 0.0
    %4189 = vmatprep.subr.mxu0 0.0
    %4190 = vmatpush2.msra.mxu0 0.0
    %4191 = vmatprep.subr.mxu0 0.0
    %4192 = vmatpush2.msra.mxu0 0.0
    %4193 = vmatprep.subr.mxu0 0.0
    %4194 = vmatpush2.msra.mxu0 0.0
    %4195 = vmatprep.subr.mxu0 0.0
    %4196 = vmatpush2.msra.mxu0 0.0
    %4197 = vmatprep.subr.mxu0 0.0
    %4198 = vmatpush2.msra.mxu0 0.0
    %4199 = vmatprep.subr.mxu0 0.0
    %4200 = vmatpush2.msra.mxu0 0.0
    %4201 = vmatprep.subr.mxu0 0.0
    %4202 = vmatpush2.msra.mxu0 0.0
    %4203 = vmatprep.subr.mxu0 0.0
    %4204 = vmatpush2.msra.mxu0 0.0
    %4205 = vmatprep.subr.mxu0 0.0
    %4206 = vmatpush2.msra.mxu0 0.0
    %4207 = vmatprep.subr.mxu0 0.0
    %4208 = vmatpush2.msra.mxu0 0.0
    %4209 = vmatprep.subr.mxu0 0.0
    %4210 = vmatpush2.msra.mxu0 0.0
    %4211 = vmatprep.subr.mxu0 0.0
    %4212 = vmatpush2.msra.mxu0 0.0
    %4213 = vmatprep.subr.mxu0 0.0
    %4214 = vmatpush2.msra.mxu0 0.0
    %4215 = vmatprep.mubr.f32.mxu0 0.0
    %4216 = vmatmul.mubr.f32.gmra.mxu0 %v4128
    %v4217 = vpop.f32.mrf.mxu0
    %v4218 = vadd.f32 %v4150, %v4217
    %v4219 = vpop.f32.mrf.mxu0
    %4220 = vdwg.mxu0
    %4221 = vmax.xlane.f32.xlu0 %v4218
    %v4222 = vpop.xlane.xlu0 %4221
    %v4223 = vsub.f32 %v4218, %v4222
    %v4224 = vmul.f32 %v4223, 1.442695
    %v4225 = vpow.pop %v4224
    %4226 = vadd.xlane.f32.xlu0 %v4225
    %v4227 = vpop.xlane.xlu0 %4226
    %v4228 = vrcp.pop %v4227
    %v4229 = vmul.f32 %v4225, %v4228
    %4230 = vst [vmem:[%s5] sm:$0xff] %v4229
    // Predicated region
    $region30: #{network_forward.1} parent=1 // pred_check
      _
    $region31: #{network_forward.1} parent=1 // pred_check_branch
      %4232 = sbr.rel (0) target = $region33
    $region32: #{network_forward.1} parent=1 // pred_region
      _
    $region33: #{network_forward.1} parent=1 // pred_fallthru
      _
    // Predicated region
    $region34: #{network_forward.1} parent=1 // pred_check
      _
    $region35: #{network_forward.1} parent=1 // pred_check_branch
      %4234 = sbr.rel (0) target = $region37
    $region36: #{network_forward.1} parent=1 // pred_region
      _
    $region37: #{network_forward.1} parent=1 // pred_fallthru
      _
    %4235 = vsyncpa [#allocation3], 1
    %4236 = vsyncpa [#allocation5], 1

</llo_original>
